<compile_context>
chip_gen: v7x
topology: tpu7x:2x2x1
jax: 0.10.0
libtpu: 0.0.40
codegen_flags: <defaults>
</compile_context>

<pallas_src>
from functools import partial

import jax
import jax.numpy as jnp
from jax.experimental import pallas as pl
from jax.experimental.pallas import tpu as pltpu


_MXU_DTYPE = jnp.bfloat16   # inputs to jnp.dot; accumulation / tail stay f32


# ----------------------------- Pallas kernel ------------------------------- #

def _fused_deformer_kernel(n_valid_ref,                       # SMEM: [n_valid]
                           slab_ref,                          # (10, tm) f32
                           w1x_ref, latb_ref, w2_ref, b2_ref, w3_ref, b3_ref,
                           lw1_ref, lb1_ref, lw2_ref, lb2_ref, tf_ref,
                           out_ref, loss_ref):
    """Fused non-rigid MLP + rigid LBS over one feature-major column tile.

    Inputs (feature-major, Gaussians on the lane axis):
      slab_ref : (10, tile_n)  rows = [xyz(3) | rot(4) | scale(3)]
      weights  : transposed (out_feat, in_feat) bf16; biases f32 (out_feat, 1)
      tf_ref   : (12, J) bf16 column-major bone transforms [Rcol0|Rcol1|Rcol2|t]
    Outputs:
      out_ref  : (16, tile_n) rows = [xyz_rigid(3) | rot_nr(4) | scale_nr(3) | 0(6)]
      loss_ref : (1, 8, 128) per-tile partial sums: sublane 0 = sum(d_xyz^2),
                 sublane 1 = sum(d_rot^2), sublane 2 = sum(d_scale^2).
    """
    tm = slab_ref.shape[1]
    mxu = _MXU_DTYPE

    g = slab_ref[...]                                   # (10, tm) f32
    xyz = g[0:3, :]                                     # (3, tm)

    # ---- non-rigid MLP (transposed: h = W^T @ x), pose latent folded in ----
    h = jnp.dot(w1x_ref[...], xyz.astype(mxu),
                preferred_element_type=jnp.float32) + latb_ref[...]   # (H, tm)
    h = jnp.maximum(h, 0.0)
    h = jnp.dot(w2_ref[...], h.astype(mxu),
                preferred_element_type=jnp.float32) + b2_ref[...]     # (H, tm)
    h = jnp.maximum(h, 0.0)
    delta = jnp.dot(w3_ref[...], h.astype(mxu),
                    preferred_element_type=jnp.float32) + b3_ref[...]  # (10, tm)

    # deltas and base share the same row layout -> single lane-dense add
    g_nr = g + delta                                    # xyz_nr | rot_nr | scale_nr
    xyz_nr = g_nr[0:3, :]                               # (3, tm)

    # ---- rigid LBS: skinning MLP + softmax + blended rigid transform ----
    hl = jnp.dot(lw1_ref[...], xyz_nr.astype(mxu),
                 preferred_element_type=jnp.float32) + lb1_ref[...]   # (H, tm)
    hl = jnp.maximum(hl, 0.0)
    logits = jnp.dot(lw2_ref[...], hl.astype(mxu),
                     preferred_element_type=jnp.float32) + lb2_ref[...]  # (J, tm)
    logits = logits - jnp.max(logits, axis=0, keepdims=True)
    e = jnp.exp(logits)
    # exact reciprocal -> skinning weights are an exact partition of unity
    w = e * pl.reciprocal(jnp.sum(e, axis=0, keepdims=True), approx=False)

    # Blend bone transforms in bf16 (MXU-native); rows of A:
    # [Rcol0(3) | Rcol1(3) | Rcol2(3) | t(3)] of the blended transform.
    A = jnp.dot(tf_ref[...], w.astype(mxu),
                preferred_element_type=jnp.float32)                    # (12, tm)
    xyz_rigid = (A[0:3, :] * xyz_nr[0:1, :]
                 + A[3:6, :] * xyz_nr[1:2, :]
                 + A[6:9, :] * xyz_nr[2:3, :]
                 + A[9:12, :])                                         # (3, tm)

    # ---- assemble output slab with aligned sub-slice stores (no concat) ----
    out_ref[0:10, :] = g_nr                    # rot_nr / scale_nr (rows 3..9)
    out_ref[0:3, :] = xyz_rigid                # rigid xyz overwrites rows 0..2
    out_ref[10:16, :] = jnp.zeros((6, tm), jnp.float32)

    # ---- regularization partial sums ----
    dsq = delta * delta                        # (10, tm), lane-dense
    i = pl.program_id(0)

    def _write(s_xyz, s_rot, s_scale):
        sub = jax.lax.broadcasted_iota(jnp.int32, (8, 128), 0)
        loss_ref[0] = jnp.where(sub == 0, s_xyz,
                      jnp.where(sub == 1, s_rot,
                      jnp.where(sub == 2, s_scale, 0.0))).astype(jnp.float32)

    # Only tiles that actually contain padded columns pay for the mask.
    has_pad = (i + 1) * tm > n_valid_ref[0]

    @pl.when(jnp.logical_not(has_pad))
    def _():
        _write(jnp.sum(dsq[0:3, :]), jnp.sum(dsq[3:7, :]), jnp.sum(dsq[7:10, :]))

    @pl.when(has_pad)
    def _():
        col = jax.lax.broadcasted_iota(jnp.int32, (1, tm), 1) + i * tm
        m = (col < n_valid_ref[0]).astype(jnp.float32)       # (1, tm)
        dm = dsq * m
        _write(jnp.sum(dm[0:3, :]), jnp.sum(dm[3:7, :]), jnp.sum(dm[7:10, :]))


# --------------------------- pallas_call wrapper --------------------------- #

def _round_up(x, m):
    return ((x + m - 1) // m) * m


def _choose_tiling(n, max_tile=8192, lane_multiple=256):
    """Pick (tile_n, num_tiles).

    num_tiles is even and >= 2 so the parallel grid axis balances across
    v7x's two TensorCores (no-op on v5e/v6e); tile_n is a multiple of
    `lane_multiple` (lane-dense blocks) and at most ~max_tile.
    `max_tile` is the sweep knob (8192-32768 recommended for large N).
    """
    max_tile = max(lane_multiple, _round_up(max_tile, lane_multiple))
    num_tiles = max(2, (n + max_tile - 1) // max_tile)
    if num_tiles % 2:
        num_tiles += 1
    tile_n = _round_up((n + num_tiles - 1) // num_tiles, lane_multiple)
    return tile_n, num_tiles


def _fused_call(n_valid, slab, w1x, latb, w2, b2, w3, b3,
                lw1, lb1, lw2, lb2, tf_t, *, tile_n, num_tiles):
    n_pad = slab.shape[1]
    assert n_pad == tile_n * num_tiles

    # VMEM budget per grid step (f32 words, rough):
    #   io slabs (double-buffered): 2 * (10 + 16) * tile_n
    #   live activations:           ~ (4*64 + 16 + 12 + 10) * tile_n
    # tile_n=8192 -> ~11 MiB, tile_n=16384 -> ~23 MiB: under the 32 MiB default
    # scoped limit on all generations (v7x physical VMEM is 64 MiB).
    vmem_est = tile_n * 4 * (2 * (10 + 16) + 4 * 64 + 16 + 12 + 10) + (1 << 20)
    cp_kwargs = dict(dimension_semantics=("parallel",))
    if vmem_est > (30 << 20):
        cp_kwargs["vmem_limit_bytes"] = int(min(vmem_est, 100 << 20))

    def _const(a):
        # Whole (small) array, constant block index -> resident, not re-DMA'd.
        return pl.BlockSpec(a.shape, lambda i, nv: (0, 0))

    out_shape = (
        jax.ShapeDtypeStruct((16, n_pad), jnp.float32),           # packed slab
        jax.ShapeDtypeStruct((num_tiles, 8, 128), jnp.float32),   # loss partials
    )

    grid_spec = pltpu.PrefetchScalarGridSpec(
        num_scalar_prefetch=1,            # n_valid lands in SMEM
        grid=(num_tiles,),
        in_specs=[
            pl.BlockSpec((10, tile_n), lambda i, nv: (0, i)),     # input slab
            _const(w1x), _const(latb),
            _const(w2), _const(b2),
            _const(w3), _const(b3),
            _const(lw1), _const(lb1),
            _const(lw2), _const(lb2),
            _const(tf_t),
        ],
        out_specs=[
            pl.BlockSpec((16, tile_n), lambda i, nv: (0, i)),
            pl.BlockSpec((1, 8, 128), lambda i, nv: (i, 0, 0)),
        ],
    )

    return pl.pallas_call(
        _fused_deformer_kernel,
        out_shape=out_shape,
        grid_spec=grid_spec,
        compiler_params=pltpu.CompilerParams(**cp_kwargs),
    )(n_valid, slab, w1x, latb, w2, b2, w3, b3, lw1, lb1, lw2, lb2, tf_t)


# --------------------------------- Deformer -------------------------------- #

def init_params(key, *, latent_dim=29, hidden=64, n_joints=16):
    """Deterministic synthetic parameter init (matches module structure)."""
    ks = jax.random.split(key, 10)
    s = 0.05
    return {
        # non-rigid MLP: (xyz, latent) -> hidden -> hidden -> 10
        # W1 is pre-split so the latent part can be folded into a bias.
        "nr_w1_xyz": s * jax.random.normal(ks[0], (3, hidden), jnp.float32),
        "nr_w1_lat": s * jax.random.normal(ks[1], (latent_dim, hidden), jnp.float32),
        "nr_b1": jnp.zeros((1, hidden), jnp.float32),
        "nr_w2": s * jax.random.normal(ks[2], (hidden, hidden), jnp.float32),
        "nr_b2": jnp.zeros((1, hidden), jnp.float32),
        "nr_w3": s * jax.random.normal(ks[3], (hidden, 10), jnp.float32),
        "nr_b3": jnp.zeros((1, 10), jnp.float32),
        # rigid skinning MLP: xyz(3) -> hidden -> n_joints
        "lbs_w1": s * jax.random.normal(ks[4], (3, hidden), jnp.float32),
        "lbs_b1": jnp.zeros((1, hidden), jnp.float32),
        "lbs_w2": s * jax.random.normal(ks[5], (hidden, n_joints), jnp.float32),
        "lbs_b2": jnp.zeros((1, n_joints), jnp.float32),
    }


def make_bone_transforms(key, n_joints=16):
    """Per-bone rigid transforms flattened row-major to [J, 12] (R(9) | t(3))."""
    k1, k2 = jax.random.split(key)
    ang = 0.3 * jax.random.normal(k1, (n_joints, 3), jnp.float32)
    trans = 0.1 * jax.random.normal(k2, (n_joints, 3), jnp.float32)
    ca, sa = jnp.cos(ang), jnp.sin(ang)

    def rot_z(c, s):
        return jnp.stack([c, -s, jnp.zeros_like(c),
                          s, c, jnp.zeros_like(c),
                          jnp.zeros_like(c), jnp.zeros_like(c),
                          jnp.ones_like(c)], -1).reshape(-1, 3, 3)

    def rot_y(c, s):
        return jnp.stack([c, jnp.zeros_like(c), s,
                          jnp.zeros_like(c), jnp.ones_like(c),
                          jnp.zeros_like(c),
                          -s, jnp.zeros_like(c), c], -1).reshape(-1, 3, 3)

    def rot_x(c, s):
        return jnp.stack([jnp.ones_like(c), jnp.zeros_like(c),
                          jnp.zeros_like(c),
                          jnp.zeros_like(c), c, -s,
                          jnp.zeros_like(c), s, c], -1).reshape(-1, 3, 3)

    R = jnp.einsum("jab,jbc,jcd->jad",
                   rot_z(ca[:, 2], sa[:, 2]),
                   rot_y(ca[:, 1], sa[:, 1]),
                   rot_x(ca[:, 0], sa[:, 0]))
    return jnp.concatenate([R.reshape(n_joints, 9), trans], axis=-1)   # [J, 12]


def deformer_forward(gaussians, pose_latent, bone_transforms, params,
                     compute_loss=True, max_tile=8192):
    """Mirrors Deformer.forward: non_rigid -> rigid, returns (gaussians, loss)."""
    xyz = gaussians["xyz"].astype(jnp.float32)          # [N, 3]
    rot = gaussians["rotation"].astype(jnp.float32)     # [N, 4]
    scale = gaussians["scaling"].astype(jnp.float32)    # [N, 3]
    n = xyz.shape[0]

    tile_n, num_tiles = _choose_tiling(n, max_tile=max_tile)
    n_pad = tile_n * num_tiles

    # Feature-major (lane-dense) input slab: rows = [xyz(3) | rot(4) | scale(3)].
    slab = jnp.concatenate([xyz, rot, scale], axis=1).T            # (10, N)
    if n_pad != n:
        slab = jnp.pad(slab, ((0, 0), (0, n_pad - n)))

    # Fold the per-frame pose latent into an (H, 1) bias (exact, no [N,latent]).
    lat_bias = (pose_latent[None, :].astype(jnp.float32) @ params["nr_w1_lat"]
                + params["nr_b1"])                                 # (1, H)

    # Transposed weights, bf16 MXU inputs; biases stay f32 as (out, 1) columns.
    w1x = params["nr_w1_xyz"].T.astype(_MXU_DTYPE)                 # (H, 3)
    latb = lat_bias.T                                              # (H, 1)
    w2 = params["nr_w2"].T.astype(_MXU_DTYPE)                      # (H, H)
    b2 = params["nr_b2"].T                                         # (H, 1)
    w3 = params["nr_w3"].T.astype(_MXU_DTYPE)                      # (10, H)
    b3 = params["nr_b3"].T                                         # (10, 1)
    lw1 = params["lbs_w1"].T.astype(_MXU_DTYPE)                    # (H, 3)
    lb1 = params["lbs_b1"].T                                       # (H, 1)
    lw2 = params["lbs_w2"].T.astype(_MXU_DTYPE)                    # (J, H)
    lb2 = params["lbs_b2"].T                                       # (J, 1)

    # Column-major bone-transform layout, transposed to (12, J), bf16 blend.
    R = bone_transforms[:, :9].reshape(-1, 3, 3)
    t = bone_transforms[:, 9:12]
    tf_col = jnp.concatenate([jnp.swapaxes(R, 1, 2).reshape(-1, 9), t], axis=-1)
    tf_t = tf_col.T.astype(_MXU_DTYPE)                             # (12, J)

    n_valid = jnp.asarray([n], jnp.int32)                          # SMEM prefetch

    out_slab, loss_part = _fused_call(
        n_valid, slab, w1x, latb, w2, b2, w3, b3, lw1, lb1, lw2, lb2, tf_t,
        tile_n=tile_n, num_tiles=num_tiles)

    deformed = {
        "xyz": out_slab[0:3, :n].T,
        # TODO(synk): no quaternion renorm / no composition with the blended
        # bone rotation (matches the reference module's behaviour).
        "rotation": out_slab[3:7, :n].T,
        "scaling": out_slab[7:10, :n].T,
    }

    loss_reg = {}
    if compute_loss:
        loss_reg = {
            "nonrigid_xyz": loss_part[:, 0, 0].sum() / (n * 3),
            "nonrigid_rot": loss_part[:, 1, 0].sum() / (n * 4),
            "nonrigid_scale": loss_part[:, 2, 0].sum() / (n * 3),
        }
    return deformed, loss_reg


# --------------------------- pure-JAX reference ----------------------------- #

def _reference_forward(gaussians, pose_latent, bone_transforms, params):
    xyz = gaussians["xyz"]
    rot = gaussians["rotation"]
    scale = gaussians["scaling"]
    n = xyz.shape[0]
    lat = jnp.broadcast_to(pose_latent[None, :], (n, pose_latent.shape[0]))
    x = jnp.concatenate([xyz, lat], -1)
    w1 = jnp.concatenate([params["nr_w1_xyz"], params["nr_w1_lat"]], 0)
    h = jax.nn.relu(x @ w1 + params["nr_b1"])
    h = jax.nn.relu(h @ params["nr_w2"] + params["nr_b2"])
    delta = h @ params["nr_w3"] + params["nr_b3"]
    d_xyz, d_rot, d_scale = delta[:, :3], delta[:, 3:7], delta[:, 7:10]
    xyz_nr = xyz + d_xyz
    hl = jax.nn.relu(xyz_nr @ params["lbs_w1"] + params["lbs_b1"])
    w = jax.nn.softmax(hl @ params["lbs_w2"] + params["lbs_b2"], axis=-1)
    A = w @ bone_transforms
    Rb = A[:, :9].reshape(n, 3, 3)
    tb = A[:, 9:]
    y = jnp.einsum("nij,nj->ni", Rb, xyz_nr) + tb
    loss = {"nonrigid_xyz": jnp.mean(d_xyz ** 2),
            "nonrigid_rot": jnp.mean(d_rot ** 2),
            "nonrigid_scale": jnp.mean(d_scale ** 2)}
    return {"xyz": y, "rotation": rot + d_rot, "scaling": scale + d_scale}, loss


# ----------------------------------- main ----------------------------------- #

if __name__ == "__main__":
    key = jax.random.PRNGKey(0)
    k_xyz, k_rot, k_scale, k_lat, k_par, k_bone = jax.random.split(key, 6)

    N = 2000          # not a multiple of the tile -> exercises padding + masking
    LATENT = 29
    HIDDEN = 64
    JOINTS = 16
    MAX_TILE = 8192   # sweep knob (8192-32768 for large N); small N -> small tiles

    gaussians = {
        "xyz": jax.random.normal(k_xyz, (N, 3), jnp.float32),
        "rotation": jax.random.normal(k_rot, (N, 4), jnp.float32),
        "scaling": 0.1 * jax.random.normal(k_scale, (N, 3), jnp.float32),
    }
    pose_latent = jax.random.normal(k_lat, (LATENT,), jnp.float32)
    params = init_params(k_par, latent_dim=LATENT, hidden=HIDDEN,
                         n_joints=JOINTS)
    bone_transforms = make_bone_transforms(k_bone, n_joints=JOINTS)

    fwd = jax.jit(partial(deformer_forward, compute_loss=True,
                          max_tile=MAX_TILE))
    deformed, loss_reg = fwd(gaussians, pose_latent, bone_transforms, params)

    jax.block_until_ready(deformed["xyz"])
    jax.block_until_ready(deformed["rotation"])
    jax.block_until_ready(deformed["scaling"])
    for v in loss_reg.values():
        jax.block_until_ready(v)

    assert deformed["xyz"].shape == (N, 3)
    assert deformed["rotation"].shape == (N, 4)
    assert deformed["scaling"].shape == (N, 3)

    # Correctness check against a pure-JAX f32 reference. The bf16 MXU inputs
    # (including the bf16 bone-transform blend) introduce small deviations:
    # xyz goes through the blended rigid transform -> slightly looser bound.
    ref_def, ref_loss = _reference_forward(gaussians, pose_latent,
                                           bone_transforms, params)
    tol = {"xyz": 1e-1, "rotation": 5e-2, "scaling": 5e-2}
    for k in ("xyz", "rotation", "scaling"):
        err = float(jnp.max(jnp.abs(deformed[k] - ref_def[k])))
        assert err < tol[k], (k, err)
    for k in ref_loss:
        a, b = float(loss_reg[k]), float(ref_loss[k])
        assert abs(a - b) <= 0.1 * abs(b) + 1e-6, (k, a, b)

    print("KERNEL_OK")
</pallas_src>

<mosaic_0001>
module attributes {stable_mosaic.version = 11 : i64} {
  func.func @_fused_deformer_kernel(%arg0: i32, %arg1: memref<1xi32, #tpu.memory_space<smem>>, %arg2: memref<10x1024xf32, #tpu.memory_space<vmem>>, %arg3: memref<64x3xbf16, #tpu.memory_space<vmem>>, %arg4: memref<64x1xf32, #tpu.memory_space<vmem>>, %arg5: memref<64x64xbf16, #tpu.memory_space<vmem>>, %arg6: memref<64x1xf32, #tpu.memory_space<vmem>>, %arg7: memref<10x64xbf16, #tpu.memory_space<vmem>>, %arg8: memref<10x1xf32, #tpu.memory_space<vmem>>, %arg9: memref<64x3xbf16, #tpu.memory_space<vmem>>, %arg10: memref<64x1xf32, #tpu.memory_space<vmem>>, %arg11: memref<16x64xbf16, #tpu.memory_space<vmem>>, %arg12: memref<16x1xf32, #tpu.memory_space<vmem>>, %arg13: memref<12x16xbf16, #tpu.memory_space<vmem>>, %arg14: memref<16x1024xf32, #tpu.memory_space<vmem>>, %arg15: memref<1x8x128xf32, #tpu.memory_space<vmem>>) attributes {dimension_semantics = [#tpu.dimension_semantics<parallel>], iteration_bounds = array<i64: 2>, scalar_prefetch = 1 : i64, scratch_operands = 0 : i64, tpu.core_type = #tpu.core_type<tc>, window_params = [{transform_indices = @transform_0, window_bounds = array<i64: 10, 1024>}, {pipeline_mode = #tpu.pipeline_mode<synchronous>, transform_indices = @transform_1, window_bounds = array<i64: 64, 3>}, {pipeline_mode = #tpu.pipeline_mode<synchronous>, transform_indices = @transform_2, window_bounds = array<i64: 64, 1>}, {pipeline_mode = #tpu.pipeline_mode<synchronous>, transform_indices = @transform_3, window_bounds = array<i64: 64, 64>}, {pipeline_mode = #tpu.pipeline_mode<synchronous>, transform_indices = @transform_4, window_bounds = array<i64: 64, 1>}, {pipeline_mode = #tpu.pipeline_mode<synchronous>, transform_indices = @transform_5, window_bounds = array<i64: 10, 64>}, {pipeline_mode = #tpu.pipeline_mode<synchronous>, transform_indices = @transform_6, window_bounds = array<i64: 10, 1>}, {pipeline_mode = #tpu.pipeline_mode<synchronous>, transform_indices = @transform_7, window_bounds = array<i64: 64, 3>}, {pipeline_mode = #tpu.pipeline_mode<synchronous>, transform_indices = @transform_8, window_bounds = array<i64: 64, 1>}, {pipeline_mode = #tpu.pipeline_mode<synchronous>, transform_indices = @transform_9, window_bounds = array<i64: 16, 64>}, {pipeline_mode = #tpu.pipeline_mode<synchronous>, transform_indices = @transform_10, window_bounds = array<i64: 16, 1>}, {pipeline_mode = #tpu.pipeline_mode<synchronous>, transform_indices = @transform_11, window_bounds = array<i64: 12, 16>}, {transform_indices = @transform_12, window_bounds = array<i64: 16, 1024>}, {transform_indices = @transform_13, window_bounds = array<i64: 1, 8, 128>}]} {
    %c0 = arith.constant 0 : index
    %c0_0 = arith.constant 0 : index
    %0 = vector.load %arg2[%c0, %c0_0] : memref<10x1024xf32, #tpu.memory_space<vmem>>, vector<10x1024xf32>
    %1 = vector.extract_strided_slice %0 {offsets = [0, 0], sizes = [3, 1024], strides = [1, 1]} : vector<10x1024xf32> to vector<3x1024xf32>
    %c0_1 = arith.constant 0 : index
    %c0_2 = arith.constant 0 : index
    %2 = vector.load %arg3[%c0_1, %c0_2] : memref<64x3xbf16, #tpu.memory_space<vmem>>, vector<64x3xbf16>
    %3 = arith.truncf %1 : vector<3x1024xf32> to vector<3x1024xbf16>
    %cst = arith.constant dense<0.000000e+00> : vector<64x1024xf32>
    %4 = tpu.matmul %2, %3, %cst {dimension_numbers = #tpu.dot_dimension_numbers<[1], [0], [0], [1], [0, 0, 1, 1], [], []>} : vector<64x3xbf16>, vector<3x1024xbf16>, vector<64x1024xf32> -> vector<64x1024xf32>
    %c0_3 = arith.constant 0 : index
    %c0_4 = arith.constant 0 : index
    %5 = vector.load %arg4[%c0_3, %c0_4] : memref<64x1xf32, #tpu.memory_space<vmem>>, vector<64x1xf32>
    %6 = vector.broadcast %5 : vector<64x1xf32> to vector<64x1024xf32>
    %7 = arith.addf %4, %6 : vector<64x1024xf32>
    %cst_5 = arith.constant 0.000000e+00 : f32
    %8 = vector.broadcast %cst_5 : f32 to vector<64x1024xf32>
    %9 = arith.maximumf %7, %8 : vector<64x1024xf32>
    %c0_6 = arith.constant 0 : index
    %c0_7 = arith.constant 0 : index
    %10 = vector.load %arg5[%c0_6, %c0_7] : memref<64x64xbf16, #tpu.memory_space<vmem>>, vector<64x64xbf16>
    %11 = arith.truncf %9 : vector<64x1024xf32> to vector<64x1024xbf16>
    %cst_8 = arith.constant dense<0.000000e+00> : vector<64x1024xf32>
    %12 = tpu.matmul %10, %11, %cst_8 {dimension_numbers = #tpu.dot_dimension_numbers<[1], [0], [0], [1], [0, 0, 1, 1], [], []>} : vector<64x64xbf16>, vector<64x1024xbf16>, vector<64x1024xf32> -> vector<64x1024xf32>
    %c0_9 = arith.constant 0 : index
    %c0_10 = arith.constant 0 : index
    %13 = vector.load %arg6[%c0_9, %c0_10] : memref<64x1xf32, #tpu.memory_space<vmem>>, vector<64x1xf32>
    %14 = vector.broadcast %13 : vector<64x1xf32> to vector<64x1024xf32>
    %15 = arith.addf %12, %14 : vector<64x1024xf32>
    %cst_11 = arith.constant 0.000000e+00 : f32
    %16 = vector.broadcast %cst_11 : f32 to vector<64x1024xf32>
    %17 = arith.maximumf %15, %16 : vector<64x1024xf32>
    %c0_12 = arith.constant 0 : index
    %c0_13 = arith.constant 0 : index
    %18 = vector.load %arg7[%c0_12, %c0_13] : memref<10x64xbf16, #tpu.memory_space<vmem>>, vector<10x64xbf16>
    %19 = arith.truncf %17 : vector<64x1024xf32> to vector<64x1024xbf16>
    %cst_14 = arith.constant dense<0.000000e+00> : vector<10x1024xf32>
    %20 = tpu.matmul %18, %19, %cst_14 {dimension_numbers = #tpu.dot_dimension_numbers<[1], [0], [0], [1], [0, 0, 1, 1], [], []>} : vector<10x64xbf16>, vector<64x1024xbf16>, vector<10x1024xf32> -> vector<10x1024xf32>
    %c0_15 = arith.constant 0 : index
    %c0_16 = arith.constant 0 : index
    %21 = vector.load %arg8[%c0_15, %c0_16] : memref<10x1xf32, #tpu.memory_space<vmem>>, vector<10x1xf32>
    %22 = vector.broadcast %21 : vector<10x1xf32> to vector<10x1024xf32>
    %23 = arith.addf %20, %22 : vector<10x1024xf32>
    %24 = arith.addf %0, %23 : vector<10x1024xf32>
    %25 = vector.extract_strided_slice %24 {offsets = [0, 0], sizes = [3, 1024], strides = [1, 1]} : vector<10x1024xf32> to vector<3x1024xf32>
    %c0_17 = arith.constant 0 : index
    %c0_18 = arith.constant 0 : index
    %26 = vector.load %arg9[%c0_17, %c0_18] : memref<64x3xbf16, #tpu.memory_space<vmem>>, vector<64x3xbf16>
    %27 = arith.truncf %25 : vector<3x1024xf32> to vector<3x1024xbf16>
    %cst_19 = arith.constant dense<0.000000e+00> : vector<64x1024xf32>
    %28 = tpu.matmul %26, %27, %cst_19 {dimension_numbers = #tpu.dot_dimension_numbers<[1], [0], [0], [1], [0, 0, 1, 1], [], []>} : vector<64x3xbf16>, vector<3x1024xbf16>, vector<64x1024xf32> -> vector<64x1024xf32>
    %c0_20 = arith.constant 0 : index
    %c0_21 = arith.constant 0 : index
    %29 = vector.load %arg10[%c0_20, %c0_21] : memref<64x1xf32, #tpu.memory_space<vmem>>, vector<64x1xf32>
    %30 = vector.broadcast %29 : vector<64x1xf32> to vector<64x1024xf32>
    %31 = arith.addf %28, %30 : vector<64x1024xf32>
    %cst_22 = arith.constant 0.000000e+00 : f32
    %32 = vector.broadcast %cst_22 : f32 to vector<64x1024xf32>
    %33 = arith.maximumf %31, %32 : vector<64x1024xf32>
    %c0_23 = arith.constant 0 : index
    %c0_24 = arith.constant 0 : index
    %34 = vector.load %arg11[%c0_23, %c0_24] : memref<16x64xbf16, #tpu.memory_space<vmem>>, vector<16x64xbf16>
    %35 = arith.truncf %33 : vector<64x1024xf32> to vector<64x1024xbf16>
    %cst_25 = arith.constant dense<0.000000e+00> : vector<16x1024xf32>
    %36 = tpu.matmul %34, %35, %cst_25 {dimension_numbers = #tpu.dot_dimension_numbers<[1], [0], [0], [1], [0, 0, 1, 1], [], []>} : vector<16x64xbf16>, vector<64x1024xbf16>, vector<16x1024xf32> -> vector<16x1024xf32>
    %c0_26 = arith.constant 0 : index
    %c0_27 = arith.constant 0 : index
    %37 = vector.load %arg12[%c0_26, %c0_27] : memref<16x1xf32, #tpu.memory_space<vmem>>, vector<16x1xf32>
    %38 = vector.broadcast %37 : vector<16x1xf32> to vector<16x1024xf32>
    %39 = arith.addf %36, %38 : vector<16x1024xf32>
    %cst_28 = arith.constant dense<0xFF800000> : vector<1024xf32>
    %40 = vector.multi_reduction <maximumf>, %39, %cst_28 [0] : vector<16x1024xf32> to vector<1024xf32>
    %41 = vector.shape_cast %40 : vector<1024xf32> to vector<1x1024xf32>
    %42 = vector.broadcast %41 : vector<1x1024xf32> to vector<16x1024xf32>
    %43 = arith.subf %39, %42 : vector<16x1024xf32>
    %44 = math.exp %43 : vector<16x1024xf32>
    %cst_29 = arith.constant dense<0.000000e+00> : vector<1024xf32>
    %45 = vector.multi_reduction <add>, %44, %cst_29 [0] : vector<16x1024xf32> to vector<1024xf32>
    %46 = vector.shape_cast %45 : vector<1024xf32> to vector<1x1024xf32>
    %47 = tpu.reciprocal %46 : vector<1x1024xf32> -> vector<1x1024xf32>
    %48 = vector.broadcast %47 : vector<1x1024xf32> to vector<16x1024xf32>
    %49 = arith.mulf %44, %48 : vector<16x1024xf32>
    %c0_30 = arith.constant 0 : index
    %c0_31 = arith.constant 0 : index
    %50 = vector.load %arg13[%c0_30, %c0_31] : memref<12x16xbf16, #tpu.memory_space<vmem>>, vector<12x16xbf16>
    %51 = arith.truncf %49 : vector<16x1024xf32> to vector<16x1024xbf16>
    %cst_32 = arith.constant dense<0.000000e+00> : vector<12x1024xf32>
    %52 = tpu.matmul %50, %51, %cst_32 {dimension_numbers = #tpu.dot_dimension_numbers<[1], [0], [0], [1], [0, 0, 1, 1], [], []>} : vector<12x16xbf16>, vector<16x1024xbf16>, vector<12x1024xf32> -> vector<12x1024xf32>
    %53 = vector.extract_strided_slice %52 {offsets = [0, 0], sizes = [3, 1024], strides = [1, 1]} : vector<12x1024xf32> to vector<3x1024xf32>
    %54 = vector.extract_strided_slice %25 {offsets = [0, 0], sizes = [1, 1024], strides = [1, 1]} : vector<3x1024xf32> to vector<1x1024xf32>
    %55 = vector.broadcast %54 : vector<1x1024xf32> to vector<3x1024xf32>
    %56 = arith.mulf %53, %55 : vector<3x1024xf32>
    %57 = vector.extract_strided_slice %52 {offsets = [3, 0], sizes = [3, 1024], strides = [1, 1]} : vector<12x1024xf32> to vector<3x1024xf32>
    %58 = vector.extract_strided_slice %25 {offsets = [1, 0], sizes = [1, 1024], strides = [1, 1]} : vector<3x1024xf32> to vector<1x1024xf32>
    %59 = vector.broadcast %58 : vector<1x1024xf32> to vector<3x1024xf32>
    %60 = arith.mulf %57, %59 : vector<3x1024xf32>
    %61 = arith.addf %56, %60 : vector<3x1024xf32>
    %62 = vector.extract_strided_slice %52 {offsets = [6, 0], sizes = [3, 1024], strides = [1, 1]} : vector<12x1024xf32> to vector<3x1024xf32>
    %63 = vector.extract_strided_slice %25 {offsets = [2, 0], sizes = [1, 1024], strides = [1, 1]} : vector<3x1024xf32> to vector<1x1024xf32>
    %64 = vector.broadcast %63 : vector<1x1024xf32> to vector<3x1024xf32>
    %65 = arith.mulf %62, %64 : vector<3x1024xf32>
    %66 = arith.addf %61, %65 : vector<3x1024xf32>
    %67 = vector.extract_strided_slice %52 {offsets = [9, 0], sizes = [3, 1024], strides = [1, 1]} : vector<12x1024xf32> to vector<3x1024xf32>
    %68 = arith.addf %66, %67 : vector<3x1024xf32>
    %c0_33 = arith.constant 0 : index
    %c0_34 = arith.constant 0 : index
    %69 = vector.load %arg14[%c0_33, %c0_34] : memref<16x1024xf32, #tpu.memory_space<vmem>>, vector<10x1024xf32>
    tpu.vector_store %arg14[%c0_33, %c0_34], %24 {strides = array<i32>} : memref<16x1024xf32, #tpu.memory_space<vmem>>, vector<10x1024xf32>,
    %c0_35 = arith.constant 0 : index
    %c0_36 = arith.constant 0 : index
    %70 = vector.load %arg14[%c0_35, %c0_36] : memref<16x1024xf32, #tpu.memory_space<vmem>>, vector<3x1024xf32>
    tpu.vector_store %arg14[%c0_35, %c0_36], %68 {strides = array<i32>} : memref<16x1024xf32, #tpu.memory_space<vmem>>, vector<3x1024xf32>,
    %cst_37 = arith.constant 0.000000e+00 : f32
    %71 = vector.broadcast %cst_37 : f32 to vector<6x1024xf32>
    %c10 = arith.constant 10 : index
    %c0_38 = arith.constant 0 : index
    %72 = vector.load %arg14[%c10, %c0_38] : memref<16x1024xf32, #tpu.memory_space<vmem>>, vector<6x1024xf32>
    tpu.vector_store %arg14[%c10, %c0_38], %71 {strides = array<i32>} : memref<16x1024xf32, #tpu.memory_space<vmem>>, vector<6x1024xf32>,
    %73 = arith.mulf %23, %23 : vector<10x1024xf32>
    %c1_i32 = arith.constant 1 : i32
    %74 = arith.addi %arg0, %c1_i32 : i32
    %c1024_i32 = arith.constant 1024 : i32
    %75 = arith.muli %74, %c1024_i32 : i32
    %c0_39 = arith.constant 0 : index
    %76 = memref.load %arg1[%c0_39] : memref<1xi32, #tpu.memory_space<smem>>
    %77 = arith.cmpi sgt, %75, %76 : i32
    %true = arith.constant true
    %78 = arith.xori %77, %true : i1
    %79 = arith.extui %78 : i1 to i32
    %c0_i32 = arith.constant 0 : i32
    %80 = arith.cmpi ne, %79, %c0_i32 : i32
    scf.if %80 {
      %83 = vector.extract_strided_slice %73 {offsets = [0, 0], sizes = [3, 1024], strides = [1, 1]} : vector<10x1024xf32> to vector<3x1024xf32>
      %84 = vector.shape_cast %83 : vector<3x1024xf32> to vector<1x3x1024xf32>
      %cst_41 = arith.constant dense<0.000000e+00> : vector<1xf32>
      %85 = vector.multi_reduction <add>, %84, %cst_41 [1, 2] : vector<1x3x1024xf32> to vector<1xf32>
      %86 = vector.shape_cast %85 : vector<1xf32> to vector<1x1x1xf32>
      %87 = vector.extract %86[0, 0, 0] : f32 from vector<1x1x1xf32>
      %88 = vector.extract_strided_slice %73 {offsets = [3, 0], sizes = [4, 1024], strides = [1, 1]} : vector<10x1024xf32> to vector<4x1024xf32>
      %89 = vector.shape_cast %88 : vector<4x1024xf32> to vector<1x4x1024xf32>
      %cst_42 = arith.constant dense<0.000000e+00> : vector<1xf32>
      %90 = vector.multi_reduction <add>, %89, %cst_42 [1, 2] : vector<1x4x1024xf32> to vector<1xf32>
      %91 = vector.shape_cast %90 : vector<1xf32> to vector<1x1x1xf32>
      %92 = vector.extract %91[0, 0, 0] : f32 from vector<1x1x1xf32>
      %93 = vector.extract_strided_slice %73 {offsets = [7, 0], sizes = [3, 1024], strides = [1, 1]} : vector<10x1024xf32> to vector<3x1024xf32>
      %94 = vector.shape_cast %93 : vector<3x1024xf32> to vector<1x3x1024xf32>
      %cst_43 = arith.constant dense<0.000000e+00> : vector<1xf32>
      %95 = vector.multi_reduction <add>, %94, %cst_43 [1, 2] : vector<1x3x1024xf32> to vector<1xf32>
      %96 = vector.shape_cast %95 : vector<1xf32> to vector<1x1x1xf32>
      %97 = vector.extract %96[0, 0, 0] : f32 from vector<1x1x1xf32>
      %98 = tpu.iota {dimensions = array<i32: 0>} : vector<8x128xi32>
      %c0_i32_44 = arith.constant 0 : i32
      %99 = vector.broadcast %c0_i32_44 : i32 to vector<8x128xi32>
      %100 = arith.cmpi eq, %98, %99 : vector<8x128xi32>
      %c1_i32_45 = arith.constant 1 : i32
      %101 = vector.broadcast %c1_i32_45 : i32 to vector<8x128xi32>
      %102 = arith.cmpi eq, %98, %101 : vector<8x128xi32>
      %c2_i32 = arith.constant 2 : i32
      %103 = vector.broadcast %c2_i32 : i32 to vector<8x128xi32>
      %104 = arith.cmpi eq, %98, %103 : vector<8x128xi32>
      %cst_46 = arith.constant 0.000000e+00 : f32
      %105 = vector.broadcast %97 : f32 to vector<8x128xf32>
      %106 = vector.broadcast %cst_46 : f32 to vector<8x128xf32>
      %107 = arith.select %104, %105, %106 : vector<8x128xi1>, vector<8x128xf32>
      %108 = vector.broadcast %92 : f32 to vector<8x128xf32>
      %109 = arith.select %102, %108, %107 : vector<8x128xi1>, vector<8x128xf32>
      %110 = vector.broadcast %87 : f32 to vector<8x128xf32>
      %111 = arith.select %100, %110, %109 : vector<8x128xi1>, vector<8x128xf32>
      %c0_47 = arith.constant 0 : index
      %c0_48 = arith.constant 0 : index
      %c0_49 = arith.constant 0 : index
      %112 = vector.load %arg15[%c0_47, %c0_48, %c0_49] : memref<1x8x128xf32, #tpu.memory_space<vmem>>, vector<1x8x128xf32>
      %113 = vector.shape_cast %112 : vector<1x8x128xf32> to vector<8x128xf32>
      %114 = vector.shape_cast %111 : vector<8x128xf32> to vector<1x8x128xf32>
      tpu.vector_store %arg15[%c0_47, %c0_48, %c0_49], %114 {strides = array<i32>} : memref<1x8x128xf32, #tpu.memory_space<vmem>>, vector<1x8x128xf32>,
    } else {
    }
    %81 = arith.extui %77 : i1 to i32
    %c0_i32_40 = arith.constant 0 : i32
    %82 = arith.cmpi ne, %81, %c0_i32_40 : i32
    scf.if %82 {
      %83 = tpu.iota {dimensions = array<i32: 1>} : vector<1x1024xi32>
      %c1024_i32_41 = arith.constant 1024 : i32
      %84 = arith.muli %arg0, %c1024_i32_41 : i32
      %85 = vector.broadcast %84 : i32 to vector<1x1024xi32>
      %86 = arith.addi %83, %85 : vector<1x1024xi32>
      %c0_42 = arith.constant 0 : index
      %87 = memref.load %arg1[%c0_42] : memref<1xi32, #tpu.memory_space<smem>>
      %88 = vector.broadcast %87 : i32 to vector<1x1024xi32>
      %89 = arith.cmpi slt, %86, %88 : vector<1x1024xi32>
      %90 = arith.extui %89 : vector<1x1024xi1> to vector<1x1024xi32>
      %91 = arith.sitofp %90 : vector<1x1024xi32> to vector<1x1024xf32>
      %92 = vector.broadcast %91 : vector<1x1024xf32> to vector<10x1024xf32>
      %93 = arith.mulf %73, %92 : vector<10x1024xf32>
      %94 = vector.extract_strided_slice %93 {offsets = [0, 0], sizes = [3, 1024], strides = [1, 1]} : vector<10x1024xf32> to vector<3x1024xf32>
      %95 = vector.shape_cast %94 : vector<3x1024xf32> to vector<1x3x1024xf32>
      %cst_43 = arith.constant dense<0.000000e+00> : vector<1xf32>
      %96 = vector.multi_reduction <add>, %95, %cst_43 [1, 2] : vector<1x3x1024xf32> to vector<1xf32>
      %97 = vector.shape_cast %96 : vector<1xf32> to vector<1x1x1xf32>
      %98 = vector.extract %97[0, 0, 0] : f32 from vector<1x1x1xf32>
      %99 = vector.extract_strided_slice %93 {offsets = [3, 0], sizes = [4, 1024], strides = [1, 1]} : vector<10x1024xf32> to vector<4x1024xf32>
      %100 = vector.shape_cast %99 : vector<4x1024xf32> to vector<1x4x1024xf32>
      %cst_44 = arith.constant dense<0.000000e+00> : vector<1xf32>
      %101 = vector.multi_reduction <add>, %100, %cst_44 [1, 2] : vector<1x4x1024xf32> to vector<1xf32>
      %102 = vector.shape_cast %101 : vector<1xf32> to vector<1x1x1xf32>
      %103 = vector.extract %102[0, 0, 0] : f32 from vector<1x1x1xf32>
      %104 = vector.extract_strided_slice %93 {offsets = [7, 0], sizes = [3, 1024], strides = [1, 1]} : vector<10x1024xf32> to vector<3x1024xf32>
      %105 = vector.shape_cast %104 : vector<3x1024xf32> to vector<1x3x1024xf32>
      %cst_45 = arith.constant dense<0.000000e+00> : vector<1xf32>
      %106 = vector.multi_reduction <add>, %105, %cst_45 [1, 2] : vector<1x3x1024xf32> to vector<1xf32>
      %107 = vector.shape_cast %106 : vector<1xf32> to vector<1x1x1xf32>
      %108 = vector.extract %107[0, 0, 0] : f32 from vector<1x1x1xf32>
      %109 = tpu.iota {dimensions = array<i32: 0>} : vector<8x128xi32>
      %c0_i32_46 = arith.constant 0 : i32
      %110 = vector.broadcast %c0_i32_46 : i32 to vector<8x128xi32>
      %111 = arith.cmpi eq, %109, %110 : vector<8x128xi32>
      %c1_i32_47 = arith.constant 1 : i32
      %112 = vector.broadcast %c1_i32_47 : i32 to vector<8x128xi32>
      %113 = arith.cmpi eq, %109, %112 : vector<8x128xi32>
      %c2_i32 = arith.constant 2 : i32
      %114 = vector.broadcast %c2_i32 : i32 to vector<8x128xi32>
      %115 = arith.cmpi eq, %109, %114 : vector<8x128xi32>
      %cst_48 = arith.constant 0.000000e+00 : f32
      %116 = vector.broadcast %108 : f32 to vector<8x128xf32>
      %117 = vector.broadcast %cst_48 : f32 to vector<8x128xf32>
      %118 = arith.select %115, %116, %117 : vector<8x128xi1>, vector<8x128xf32>
      %119 = vector.broadcast %103 : f32 to vector<8x128xf32>
      %120 = arith.select %113, %119, %118 : vector<8x128xi1>, vector<8x128xf32>
      %121 = vector.broadcast %98 : f32 to vector<8x128xf32>
      %122 = arith.select %111, %121, %120 : vector<8x128xi1>, vector<8x128xf32>
      %c0_49 = arith.constant 0 : index
      %c0_50 = arith.constant 0 : index
      %c0_51 = arith.constant 0 : index
      %123 = vector.load %arg15[%c0_49, %c0_50, %c0_51] : memref<1x8x128xf32, #tpu.memory_space<vmem>>, vector<1x8x128xf32>
      %124 = vector.shape_cast %123 : vector<1x8x128xf32> to vector<8x128xf32>
      %125 = vector.shape_cast %122 : vector<8x128xf32> to vector<1x8x128xf32>
      tpu.vector_store %arg15[%c0_49, %c0_50, %c0_51], %125 {strides = array<i32>} : memref<1x8x128xf32, #tpu.memory_space<vmem>>, vector<1x8x128xf32>,
    } else {
    }
    return
  }
  func.func @transform_0(%arg0: i32, %arg1: memref<1xi32, #tpu.memory_space<smem>>) -> (i32, i32) {
    %c0_i32 = arith.constant 0 : i32
    %c0_i32_0 = arith.constant 0 : i32
    return %c0_i32, %arg0 : i32, i32
  }
  func.func @transform_1(%arg0: i32, %arg1: memref<1xi32, #tpu.memory_space<smem>>) -> (i32, i32) {
    %c0_i32 = arith.constant 0 : i32
    %c0_i32_0 = arith.constant 0 : i32
    %c0_i32_1 = arith.constant 0 : i32
    return %c0_i32, %c0_i32_0 : i32, i32
  }
  func.func @transform_2(%arg0: i32, %arg1: memref<1xi32, #tpu.memory_space<smem>>) -> (i32, i32) {
    %c0_i32 = arith.constant 0 : i32
    %c0_i32_0 = arith.constant 0 : i32
    %c0_i32_1 = arith.constant 0 : i32
    return %c0_i32, %c0_i32_0 : i32, i32
  }
  func.func @transform_3(%arg0: i32, %arg1: memref<1xi32, #tpu.memory_space<smem>>) -> (i32, i32) {
    %c0_i32 = arith.constant 0 : i32
    %c0_i32_0 = arith.constant 0 : i32
    %c0_i32_1 = arith.constant 0 : i32
    return %c0_i32, %c0_i32_0 : i32, i32
  }
  func.func @transform_4(%arg0: i32, %arg1: memref<1xi32, #tpu.memory_space<smem>>) -> (i32, i32) {
    %c0_i32 = arith.constant 0 : i32
    %c0_i32_0 = arith.constant 0 : i32
    %c0_i32_1 = arith.constant 0 : i32
    return %c0_i32, %c0_i32_0 : i32, i32
  }
  func.func @transform_5(%arg0: i32, %arg1: memref<1xi32, #tpu.memory_space<smem>>) -> (i32, i32) {
    %c0_i32 = arith.constant 0 : i32
    %c0_i32_0 = arith.constant 0 : i32
    %c0_i32_1 = arith.constant 0 : i32
    return %c0_i32, %c0_i32_0 : i32, i32
  }
  func.func @transform_6(%arg0: i32, %arg1: memref<1xi32, #tpu.memory_space<smem>>) -> (i32, i32) {
    %c0_i32 = arith.constant 0 : i32
    %c0_i32_0 = arith.constant 0 : i32
    %c0_i32_1 = arith.constant 0 : i32
    return %c0_i32, %c0_i32_0 : i32, i32
  }
  func.func @transform_7(%arg0: i32, %arg1: memref<1xi32, #tpu.memory_space<smem>>) -> (i32, i32) {
    %c0_i32 = arith.constant 0 : i32
    %c0_i32_0 = arith.constant 0 : i32
    %c0_i32_1 = arith.constant 0 : i32
    return %c0_i32, %c0_i32_0 : i32, i32
  }
  func.func @transform_8(%arg0: i32, %arg1: memref<1xi32, #tpu.memory_space<smem>>) -> (i32, i32) {
    %c0_i32 = arith.constant 0 : i32
    %c0_i32_0 = arith.constant 0 : i32
    %c0_i32_1 = arith.constant 0 : i32
    return %c0_i32, %c0_i32_0 : i32, i32
  }
  func.func @transform_9(%arg0: i32, %arg1: memref<1xi32, #tpu.memory_space<smem>>) -> (i32, i32) {
    %c0_i32 = arith.constant 0 : i32
    %c0_i32_0 = arith.constant 0 : i32
    %c0_i32_1 = arith.constant 0 : i32
    return %c0_i32, %c0_i32_0 : i32, i32
  }
  func.func @transform_10(%arg0: i32, %arg1: memref<1xi32, #tpu.memory_space<smem>>) -> (i32, i32) {
    %c0_i32 = arith.constant 0 : i32
    %c0_i32_0 = arith.constant 0 : i32
    %c0_i32_1 = arith.constant 0 : i32
    return %c0_i32, %c0_i32_0 : i32, i32
  }
  func.func @transform_11(%arg0: i32, %arg1: memref<1xi32, #tpu.memory_space<smem>>) -> (i32, i32) {
    %c0_i32 = arith.constant 0 : i32
    %c0_i32_0 = arith.constant 0 : i32
    %c0_i32_1 = arith.constant 0 : i32
    return %c0_i32, %c0_i32_0 : i32, i32
  }
  func.func @transform_12(%arg0: i32, %arg1: memref<1xi32, #tpu.memory_space<smem>>) -> (i32, i32) {
    %c0_i32 = arith.constant 0 : i32
    %c0_i32_0 = arith.constant 0 : i32
    return %c0_i32, %arg0 : i32, i32
  }
  func.func @transform_13(%arg0: i32, %arg1: memref<1xi32, #tpu.memory_space<smem>>) -> (i32, i32, i32) {
    %c0_i32 = arith.constant 0 : i32
    %c0_i32_0 = arith.constant 0 : i32
    %c0_i32_1 = arith.constant 0 : i32
    return %arg0, %c0_i32, %c0_i32_0 : i32, i32, i32
  }
}

</mosaic_0001>

<llo_original>
// kernel: deformer_forward.1
$region0: #{deformer_forward.1}
  #allocation0 [shape = 'u32[]', space=smem, size = 0x4, offset = 0x4, fixed_abs, tag = 'smem constant byte address 0x4 - core index']
  #allocation1 [shape = 'u32[144,128]{1,0:T(1,128)}', space=vmem, size = 0x12000, scoped, tag = 'internal scratch']
  #allocation2 [shape = 's32[1]{0}', space=sflag, size = 0x4, scoped, tag = 'scoped memory for deformer_forward.1']
  #allocation3 [shape = 's32[1]{0:T(128)S(6)}', space=smem, size = 0x200, scoped, tag = 'prefetched SMEM operand 0']
  %s0 = inlined_call_operand.<no memory space> [shape: s32[1], index: 0, kind: input, shape index: {}]
  %s1 = inlined_call_operand.vmem [shape: f32[10,2048], index: 1, kind: input, shape index: {}]
  %s2 = inlined_call_operand.vmem [shape: bf16[64,3], index: 2, kind: input, shape index: {}]
  %s3 = inlined_call_operand.vmem [shape: f32[64,1], index: 3, kind: input, shape index: {}]
  %s4 = inlined_call_operand.vmem [shape: bf16[64,64], index: 4, kind: input, shape index: {}]
  %s5 = inlined_call_operand.vmem [shape: f32[64,1], index: 5, kind: input, shape index: {}]
  %s6 = inlined_call_operand.vmem [shape: bf16[10,64], index: 6, kind: input, shape index: {}]
  %s7 = inlined_call_operand.vmem [shape: f32[10,1], index: 7, kind: input, shape index: {}]
  %s8 = inlined_call_operand.vmem [shape: bf16[64,3], index: 8, kind: input, shape index: {}]
  %s9 = inlined_call_operand.vmem [shape: f32[64,1], index: 9, kind: input, shape index: {}]
  %s10 = inlined_call_operand.vmem [shape: bf16[16,64], index: 10, kind: input, shape index: {}]
  %s11 = inlined_call_operand.vmem [shape: f32[16,1], index: 11, kind: input, shape index: {}]
  %s12 = inlined_call_operand.vmem [shape: bf16[12,16], index: 12, kind: input, shape index: {}]
  %s13 = inlined_call_operand.vmem [shape: f32[16,2048], index: 13, kind: output, shape index: {0}]
  %s14 = inlined_call_operand.vmem [shape: f32[2,8,128], index: 14, kind: output, shape index: {1}]
  %15 = xla_tuple %s13, %s14
  %s16 = sld [smem:[#allocation0]]
  $region139: #{deformer_forward.1} parent=0
    _
  %s18 = ssub.s32 1, %s16
  %s19 = scalar_select 0, %s18, %s16
  %20 = sst [smem:[#allocation3]] %s0
  $region1: #{deformer_forward.1} parent=0
    #allocation4 [shape = 'u8[131072]{0}', space=vmem, size = 0x20000, scoped, tag = 'input window, operand 1']
    #allocation5 [shape = 'u8[131072]{0}', space=vmem, size = 0x20000, scoped, tag = 'output window, operand 0']
    loop: start=0, step=1, limit=4
    $region2: #{deformer_forward.1} parent=1 // loop_pre_header
      _
    $region3: #{deformer_forward.1} parent=1 // loop_header
      %s22 = sphi 0, %s26
      %p23 = scmp.ge.s32.totalorder %s22, 4
      %s32 = sphi 0, %s34
      %s35 = sphi 0, %s32
      %s36 = sphi 0, %s35
      %s52 = sphi 0, %s36
      %s56 = sphi 0, %s56
      %s58 = sphi 0, %s56
      %s59 = sphi 0, %s58
      %s73 = sphi 0, %s59
      %s77 = sphi 0, %s77
      %s79 = sphi 0, %s77
      %s80 = sphi 0, %s79
      %s94 = sphi 0, %s80
      %s98 = sphi 0, %s98
      %s100 = sphi 0, %s98
      %s101 = sphi 0, %s100
      %s115 = sphi 0, %s101
      %s119 = sphi 0, %s119
      %s121 = sphi 0, %s119
      %s122 = sphi 0, %s121
      %s136 = sphi 0, %s122
      %s140 = sphi 0, %s140
      %s142 = sphi 0, %s140
      %s143 = sphi 0, %s142
      %s157 = sphi 0, %s143
      %s161 = sphi 0, %s161
      %s163 = sphi 0, %s161
      %s164 = sphi 0, %s163
      %s178 = sphi 0, %s164
      %s182 = sphi 0, %s182
      %s184 = sphi 0, %s182
      %s185 = sphi 0, %s184
      %s199 = sphi 0, %s185
      %s203 = sphi 0, %s203
      %s205 = sphi 0, %s203
      %s206 = sphi 0, %s205
      %s220 = sphi 0, %s206
      %s224 = sphi 0, %s224
      %s226 = sphi 0, %s224
      %s227 = sphi 0, %s226
      %s241 = sphi 0, %s227
      %s245 = sphi 0, %s245
      %s247 = sphi 0, %s245
      %s248 = sphi 0, %s247
      %s262 = sphi 0, %s248
      %s266 = sphi 0, %s266
      %s268 = sphi 0, %s266
      %s269 = sphi 0, %s268
      %s283 = sphi 0, %s269
      %s289 = sphi 0, %s291
      %s292 = sphi 0, %s289
      %s293 = sphi 0, %s292
      %s309 = sphi 0, %s293
      %s315 = sphi 0, %s317
      %s318 = sphi 0, %s315
      %s319 = sphi 0, %s318
      %s335 = sphi 0, %s319
    $region4: #{deformer_forward.1} parent=1 // loop_header_branch
      %25 = sbr.rel (%p23) target = $region8
    $region5: #{deformer_forward.1} parent=1 // loop_body
      %s27 = ssub.s32 %s22, 1
      %s28 = ssub.s32 %s22, 2
      %s29 = sadd.s32 %s22, 1
      %s30 = ssub.s32 %s22, %s29
      %p31 = scmp.eq.s32.totalorder %s30, 0
      %s33 = sadd.s32 %s32, 1
      %s34 = scalar_select %p31, %s32, %s33
      %p37 = pneg %p31
      %p38 = scmp.eq.s32.totalorder %s22, 1
      %p39 = por %p37, %p38
      %p40 = scmp.ne.s32.totalorder %s32, %s35
      %p41 = scmp.eq.s32.totalorder %s22, 0
      %p42 = por %p40, %p41
      %p43 = scmp.ne.s32.totalorder %s32, %s35
      %p44 = scmp.eq.s32.totalorder %s27, 1
      %p45 = por %p43, %p44
      %p46 = scmp.ne.s32.totalorder %s35, %s36
      %p47 = scmp.eq.s32.totalorder %s27, 0
      %p48 = por %p46, %p47
      %p49 = scmp.ne.s32.totalorder %s35, %s36
      %p50 = scmp.eq.s32.totalorder %s28, 1
      %p51 = por %p49, %p50
      %p53 = scmp.ne.s32.totalorder %s36, %s52
      %p54 = scmp.eq.s32.totalorder %s28, 0
      %p55 = por %p53, %p54
      %s57 = sadd.s32 %s56, 1
      %p60 = scmp.eq.s32.totalorder %s22, 1
      %p61 = scmp.ne.s32.totalorder %s56, %s58
      %p62 = scmp.eq.s32.totalorder %s22, 0
      %p63 = por %p61, %p62
      %p64 = scmp.ne.s32.totalorder %s56, %s58
      %p65 = scmp.eq.s32.totalorder %s27, 1
      %p66 = por %p64, %p65
      %p67 = scmp.ne.s32.totalorder %s58, %s59
      %p68 = scmp.eq.s32.totalorder %s27, 0
      %p69 = por %p67, %p68
      %p70 = scmp.ne.s32.totalorder %s58, %s59
      %p71 = scmp.eq.s32.totalorder %s28, 1
      %p72 = por %p70, %p71
      %p74 = scmp.ne.s32.totalorder %s59, %s73
      %p75 = scmp.eq.s32.totalorder %s28, 0
      %p76 = por %p74, %p75
      %s78 = sadd.s32 %s77, 1
      %p81 = scmp.eq.s32.totalorder %s22, 1
      %p82 = scmp.ne.s32.totalorder %s77, %s79
      %p83 = scmp.eq.s32.totalorder %s22, 0
      %p84 = por %p82, %p83
      %p85 = scmp.ne.s32.totalorder %s77, %s79
      %p86 = scmp.eq.s32.totalorder %s27, 1
      %p87 = por %p85, %p86
      %p88 = scmp.ne.s32.totalorder %s79, %s80
      %p89 = scmp.eq.s32.totalorder %s27, 0
      %p90 = por %p88, %p89
      %p91 = scmp.ne.s32.totalorder %s79, %s80
      %p92 = scmp.eq.s32.totalorder %s28, 1
      %p93 = por %p91, %p92
      %p95 = scmp.ne.s32.totalorder %s80, %s94
      %p96 = scmp.eq.s32.totalorder %s28, 0
      %p97 = por %p95, %p96
      %s99 = sadd.s32 %s98, 1
      %p102 = scmp.eq.s32.totalorder %s22, 1
      %p103 = scmp.ne.s32.totalorder %s98, %s100
      %p104 = scmp.eq.s32.totalorder %s22, 0
      %p105 = por %p103, %p104
      %p106 = scmp.ne.s32.totalorder %s98, %s100
      %p107 = scmp.eq.s32.totalorder %s27, 1
      %p108 = por %p106, %p107
      %p109 = scmp.ne.s32.totalorder %s100, %s101
      %p110 = scmp.eq.s32.totalorder %s27, 0
      %p111 = por %p109, %p110
      %p112 = scmp.ne.s32.totalorder %s100, %s101
      %p113 = scmp.eq.s32.totalorder %s28, 1
      %p114 = por %p112, %p113
      %p116 = scmp.ne.s32.totalorder %s101, %s115
      %p117 = scmp.eq.s32.totalorder %s28, 0
      %p118 = por %p116, %p117
      %s120 = sadd.s32 %s119, 1
      %p123 = scmp.eq.s32.totalorder %s22, 1
      %p124 = scmp.ne.s32.totalorder %s119, %s121
      %p125 = scmp.eq.s32.totalorder %s22, 0
      %p126 = por %p124, %p125
      %p127 = scmp.ne.s32.totalorder %s119, %s121
      %p128 = scmp.eq.s32.totalorder %s27, 1
      %p129 = por %p127, %p128
      %p130 = scmp.ne.s32.totalorder %s121, %s122
      %p131 = scmp.eq.s32.totalorder %s27, 0
      %p132 = por %p130, %p131
      %p133 = scmp.ne.s32.totalorder %s121, %s122
      %p134 = scmp.eq.s32.totalorder %s28, 1
      %p135 = por %p133, %p134
      %p137 = scmp.ne.s32.totalorder %s122, %s136
      %p138 = scmp.eq.s32.totalorder %s28, 0
      %p139 = por %p137, %p138
      %s141 = sadd.s32 %s140, 1
      %p144 = scmp.eq.s32.totalorder %s22, 1
      %p145 = scmp.ne.s32.totalorder %s140, %s142
      %p146 = scmp.eq.s32.totalorder %s22, 0
      %p147 = por %p145, %p146
      %p148 = scmp.ne.s32.totalorder %s140, %s142
      %p149 = scmp.eq.s32.totalorder %s27, 1
      %p150 = por %p148, %p149
      %p151 = scmp.ne.s32.totalorder %s142, %s143
      %p152 = scmp.eq.s32.totalorder %s27, 0
      %p153 = por %p151, %p152
      %p154 = scmp.ne.s32.totalorder %s142, %s143
      %p155 = scmp.eq.s32.totalorder %s28, 1
      %p156 = por %p154, %p155
      %p158 = scmp.ne.s32.totalorder %s143, %s157
      %p159 = scmp.eq.s32.totalorder %s28, 0
      %p160 = por %p158, %p159
      %s162 = sadd.s32 %s161, 1
      %p165 = scmp.eq.s32.totalorder %s22, 1
      %p166 = scmp.ne.s32.totalorder %s161, %s163
      %p167 = scmp.eq.s32.totalorder %s22, 0
      %p168 = por %p166, %p167
      %p169 = scmp.ne.s32.totalorder %s161, %s163
      %p170 = scmp.eq.s32.totalorder %s27, 1
      %p171 = por %p169, %p170
      %p172 = scmp.ne.s32.totalorder %s163, %s164
      %p173 = scmp.eq.s32.totalorder %s27, 0
      %p174 = por %p172, %p173
      %p175 = scmp.ne.s32.totalorder %s163, %s164
      %p176 = scmp.eq.s32.totalorder %s28, 1
      %p177 = por %p175, %p176
      %p179 = scmp.ne.s32.totalorder %s164, %s178
      %p180 = scmp.eq.s32.totalorder %s28, 0
      %p181 = por %p179, %p180
      %s183 = sadd.s32 %s182, 1
      %p186 = scmp.eq.s32.totalorder %s22, 1
      %p187 = scmp.ne.s32.totalorder %s182, %s184
      %p188 = scmp.eq.s32.totalorder %s22, 0
      %p189 = por %p187, %p188
      %p190 = scmp.ne.s32.totalorder %s182, %s184
      %p191 = scmp.eq.s32.totalorder %s27, 1
      %p192 = por %p190, %p191
      %p193 = scmp.ne.s32.totalorder %s184, %s185
      %p194 = scmp.eq.s32.totalorder %s27, 0
      %p195 = por %p193, %p194
      %p196 = scmp.ne.s32.totalorder %s184, %s185
      %p197 = scmp.eq.s32.totalorder %s28, 1
      %p198 = por %p196, %p197
      %p200 = scmp.ne.s32.totalorder %s185, %s199
      %p201 = scmp.eq.s32.totalorder %s28, 0
      %p202 = por %p200, %p201
      %s204 = sadd.s32 %s203, 1
      %p207 = scmp.eq.s32.totalorder %s22, 1
      %p208 = scmp.ne.s32.totalorder %s203, %s205
      %p209 = scmp.eq.s32.totalorder %s22, 0
      %p210 = por %p208, %p209
      %p211 = scmp.ne.s32.totalorder %s203, %s205
      %p212 = scmp.eq.s32.totalorder %s27, 1
      %p213 = por %p211, %p212
      %p214 = scmp.ne.s32.totalorder %s205, %s206
      %p215 = scmp.eq.s32.totalorder %s27, 0
      %p216 = por %p214, %p215
      %p217 = scmp.ne.s32.totalorder %s205, %s206
      %p218 = scmp.eq.s32.totalorder %s28, 1
      %p219 = por %p217, %p218
      %p221 = scmp.ne.s32.totalorder %s206, %s220
      %p222 = scmp.eq.s32.totalorder %s28, 0
      %p223 = por %p221, %p222
      %s225 = sadd.s32 %s224, 1
      %p228 = scmp.eq.s32.totalorder %s22, 1
      %p229 = scmp.ne.s32.totalorder %s224, %s226
      %p230 = scmp.eq.s32.totalorder %s22, 0
      %p231 = por %p229, %p230
      %p232 = scmp.ne.s32.totalorder %s224, %s226
      %p233 = scmp.eq.s32.totalorder %s27, 1
      %p234 = por %p232, %p233
      %p235 = scmp.ne.s32.totalorder %s226, %s227
      %p236 = scmp.eq.s32.totalorder %s27, 0
      %p237 = por %p235, %p236
      %p238 = scmp.ne.s32.totalorder %s226, %s227
      %p239 = scmp.eq.s32.totalorder %s28, 1
      %p240 = por %p238, %p239
      %p242 = scmp.ne.s32.totalorder %s227, %s241
      %p243 = scmp.eq.s32.totalorder %s28, 0
      %p244 = por %p242, %p243
      %s246 = sadd.s32 %s245, 1
      %p249 = scmp.eq.s32.totalorder %s22, 1
      %p250 = scmp.ne.s32.totalorder %s245, %s247
      %p251 = scmp.eq.s32.totalorder %s22, 0
      %p252 = por %p250, %p251
      %p253 = scmp.ne.s32.totalorder %s245, %s247
      %p254 = scmp.eq.s32.totalorder %s27, 1
      %p255 = por %p253, %p254
      %p256 = scmp.ne.s32.totalorder %s247, %s248
      %p257 = scmp.eq.s32.totalorder %s27, 0
      %p258 = por %p256, %p257
      %p259 = scmp.ne.s32.totalorder %s247, %s248
      %p260 = scmp.eq.s32.totalorder %s28, 1
      %p261 = por %p259, %p260
      %p263 = scmp.ne.s32.totalorder %s248, %s262
      %p264 = scmp.eq.s32.totalorder %s28, 0
      %p265 = por %p263, %p264
      %s267 = sadd.s32 %s266, 1
      %p270 = scmp.eq.s32.totalorder %s22, 1
      %p271 = scmp.ne.s32.totalorder %s266, %s268
      %p272 = scmp.eq.s32.totalorder %s22, 0
      %p273 = por %p271, %p272
      %p274 = scmp.ne.s32.totalorder %s266, %s268
      %p275 = scmp.eq.s32.totalorder %s27, 1
      %p276 = por %p274, %p275
      %p277 = scmp.ne.s32.totalorder %s268, %s269
      %p278 = scmp.eq.s32.totalorder %s27, 0
      %p279 = por %p277, %p278
      %p280 = scmp.ne.s32.totalorder %s268, %s269
      %p281 = scmp.eq.s32.totalorder %s28, 1
      %p282 = por %p280, %p281
      %p284 = scmp.ne.s32.totalorder %s269, %s283
      %p285 = scmp.eq.s32.totalorder %s28, 0
      %p286 = por %p284, %p285
      %s287 = ssub.s32 %s22, %s29
      %p288 = scmp.eq.s32.totalorder %s287, 0
      %s290 = sadd.s32 %s289, 1
      %s291 = scalar_select %p288, %s289, %s290
      %p294 = pneg %p288
      %p295 = scmp.eq.s32.totalorder %s22, 1
      %p296 = por %p294, %p295
      %p297 = scmp.ne.s32.totalorder %s289, %s292
      %p298 = scmp.eq.s32.totalorder %s22, 0
      %p299 = por %p297, %p298
      %p300 = scmp.ne.s32.totalorder %s289, %s292
      %p301 = scmp.eq.s32.totalorder %s27, 1
      %p302 = por %p300, %p301
      %p303 = scmp.ne.s32.totalorder %s292, %s293
      %p304 = scmp.eq.s32.totalorder %s27, 0
      %p305 = por %p303, %p304
      %p306 = scmp.ne.s32.totalorder %s292, %s293
      %p307 = scmp.eq.s32.totalorder %s28, 1
      %p308 = por %p306, %p307
      %p310 = scmp.ne.s32.totalorder %s293, %s309
      %p311 = scmp.eq.s32.totalorder %s28, 0
      %p312 = por %p310, %p311
      %s313 = ssub.s32 %s22, %s29
      %p314 = scmp.eq.s32.totalorder %s313, 0
      %s316 = sadd.s32 %s315, 1
      %s317 = scalar_select %p314, %s315, %s316
      %p320 = pneg %p314
      %p321 = scmp.eq.s32.totalorder %s22, 1
      %p322 = por %p320, %p321
      %p323 = scmp.ne.s32.totalorder %s315, %s318
      %p324 = scmp.eq.s32.totalorder %s22, 0
      %p325 = por %p323, %p324
      %p326 = scmp.ne.s32.totalorder %s315, %s318
      %p327 = scmp.eq.s32.totalorder %s27, 1
      %p328 = por %p326, %p327
      %p329 = scmp.ne.s32.totalorder %s318, %s319
      %p330 = scmp.eq.s32.totalorder %s27, 0
      %p331 = por %p329, %p330
      %p332 = scmp.ne.s32.totalorder %s318, %s319
      %p333 = scmp.eq.s32.totalorder %s28, 1
      %p334 = por %p332, %p333
      %p336 = scmp.ne.s32.totalorder %s319, %s335
      %p337 = scmp.eq.s32.totalorder %s28, 0
      %p338 = por %p336, %p337
      %p339 = scmp.le.s32.totalorder 1, %s22
      %p340 = scmp.lt.s32.totalorder %s22, 3
      %p341 = pnand %p339, %p340
      %p342 = pneg %p341
      // Predicated region
      $region9: #{deformer_forward.1} parent=5 // pred_check
        _
      $region10: #{deformer_forward.1} parent=5 // pred_check_branch
        %344 = sbr.rel (%p341) target = $region12
      $region11: #{deformer_forward.1} parent=5 // pred_region
        %s345 = ssub.s32 %s22, 1
        // Predicated region
        $region13: #{deformer_forward.1} parent=11 // pred_check
          %p346 = pneg %p69
        $region14: #{deformer_forward.1} parent=11 // pred_check_branch
          %348 = sbr.rel (%p346) target = $region16
        $region15: #{deformer_forward.1} parent=11 // pred_region
          _
        $region16: #{deformer_forward.1} parent=11 // pred_fallthru
          _
        // Predicated region
        $region17: #{deformer_forward.1} parent=11 // pred_check
          %p349 = pneg %p90
        $region18: #{deformer_forward.1} parent=11 // pred_check_branch
          %351 = sbr.rel (%p349) target = $region20
        $region19: #{deformer_forward.1} parent=11 // pred_region
          _
        $region20: #{deformer_forward.1} parent=11 // pred_fallthru
          _
        // Predicated region
        $region21: #{deformer_forward.1} parent=11 // pred_check
          %p352 = pneg %p111
        $region22: #{deformer_forward.1} parent=11 // pred_check_branch
          %354 = sbr.rel (%p352) target = $region24
        $region23: #{deformer_forward.1} parent=11 // pred_region
          _
        $region24: #{deformer_forward.1} parent=11 // pred_fallthru
          _
        // Predicated region
        $region25: #{deformer_forward.1} parent=11 // pred_check
          %p355 = pneg %p132
        $region26: #{deformer_forward.1} parent=11 // pred_check_branch
          %357 = sbr.rel (%p355) target = $region28
        $region27: #{deformer_forward.1} parent=11 // pred_region
          _
        $region28: #{deformer_forward.1} parent=11 // pred_fallthru
          _
        // Predicated region
        $region29: #{deformer_forward.1} parent=11 // pred_check
          %p358 = pneg %p153
        $region30: #{deformer_forward.1} parent=11 // pred_check_branch
          %360 = sbr.rel (%p358) target = $region32
        $region31: #{deformer_forward.1} parent=11 // pred_region
          _
        $region32: #{deformer_forward.1} parent=11 // pred_fallthru
          _
        // Predicated region
        $region33: #{deformer_forward.1} parent=11 // pred_check
          %p361 = pneg %p174
        $region34: #{deformer_forward.1} parent=11 // pred_check_branch
          %363 = sbr.rel (%p361) target = $region36
        $region35: #{deformer_forward.1} parent=11 // pred_region
          _
        $region36: #{deformer_forward.1} parent=11 // pred_fallthru
          _
        // Predicated region
        $region37: #{deformer_forward.1} parent=11 // pred_check
          %p364 = pneg %p195
        $region38: #{deformer_forward.1} parent=11 // pred_check_branch
          %366 = sbr.rel (%p364) target = $region40
        $region39: #{deformer_forward.1} parent=11 // pred_region
          _
        $region40: #{deformer_forward.1} parent=11 // pred_fallthru
          _
        // Predicated region
        $region41: #{deformer_forward.1} parent=11 // pred_check
          %p367 = pneg %p216
        $region42: #{deformer_forward.1} parent=11 // pred_check_branch
          %369 = sbr.rel (%p367) target = $region44
        $region43: #{deformer_forward.1} parent=11 // pred_region
          _
        $region44: #{deformer_forward.1} parent=11 // pred_fallthru
          _
        // Predicated region
        $region45: #{deformer_forward.1} parent=11 // pred_check
          %p370 = pneg %p237
        $region46: #{deformer_forward.1} parent=11 // pred_check_branch
          %372 = sbr.rel (%p370) target = $region48
        $region47: #{deformer_forward.1} parent=11 // pred_region
          _
        $region48: #{deformer_forward.1} parent=11 // pred_fallthru
          _
        // Predicated region
        $region49: #{deformer_forward.1} parent=11 // pred_check
          %p373 = pneg %p258
        $region50: #{deformer_forward.1} parent=11 // pred_check_branch
          %375 = sbr.rel (%p373) target = $region52
        $region51: #{deformer_forward.1} parent=11 // pred_region
          _
        $region52: #{deformer_forward.1} parent=11 // pred_fallthru
          _
        // Predicated region
        $region53: #{deformer_forward.1} parent=11 // pred_check
          %p376 = pneg %p279
        $region54: #{deformer_forward.1} parent=11 // pred_check_branch
          %378 = sbr.rel (%p376) target = $region56
        $region55: #{deformer_forward.1} parent=11 // pred_region
          _
        $region56: #{deformer_forward.1} parent=11 // pred_fallthru
          _
      $region12: #{deformer_forward.1} parent=5 // pred_fallthru
        _
      %p379 = scmp.lt.s32.totalorder %s22, 2
      // Predicated region
      $region57: #{deformer_forward.1} parent=5 // pred_check
        %p380 = pneg %p379
      $region58: #{deformer_forward.1} parent=5 // pred_check_branch
        %382 = sbr.rel (%p380) target = $region60
      $region59: #{deformer_forward.1} parent=5 // pred_region
        // Predicated region
        $region61: #{deformer_forward.1} parent=59 // pred_check
          %p383 = pneg %p42
        $region62: #{deformer_forward.1} parent=59 // pred_check_branch
          %385 = sbr.rel (%p383) target = $region64
        $region63: #{deformer_forward.1} parent=59 // pred_region
          %s386 = sand.u32 %s32, 1
          %s387 = sand.u32 %s32, 1
          %s388 = smul.addr %s387, 128
          %s389 = scalar_lea.vmem [#allocation4], %s388
          %s390 = smul.u32 8, %s22
          %s391 = smul.addr %s390, 8
          %s392 = scalar_lea.vmem %s1, %s391
          // Predicated region
          $region65: #{deformer_forward.1} parent=63 // pred_check
            _
          $region66: #{deformer_forward.1} parent=63 // pred_check_branch
            %394 = sbr.rel (0) target = $region68
          $region67: #{deformer_forward.1} parent=63 // pred_region
            // Predicated region
            $region69: #{deformer_forward.1} parent=67 // pred_check
              _
            $region70: #{deformer_forward.1} parent=67 // pred_check_branch
              %396 = sbr.rel (0) target = $region72
            $region71: #{deformer_forward.1} parent=67 // pred_region
              loop: start=0, step=1, limit=1
              $region73: #{deformer_forward.1} parent=71 // loop_pre_header
                _
              $region74: #{deformer_forward.1} parent=71 // loop_header
                %s398 = sphi 0, %s402
                %p399 = scmp.ge.s32.totalorder %s398, 1
                %s403 = sphi %s392, %s392
                %s404 = sphi %s389, %s389
              $region75: #{deformer_forward.1} parent=71 // loop_header_branch
                %401 = sbr.rel (%p399) target = $region79
              $region76: #{deformer_forward.1} parent=71 // loop_body
                %v405 = vld [vmem:[%s403] sm:$0xff]
                %406 = vst [vmem:[%s404] sm:$0xff] %v405
                %v407 = vld [vmem:[%s403 + $0x8] sm:$0xff]
                %408 = vst [vmem:[%s404 + $0x8] sm:$0xff] %v407
                %v409 = vld [vmem:[%s403 + $0x10] sm:$0xff]
                %410 = vst [vmem:[%s404 + $0x10] sm:$0xff] %v409
                %v411 = vld [vmem:[%s403 + $0x18] sm:$0xff]
                %412 = vst [vmem:[%s404 + $0x18] sm:$0xff] %v411
                %v413 = vld [vmem:[%s403 + $0x20] sm:$0xff]
                %414 = vst [vmem:[%s404 + $0x20] sm:$0xff] %v413
                %v415 = vld [vmem:[%s403 + $0x28] sm:$0xff]
                %416 = vst [vmem:[%s404 + $0x28] sm:$0xff] %v415
                %v417 = vld [vmem:[%s403 + $0x30] sm:$0xff]
                %418 = vst [vmem:[%s404 + $0x30] sm:$0xff] %v417
                %v419 = vld [vmem:[%s403 + $0x38] sm:$0xff]
                %420 = vst [vmem:[%s404 + $0x38] sm:$0xff] %v419
                %v421 = vld [vmem:[%s403 + $0x80] sm:$0xff]
                %422 = vst [vmem:[%s404 + $0x40] sm:$0xff] %v421
                %v423 = vld [vmem:[%s403 + $0x88] sm:$0xff]
                %424 = vst [vmem:[%s404 + $0x48] sm:$0xff] %v423
                %v425 = vld [vmem:[%s403 + $0x90] sm:$0xff]
                %426 = vst [vmem:[%s404 + $0x50] sm:$0xff] %v425
                %v427 = vld [vmem:[%s403 + $0x98] sm:$0xff]
                %428 = vst [vmem:[%s404 + $0x58] sm:$0xff] %v427
                %v429 = vld [vmem:[%s403 + $0xa0] sm:$0xff]
                %430 = vst [vmem:[%s404 + $0x60] sm:$0xff] %v429
                %v431 = vld [vmem:[%s403 + $0xa8] sm:$0xff]
                %432 = vst [vmem:[%s404 + $0x68] sm:$0xff] %v431
                %v433 = vld [vmem:[%s403 + $0xb0] sm:$0xff]
                %434 = vst [vmem:[%s404 + $0x70] sm:$0xff] %v433
                %v435 = vld [vmem:[%s403 + $0xb8] sm:$0xff]
                %436 = vst [vmem:[%s404 + $0x78] sm:$0xff] %v435
              $region77: #{deformer_forward.1} parent=71 // loop_footer
                %s402 = sadd.s32 1, %s398
              $region78: #{deformer_forward.1} parent=71 // loop_footer_branch
                %397 = sbr.rel target = $region74
              $region79: #{deformer_forward.1} parent=71 // loop_exit
                _
            $region72: #{deformer_forward.1} parent=67 // pred_fallthru
              _
            // Predicated region
            $region80: #{deformer_forward.1} parent=67 // pred_check
              _
            $region81: #{deformer_forward.1} parent=67 // pred_check_branch
              %438 = sbr.rel target = $region83
            $region82: #{deformer_forward.1} parent=67 // pred_region
              _
            $region83: #{deformer_forward.1} parent=67 // pred_fallthru
              _
          $region68: #{deformer_forward.1} parent=63 // pred_fallthru
            _
          %439 = vnop
        $region64: #{deformer_forward.1} parent=59 // pred_fallthru
          _
      $region60: #{deformer_forward.1} parent=5 // pred_fallthru
        _
      %p440 = scmp.le.s32.totalorder 1, %s22
      %p441 = scmp.lt.s32.totalorder %s22, 3
      %p442 = pnand %p440, %p441
      %p443 = pneg %p442
      // Predicated region
      $region84: #{deformer_forward.1} parent=5 // pred_check
        _
      $region85: #{deformer_forward.1} parent=5 // pred_check_branch
        %445 = sbr.rel (%p442) target = $region87
      $region86: #{deformer_forward.1} parent=5 // pred_region
        %s446 = ssub.s32 %s22, 1
        %s447 = sand.u32 %s35, 1
        %s448 = sand.u32 %s35, 1
        %s449 = smul.addr %s448, 128
        %s450 = scalar_lea.vmem [#allocation4], %s449
        // Predicated region
        $region88: #{deformer_forward.1} parent=86 // pred_check
          %p451 = pneg %p48
        $region89: #{deformer_forward.1} parent=86 // pred_check_branch
          %453 = sbr.rel (%p451) target = $region91
        $region90: #{deformer_forward.1} parent=86 // pred_region
          _
        $region91: #{deformer_forward.1} parent=86 // pred_fallthru
          _
        %s454 = sand.u32 %s35, 1
        %s455 = sand.u32 %s35, 1
        %s456 = smul.addr %s455, 128
        %s457 = scalar_lea.vmem [#allocation4], %s456
        %p458 = pneg %p48
        %p459 = pneg %p45
        %p460 = pneg %p69
        %p461 = pneg %p66
        %p462 = pneg %p90
        %p463 = pneg %p87
        %p464 = pneg %p111
        %p465 = pneg %p108
        %p466 = pneg %p132
        %p467 = pneg %p129
        %p468 = pneg %p153
        %p469 = pneg %p150
        %p470 = pneg %p174
        %p471 = pneg %p171
        %p472 = pneg %p195
        %p473 = pneg %p192
        %p474 = pneg %p216
        %p475 = pneg %p213
        %p476 = pneg %p237
        %p477 = pneg %p234
        %p478 = pneg %p258
        %p479 = pneg %p255
        %p480 = pneg %p279
        %p481 = pneg %p276
        %p482 = pneg %p305
        %p483 = pneg %p302
        %s484 = sand.u32 %s292, 1
        %s485 = sand.u32 %s292, 1
        %s486 = smul.addr %s485, 128
        %s487 = scalar_lea.vmem [#allocation5], %s486
        %p488 = pneg %p331
        %p489 = pneg %p328
        %p490 = scmp.lt.s32.totalorder %s27, 1
        %s491 = scalar_select %p490, %s27, 1
        %s492 = smul.addr %s491, 8
        %s493 = scalar_lea.vmem %s14, %s492
        %s494 = smul.u32 8, %s27
        %s495 = smul.u32 8, %s27
        %p496 = scmp.lt.s32.totalorder %s27, 1
        %s497 = scalar_select %p496, %s27, 1
        %s498 = smul.addr %s497, 8
        %s499 = scalar_lea.vmem %s14, %s498
        %v501 = vld [vmem:[%s450] sm:$0xff]
        %v502 = vld [vmem:[%s450 + $0x8] sm:$0xff]
        %v503 = vld [vmem:[%s450 + $0x10] sm:$0xff]
        %v504 = vld [vmem:[%s450 + $0x18] sm:$0xff]
        %v505 = vld [vmem:[%s450 + $0x20] sm:$0xff]
        %v506 = vld [vmem:[%s450 + $0x28] sm:$0xff]
        %v507 = vld [vmem:[%s450 + $0x30] sm:$0xff]
        %v508 = vld [vmem:[%s450 + $0x38] sm:$0xff]
        %v509 = vld [vmem:[%s450 + $0x40] sm:$0x3]
        %v510 = vld [vmem:[%s450 + $0x48] sm:$0x3]
        %v511 = vld [vmem:[%s450 + $0x50] sm:$0x3]
        %v512 = vld [vmem:[%s450 + $0x58] sm:$0x3]
        %v513 = vld [vmem:[%s450 + $0x60] sm:$0x3]
        %v514 = vld [vmem:[%s450 + $0x68] sm:$0x3]
        %v515 = vld [vmem:[%s450 + $0x70] sm:$0x3]
        %v516 = vld [vmem:[%s450 + $0x78] sm:$0x3]
        %v517 = vld [vmem:[%s2] sm:$0xf]
        %v518 = vld [vmem:[%s2 + $0x4] sm:$0xf]
        %v519 = vld [vmem:[%s2 + $0x8] sm:$0xf]
        %v520 = vld [vmem:[%s2 + $0xc] sm:$0xf]
        %v521 = vld [vmem:[%s2 + $0x10] sm:$0xf]
        %v522 = vld [vmem:[%s2 + $0x14] sm:$0xf]
        %v523 = vld [vmem:[%s2 + $0x18] sm:$0xf]
        %v524 = vld [vmem:[%s2 + $0x1c] sm:$0xf]
        %v525 = vpack.c.bf16 %v501, %v501
        %v526 = vpack.c.bf16 %v502, %v502
        %v527 = vpack.c.bf16 %v503, %v503
        %v528 = vpack.c.bf16 %v504, %v504
        %v529 = vpack.c.bf16 %v505, %v505
        %v530 = vpack.c.bf16 %v506, %v506
        %v531 = vpack.c.bf16 %v507, %v507
        %v532 = vpack.c.bf16 %v508, %v508
        %v533 = vld [vmem:[%s3] sm:$0xff]
        %v534 = vld [vmem:[%s3 + $0x8] sm:$0xff]
        %v535 = vld [vmem:[%s3 + $0x10] sm:$0xff]
        %v536 = vld [vmem:[%s3 + $0x18] sm:$0xff]
        %v537 = vld [vmem:[%s3 + $0x20] sm:$0xff]
        %v538 = vld [vmem:[%s3 + $0x28] sm:$0xff]
        %v539 = vld [vmem:[%s3 + $0x30] sm:$0xff]
        %v540 = vld [vmem:[%s3 + $0x38] sm:$0xff]
        %542 = vset.pattern.permute.xlu0 0
        %543 = vperm.xlu0 %542, %v533
        %v544 = vpop.permute.xlu0 %543
        %547 = vset.pattern.permute.xlu0 0
        %548 = vperm.xlu0 %547, %v534
        %v549 = vpop.permute.xlu0 %548
        %552 = vset.pattern.permute.xlu0 0
        %553 = vperm.xlu0 %552, %v535
        %v554 = vpop.permute.xlu0 %553
        %557 = vset.pattern.permute.xlu0 0
        %558 = vperm.xlu0 %557, %v536
        %v559 = vpop.permute.xlu0 %558
        %562 = vset.pattern.permute.xlu0 0
        %563 = vperm.xlu0 %562, %v537
        %v564 = vpop.permute.xlu0 %563
        %567 = vset.pattern.permute.xlu0 0
        %568 = vperm.xlu0 %567, %v538
        %v569 = vpop.permute.xlu0 %568
        %572 = vset.pattern.permute.xlu0 0
        %573 = vperm.xlu0 %572, %v539
        %v574 = vpop.permute.xlu0 %573
        %577 = vset.pattern.permute.xlu0 0
        %578 = vperm.xlu0 %577, %v540
        %v579 = vpop.permute.xlu0 %578
        %v589 = vunpack.c.l.b16 %v517
        %v590 = vunpack.c.l.b16 %v518
        %v591 = vunpack.c.l.b16 %v519
        %v592 = vunpack.c.l.b16 %v520
        %v593 = vunpack.c.l.b16 %v521
        %v594 = vunpack.c.l.b16 %v522
        %v595 = vunpack.c.l.b16 %v523
        %v596 = vunpack.c.l.b16 %v524
        %v597 = vpack.c.b16 %v590, %v589
        %v598 = vpack.c.b16 %v592, %v591
        %v599 = vpack.c.b16 %v594, %v593
        %v600 = vpack.c.b16 %v596, %v595
        %vm601 = vcmask 23552
        %v603 = vsel %vm601, %v597, 0
        %v606 = vsel %vm601, %v598, 0
        %v609 = vsel %vm601, %v599, 0
        %v612 = vsel %vm601, %v600, 0
        %vm614 = vcmask 1040384
        %vm615 = vcmask 1041408
        %v616 = vsel %vm614, 4294967295, 65535
        %v617 = vsel %vm615, %v616, 0
        %v619 = vand.u32 %v525, %v617
        %v622 = vand.u32 %v526, %v617
        %v625 = vand.u32 %v527, %v617
        %v628 = vand.u32 %v528, %v617
        %v631 = vand.u32 %v529, %v617
        %v634 = vand.u32 %v530, %v617
        %v637 = vand.u32 %v531, %v617
        %v640 = vand.u32 %v532, %v617
        %642 = vmatprep.subr.bf16.mxu0 %v622
        %643 = vmatpush1.bf16.msra.mxu0 %v619
        %644 = vmatprep.subr.bf16.mxu0 0
        %645 = vmatpush1.bf16.msra.mxu0 0
        %646 = vmatprep.subr.bf16.mxu0 0
        %647 = vmatpush1.bf16.msra.mxu0 0
        %648 = vmatprep.subr.bf16.mxu0 0
        %649 = vmatpush1.bf16.msra.mxu0 0
        %650 = vmatprep.subr.bf16.mxu0 0
        %651 = vmatpush1.bf16.msra.mxu0 0
        %652 = vmatprep.subr.bf16.mxu0 0
        %653 = vmatpush1.bf16.msra.mxu0 0
        %654 = vmatprep.subr.bf16.mxu0 0
        %655 = vmatpush1.bf16.msra.mxu0 0
        %656 = vmatprep.subr.bf16.mxu0 0
        %657 = vmatpush1.bf16.msra.mxu0 0
        %658 = vmatprep.subr.bf16.mxu0 0
        %659 = vmatpush1.bf16.msra.mxu0 0
        %660 = vmatprep.subr.bf16.mxu0 0
        %661 = vmatpush1.bf16.msra.mxu0 0
        %662 = vmatprep.subr.bf16.mxu0 0
        %663 = vmatpush1.bf16.msra.mxu0 0
        %664 = vmatprep.subr.bf16.mxu0 0
        %665 = vmatpush1.bf16.msra.mxu0 0
        %666 = vmatprep.subr.bf16.mxu0 0
        %667 = vmatpush1.bf16.msra.mxu0 0
        %668 = vmatprep.subr.bf16.mxu0 0
        %669 = vmatpush1.bf16.msra.mxu0 0
        %670 = vmatprep.subr.bf16.mxu0 0
        %671 = vmatpush1.bf16.msra.mxu0 0
        %672 = vmatprep.subr.bf16.mxu0 0
        %673 = vmatpush1.bf16.msra.mxu0 0
        %674 = vmatprep.mubr.bf16.mxu0 0
        %675 = vmatmul.mubr.bf16.gmra.mrb[0].mxu0 %v603
        %v676 = vpop.f32.mrb[0].mxu0
        %v677 = vadd.f32 %v544, %v676
        %v678 = vpop.f32.mrb[0].mxu0
        %v679 = vadd.f32 %v544, %v678
        %v680 = vpop.f32.mrb[0].mxu0
        %v681 = vadd.f32 %v549, %v680
        %v682 = vpop.f32.mrb[0].mxu0
        %v683 = vadd.f32 %v549, %v682
        %684 = vmatprep.mubr.bf16.mxu0 0
        %685 = vmatmul.mubr.bf16.gmra.mrb[0].mxu0 %v606
        %v686 = vpop.f32.mrb[0].mxu0
        %v687 = vadd.f32 %v554, %v686
        %v688 = vpop.f32.mrb[0].mxu0
        %v689 = vadd.f32 %v554, %v688
        %v690 = vpop.f32.mrb[0].mxu0
        %v691 = vadd.f32 %v559, %v690
        %v692 = vpop.f32.mrb[0].mxu0
        %v693 = vadd.f32 %v559, %v692
        %694 = vmatprep.mubr.bf16.mxu0 0
        %695 = vmatmul.mubr.bf16.gmra.mrb[0].mxu0 %v609
        %v696 = vpop.f32.mrb[0].mxu0
        %v697 = vadd.f32 %v564, %v696
        %v698 = vpop.f32.mrb[0].mxu0
        %v699 = vadd.f32 %v564, %v698
        %v700 = vpop.f32.mrb[0].mxu0
        %v701 = vadd.f32 %v569, %v700
        %v702 = vpop.f32.mrb[0].mxu0
        %v703 = vadd.f32 %v569, %v702
        %704 = vmatprep.mubr.bf16.mxu0 0
        %705 = vmatmul.mubr.bf16.gmra.mrb[0].mxu0 %v612
        %v706 = vpop.f32.mrb[0].mxu0
        %v707 = vadd.f32 %v574, %v706
        %v708 = vpop.f32.mrb[0].mxu0
        %v709 = vadd.f32 %v574, %v708
        %v710 = vpop.f32.mrb[0].mxu0
        %v711 = vadd.f32 %v579, %v710
        %v712 = vpop.f32.mrb[0].mxu0
        %v713 = vadd.f32 %v579, %v712
        %714 = vdwg.mxu0
        %715 = vmatprep.subr.bf16.mxu0 %v628
        %716 = vmatpush1.bf16.msra.mxu0 %v625
        %717 = vmatprep.subr.bf16.mxu0 0
        %718 = vmatpush1.bf16.msra.mxu0 0
        %719 = vmatprep.subr.bf16.mxu0 0
        %720 = vmatpush1.bf16.msra.mxu0 0
        %721 = vmatprep.subr.bf16.mxu0 0
        %722 = vmatpush1.bf16.msra.mxu0 0
        %723 = vmatprep.subr.bf16.mxu0 0
        %724 = vmatpush1.bf16.msra.mxu0 0
        %725 = vmatprep.subr.bf16.mxu0 0
        %726 = vmatpush1.bf16.msra.mxu0 0
        %727 = vmatprep.subr.bf16.mxu0 0
        %728 = vmatpush1.bf16.msra.mxu0 0
        %729 = vmatprep.subr.bf16.mxu0 0
        %730 = vmatpush1.bf16.msra.mxu0 0
        %731 = vmatprep.subr.bf16.mxu0 0
        %732 = vmatpush1.bf16.msra.mxu0 0
        %733 = vmatprep.subr.bf16.mxu0 0
        %734 = vmatpush1.bf16.msra.mxu0 0
        %735 = vmatprep.subr.bf16.mxu0 0
        %736 = vmatpush1.bf16.msra.mxu0 0
        %737 = vmatprep.subr.bf16.mxu0 0
        %738 = vmatpush1.bf16.msra.mxu0 0
        %739 = vmatprep.subr.bf16.mxu0 0
        %740 = vmatpush1.bf16.msra.mxu0 0
        %741 = vmatprep.subr.bf16.mxu0 0
        %742 = vmatpush1.bf16.msra.mxu0 0
        %743 = vmatprep.subr.bf16.mxu0 0
        %744 = vmatpush1.bf16.msra.mxu0 0
        %745 = vmatprep.subr.bf16.mxu0 0
        %746 = vmatpush1.bf16.msra.mxu0 0
        %747 = vmatprep.mubr.bf16.mxu0 0
        %748 = vmatmul.mubr.bf16.gmra.mrb[0].mxu0 %v603
        %v749 = vpop.f32.mrb[0].mxu0
        %v750 = vadd.f32 %v544, %v749
        %v751 = vpop.f32.mrb[0].mxu0
        %v752 = vadd.f32 %v544, %v751
        %v753 = vpop.f32.mrb[0].mxu0
        %v754 = vadd.f32 %v549, %v753
        %v755 = vpop.f32.mrb[0].mxu0
        %v756 = vadd.f32 %v549, %v755
        %757 = vmatprep.mubr.bf16.mxu0 0
        %758 = vmatmul.mubr.bf16.gmra.mrb[0].mxu0 %v606
        %v759 = vpop.f32.mrb[0].mxu0
        %v760 = vadd.f32 %v554, %v759
        %v761 = vpop.f32.mrb[0].mxu0
        %v762 = vadd.f32 %v554, %v761
        %v763 = vpop.f32.mrb[0].mxu0
        %v764 = vadd.f32 %v559, %v763
        %v765 = vpop.f32.mrb[0].mxu0
        %v766 = vadd.f32 %v559, %v765
        %767 = vmatprep.mubr.bf16.mxu0 0
        %768 = vmatmul.mubr.bf16.gmra.mrb[0].mxu0 %v609
        %v769 = vpop.f32.mrb[0].mxu0
        %v770 = vadd.f32 %v564, %v769
        %v771 = vpop.f32.mrb[0].mxu0
        %v772 = vadd.f32 %v564, %v771
        %v773 = vpop.f32.mrb[0].mxu0
        %v774 = vadd.f32 %v569, %v773
        %v775 = vpop.f32.mrb[0].mxu0
        %v776 = vadd.f32 %v569, %v775
        %777 = vmatprep.mubr.bf16.mxu0 0
        %778 = vmatmul.mubr.bf16.gmra.mrb[0].mxu0 %v612
        %v779 = vpop.f32.mrb[0].mxu0
        %v780 = vadd.f32 %v574, %v779
        %v781 = vpop.f32.mrb[0].mxu0
        %v782 = vadd.f32 %v574, %v781
        %v783 = vpop.f32.mrb[0].mxu0
        %v784 = vadd.f32 %v579, %v783
        %v785 = vpop.f32.mrb[0].mxu0
        %v786 = vadd.f32 %v579, %v785
        %787 = vdwg.mxu0
        %788 = vmatprep.subr.bf16.mxu0 %v634
        %789 = vmatpush1.bf16.msra.mxu0 %v631
        %790 = vmatprep.subr.bf16.mxu0 0
        %791 = vmatpush1.bf16.msra.mxu0 0
        %792 = vmatprep.subr.bf16.mxu0 0
        %793 = vmatpush1.bf16.msra.mxu0 0
        %794 = vmatprep.subr.bf16.mxu0 0
        %795 = vmatpush1.bf16.msra.mxu0 0
        %796 = vmatprep.subr.bf16.mxu0 0
        %797 = vmatpush1.bf16.msra.mxu0 0
        %798 = vmatprep.subr.bf16.mxu0 0
        %799 = vmatpush1.bf16.msra.mxu0 0
        %800 = vmatprep.subr.bf16.mxu0 0
        %801 = vmatpush1.bf16.msra.mxu0 0
        %802 = vmatprep.subr.bf16.mxu0 0
        %803 = vmatpush1.bf16.msra.mxu0 0
        %804 = vmatprep.subr.bf16.mxu0 0
        %805 = vmatpush1.bf16.msra.mxu0 0
        %806 = vmatprep.subr.bf16.mxu0 0
        %807 = vmatpush1.bf16.msra.mxu0 0
        %808 = vmatprep.subr.bf16.mxu0 0
        %809 = vmatpush1.bf16.msra.mxu0 0
        %810 = vmatprep.subr.bf16.mxu0 0
        %811 = vmatpush1.bf16.msra.mxu0 0
        %812 = vmatprep.subr.bf16.mxu0 0
        %813 = vmatpush1.bf16.msra.mxu0 0
        %814 = vmatprep.subr.bf16.mxu0 0
        %815 = vmatpush1.bf16.msra.mxu0 0
        %816 = vmatprep.subr.bf16.mxu0 0
        %817 = vmatpush1.bf16.msra.mxu0 0
        %818 = vmatprep.subr.bf16.mxu0 0
        %819 = vmatpush1.bf16.msra.mxu0 0
        %820 = vmatprep.mubr.bf16.mxu0 0
        %821 = vmatmul.mubr.bf16.gmra.mrb[0].mxu0 %v603
        %v822 = vpop.f32.mrb[0].mxu0
        %v823 = vadd.f32 %v544, %v822
        %v824 = vpop.f32.mrb[0].mxu0
        %v825 = vadd.f32 %v544, %v824
        %v826 = vpop.f32.mrb[0].mxu0
        %v827 = vadd.f32 %v549, %v826
        %v828 = vpop.f32.mrb[0].mxu0
        %v829 = vadd.f32 %v549, %v828
        %830 = vmatprep.mubr.bf16.mxu0 0
        %831 = vmatmul.mubr.bf16.gmra.mrb[0].mxu0 %v606
        %v832 = vpop.f32.mrb[0].mxu0
        %v833 = vadd.f32 %v554, %v832
        %v834 = vpop.f32.mrb[0].mxu0
        %v835 = vadd.f32 %v554, %v834
        %v836 = vpop.f32.mrb[0].mxu0
        %v837 = vadd.f32 %v559, %v836
        %v838 = vpop.f32.mrb[0].mxu0
        %v839 = vadd.f32 %v559, %v838
        %840 = vmatprep.mubr.bf16.mxu0 0
        %841 = vmatmul.mubr.bf16.gmra.mrb[0].mxu0 %v609
        %v842 = vpop.f32.mrb[0].mxu0
        %v843 = vadd.f32 %v564, %v842
        %v844 = vpop.f32.mrb[0].mxu0
        %v845 = vadd.f32 %v564, %v844
        %v846 = vpop.f32.mrb[0].mxu0
        %v847 = vadd.f32 %v569, %v846
        %v848 = vpop.f32.mrb[0].mxu0
        %v849 = vadd.f32 %v569, %v848
        %850 = vmatprep.mubr.bf16.mxu0 0
        %851 = vmatmul.mubr.bf16.gmra.mrb[0].mxu0 %v612
        %v852 = vpop.f32.mrb[0].mxu0
        %v853 = vadd.f32 %v574, %v852
        %v854 = vpop.f32.mrb[0].mxu0
        %v855 = vadd.f32 %v574, %v854
        %v856 = vpop.f32.mrb[0].mxu0
        %v857 = vadd.f32 %v579, %v856
        %v858 = vpop.f32.mrb[0].mxu0
        %v859 = vadd.f32 %v579, %v858
        %860 = vdwg.mxu0
        %861 = vmatprep.subr.bf16.mxu0 %v640
        %862 = vmatpush1.bf16.msra.mxu0 %v637
        %863 = vmatprep.subr.bf16.mxu0 0
        %864 = vmatpush1.bf16.msra.mxu0 0
        %865 = vmatprep.subr.bf16.mxu0 0
        %866 = vmatpush1.bf16.msra.mxu0 0
        %867 = vmatprep.subr.bf16.mxu0 0
        %868 = vmatpush1.bf16.msra.mxu0 0
        %869 = vmatprep.subr.bf16.mxu0 0
        %870 = vmatpush1.bf16.msra.mxu0 0
        %871 = vmatprep.subr.bf16.mxu0 0
        %872 = vmatpush1.bf16.msra.mxu0 0
        %873 = vmatprep.subr.bf16.mxu0 0
        %874 = vmatpush1.bf16.msra.mxu0 0
        %875 = vmatprep.subr.bf16.mxu0 0
        %876 = vmatpush1.bf16.msra.mxu0 0
        %877 = vmatprep.subr.bf16.mxu0 0
        %878 = vmatpush1.bf16.msra.mxu0 0
        %879 = vmatprep.subr.bf16.mxu0 0
        %880 = vmatpush1.bf16.msra.mxu0 0
        %881 = vmatprep.subr.bf16.mxu0 0
        %882 = vmatpush1.bf16.msra.mxu0 0
        %883 = vmatprep.subr.bf16.mxu0 0
        %884 = vmatpush1.bf16.msra.mxu0 0
        %885 = vmatprep.subr.bf16.mxu0 0
        %886 = vmatpush1.bf16.msra.mxu0 0
        %887 = vmatprep.subr.bf16.mxu0 0
        %888 = vmatpush1.bf16.msra.mxu0 0
        %889 = vmatprep.subr.bf16.mxu0 0
        %890 = vmatpush1.bf16.msra.mxu0 0
        %891 = vmatprep.subr.bf16.mxu0 0
        %892 = vmatpush1.bf16.msra.mxu0 0
        %893 = vmatprep.mubr.bf16.mxu0 0
        %894 = vmatmul.mubr.bf16.gmra.mrb[0].mxu0 %v603
        %v895 = vpop.f32.mrb[0].mxu0
        %v896 = vadd.f32 %v544, %v895
        %v897 = vpop.f32.mrb[0].mxu0
        %v898 = vadd.f32 %v544, %v897
        %v899 = vpop.f32.mrb[0].mxu0
        %v900 = vadd.f32 %v549, %v899
        %v901 = vpop.f32.mrb[0].mxu0
        %v902 = vadd.f32 %v549, %v901
        %903 = vmatprep.mubr.bf16.mxu0 0
        %904 = vmatmul.mubr.bf16.gmra.mrb[0].mxu0 %v606
        %v905 = vpop.f32.mrb[0].mxu0
        %v906 = vadd.f32 %v554, %v905
        %v907 = vpop.f32.mrb[0].mxu0
        %v908 = vadd.f32 %v554, %v907
        %v909 = vpop.f32.mrb[0].mxu0
        %v910 = vadd.f32 %v559, %v909
        %v911 = vpop.f32.mrb[0].mxu0
        %v912 = vadd.f32 %v559, %v911
        %913 = vmatprep.mubr.bf16.mxu0 0
        %914 = vmatmul.mubr.bf16.gmra.mrb[0].mxu0 %v609
        %v915 = vpop.f32.mrb[0].mxu0
        %v916 = vadd.f32 %v564, %v915
        %v917 = vpop.f32.mrb[0].mxu0
        %v918 = vadd.f32 %v564, %v917
        %v919 = vpop.f32.mrb[0].mxu0
        %v920 = vadd.f32 %v569, %v919
        %v921 = vpop.f32.mrb[0].mxu0
        %v922 = vadd.f32 %v569, %v921
        %923 = vmatprep.mubr.bf16.mxu0 0
        %924 = vmatmul.mubr.bf16.gmra.mrb[0].mxu0 %v612
        %v925 = vpop.f32.mrb[0].mxu0
        %v926 = vadd.f32 %v574, %v925
        %v927 = vpop.f32.mrb[0].mxu0
        %v928 = vadd.f32 %v574, %v927
        %v929 = vpop.f32.mrb[0].mxu0
        %v930 = vadd.f32 %v579, %v929
        %v931 = vpop.f32.mrb[0].mxu0
        %v932 = vadd.f32 %v579, %v931
        %933 = vdwg.mxu0
        %v934 = vmax.f32 %v677, 0.0
        %v935 = vmax.f32 %v679, 0.0
        %v936 = vmax.f32 %v750, 0.0
        %v937 = vmax.f32 %v752, 0.0
        %v938 = vmax.f32 %v823, 0.0
        %v939 = vmax.f32 %v825, 0.0
        %v940 = vmax.f32 %v896, 0.0
        %v941 = vmax.f32 %v898, 0.0
        %v942 = vmax.f32 %v681, 0.0
        %v943 = vmax.f32 %v683, 0.0
        %v944 = vmax.f32 %v754, 0.0
        %v945 = vmax.f32 %v756, 0.0
        %v946 = vmax.f32 %v827, 0.0
        %v947 = vmax.f32 %v829, 0.0
        %v948 = vmax.f32 %v900, 0.0
        %v949 = vmax.f32 %v902, 0.0
        %v950 = vmax.f32 %v687, 0.0
        %v951 = vmax.f32 %v689, 0.0
        %v952 = vmax.f32 %v760, 0.0
        %v953 = vmax.f32 %v762, 0.0
        %v954 = vmax.f32 %v833, 0.0
        %v955 = vmax.f32 %v835, 0.0
        %v956 = vmax.f32 %v906, 0.0
        %v957 = vmax.f32 %v908, 0.0
        %v958 = vmax.f32 %v691, 0.0
        %v959 = vmax.f32 %v693, 0.0
        %v960 = vmax.f32 %v764, 0.0
        %v961 = vmax.f32 %v766, 0.0
        %v962 = vmax.f32 %v837, 0.0
        %v963 = vmax.f32 %v839, 0.0
        %v964 = vmax.f32 %v910, 0.0
        %v965 = vmax.f32 %v912, 0.0
        %v966 = vmax.f32 %v697, 0.0
        %v967 = vmax.f32 %v699, 0.0
        %v968 = vmax.f32 %v770, 0.0
        %v969 = vmax.f32 %v772, 0.0
        %v970 = vmax.f32 %v843, 0.0
        %v971 = vmax.f32 %v845, 0.0
        %v972 = vmax.f32 %v916, 0.0
        %v973 = vmax.f32 %v918, 0.0
        %v974 = vmax.f32 %v701, 0.0
        %v975 = vmax.f32 %v703, 0.0
        %v976 = vmax.f32 %v774, 0.0
        %v977 = vmax.f32 %v776, 0.0
        %v978 = vmax.f32 %v847, 0.0
        %v979 = vmax.f32 %v849, 0.0
        %v980 = vmax.f32 %v920, 0.0
        %v981 = vmax.f32 %v922, 0.0
        %v982 = vmax.f32 %v707, 0.0
        %v983 = vmax.f32 %v709, 0.0
        %v984 = vmax.f32 %v780, 0.0
        %v985 = vmax.f32 %v782, 0.0
        %v986 = vmax.f32 %v853, 0.0
        %v987 = vmax.f32 %v855, 0.0
        %v988 = vmax.f32 %v926, 0.0
        %v989 = vmax.f32 %v928, 0.0
        %v990 = vmax.f32 %v711, 0.0
        %v991 = vmax.f32 %v713, 0.0
        %v992 = vmax.f32 %v784, 0.0
        %v993 = vmax.f32 %v786, 0.0
        %v994 = vmax.f32 %v857, 0.0
        %v995 = vmax.f32 %v859, 0.0
        %v996 = vmax.f32 %v930, 0.0
        %v997 = vmax.f32 %v932, 0.0
        %v998 = vld [vmem:[%s4] sm:$0xf]
        %v999 = vld [vmem:[%s4 + $0x4] sm:$0xf]
        %v1000 = vld [vmem:[%s4 + $0x8] sm:$0xf]
        %v1001 = vld [vmem:[%s4 + $0xc] sm:$0xf]
        %v1002 = vld [vmem:[%s4 + $0x10] sm:$0xf]
        %v1003 = vld [vmem:[%s4 + $0x14] sm:$0xf]
        %v1004 = vld [vmem:[%s4 + $0x18] sm:$0xf]
        %v1005 = vld [vmem:[%s4 + $0x1c] sm:$0xf]
        %v1006 = vpack.c.bf16 %v942, %v934
        %v1007 = vpack.c.bf16 %v943, %v935
        %v1008 = vpack.c.bf16 %v944, %v936
        %v1009 = vpack.c.bf16 %v945, %v937
        %v1010 = vpack.c.bf16 %v946, %v938
        %v1011 = vpack.c.bf16 %v947, %v939
        %v1012 = vpack.c.bf16 %v948, %v940
        %v1013 = vpack.c.bf16 %v949, %v941
        %v1014 = vpack.c.bf16 %v958, %v950
        %v1015 = vpack.c.bf16 %v959, %v951
        %v1016 = vpack.c.bf16 %v960, %v952
        %v1017 = vpack.c.bf16 %v961, %v953
        %v1018 = vpack.c.bf16 %v962, %v954
        %v1019 = vpack.c.bf16 %v963, %v955
        %v1020 = vpack.c.bf16 %v964, %v956
        %v1021 = vpack.c.bf16 %v965, %v957
        %v1022 = vpack.c.bf16 %v974, %v966
        %v1023 = vpack.c.bf16 %v975, %v967
        %v1024 = vpack.c.bf16 %v976, %v968
        %v1025 = vpack.c.bf16 %v977, %v969
        %v1026 = vpack.c.bf16 %v978, %v970
        %v1027 = vpack.c.bf16 %v979, %v971
        %v1028 = vpack.c.bf16 %v980, %v972
        %v1029 = vpack.c.bf16 %v981, %v973
        %v1030 = vpack.c.bf16 %v990, %v982
        %v1031 = vpack.c.bf16 %v991, %v983
        %v1032 = vpack.c.bf16 %v992, %v984
        %v1033 = vpack.c.bf16 %v993, %v985
        %v1034 = vpack.c.bf16 %v994, %v986
        %v1035 = vpack.c.bf16 %v995, %v987
        %v1036 = vpack.c.bf16 %v996, %v988
        %v1037 = vpack.c.bf16 %v997, %v989
        %v1038 = vld [vmem:[%s5] sm:$0xff]
        %v1039 = vld [vmem:[%s5 + $0x8] sm:$0xff]
        %v1040 = vld [vmem:[%s5 + $0x10] sm:$0xff]
        %v1041 = vld [vmem:[%s5 + $0x18] sm:$0xff]
        %v1042 = vld [vmem:[%s5 + $0x20] sm:$0xff]
        %v1043 = vld [vmem:[%s5 + $0x28] sm:$0xff]
        %v1044 = vld [vmem:[%s5 + $0x30] sm:$0xff]
        %v1045 = vld [vmem:[%s5 + $0x38] sm:$0xff]
        %1047 = vset.pattern.permute.xlu0 0
        %1048 = vperm.xlu0 %1047, %v1038
        %v1049 = vpop.permute.xlu0 %1048
        %1052 = vset.pattern.permute.xlu0 0
        %1053 = vperm.xlu0 %1052, %v1039
        %v1054 = vpop.permute.xlu0 %1053
        %1057 = vset.pattern.permute.xlu0 0
        %1058 = vperm.xlu0 %1057, %v1040
        %v1059 = vpop.permute.xlu0 %1058
        %1062 = vset.pattern.permute.xlu0 0
        %1063 = vperm.xlu0 %1062, %v1041
        %v1064 = vpop.permute.xlu0 %1063
        %1067 = vset.pattern.permute.xlu0 0
        %1068 = vperm.xlu0 %1067, %v1042
        %v1069 = vpop.permute.xlu0 %1068
        %1072 = vset.pattern.permute.xlu0 0
        %1073 = vperm.xlu0 %1072, %v1043
        %v1074 = vpop.permute.xlu0 %1073
        %1077 = vset.pattern.permute.xlu0 0
        %1078 = vperm.xlu0 %1077, %v1044
        %v1079 = vpop.permute.xlu0 %1078
        %1082 = vset.pattern.permute.xlu0 0
        %1083 = vperm.xlu0 %1082, %v1045
        %v1084 = vpop.permute.xlu0 %1083
        %v1094 = vunpack.c.l.b16 %v998
        %v1095 = vunpack.c.l.b16 %v999
        %v1096 = vunpack.c.l.b16 %v1000
        %v1097 = vunpack.c.l.b16 %v1001
        %v1098 = vunpack.c.l.b16 %v1002
        %v1099 = vunpack.c.l.b16 %v1003
        %v1100 = vunpack.c.l.b16 %v1004
        %v1101 = vunpack.c.l.b16 %v1005
        %v1102 = vpack.c.b16 %v1095, %v1094
        %v1103 = vpack.c.b16 %v1097, %v1096
        %v1104 = vpack.c.b16 %v1099, %v1098
        %v1105 = vpack.c.b16 %v1101, %v1100
        %vm1106 = vcmask 523264
        %v1108 = vsel %vm1106, %v1102, 0
        %v1111 = vsel %vm1106, %v1103, 0
        %v1114 = vsel %vm1106, %v1104, 0
        %v1117 = vsel %vm1106, %v1105, 0
        %1119 = vmatprep.subr.bf16.mxu0 %v1007
        %1120 = vmatpush1.bf16.msra.mxu0 %v1006
        %1121 = vmatprep.subr.bf16.mxu0 %v1015
        %1122 = vmatpush1.bf16.msra.mxu0 %v1014
        %1123 = vmatprep.subr.bf16.mxu0 %v1023
        %1124 = vmatpush1.bf16.msra.mxu0 %v1022
        %1125 = vmatprep.subr.bf16.mxu0 %v1031
        %1126 = vmatpush1.bf16.msra.mxu0 %v1030
        %1127 = vmatprep.subr.bf16.mxu0 0
        %1128 = vmatpush1.bf16.msra.mxu0 0
        %1129 = vmatprep.subr.bf16.mxu0 0
        %1130 = vmatpush1.bf16.msra.mxu0 0
        %1131 = vmatprep.subr.bf16.mxu0 0
        %1132 = vmatpush1.bf16.msra.mxu0 0
        %1133 = vmatprep.subr.bf16.mxu0 0
        %1134 = vmatpush1.bf16.msra.mxu0 0
        %1135 = vmatprep.subr.bf16.mxu0 0
        %1136 = vmatpush1.bf16.msra.mxu0 0
        %1137 = vmatprep.subr.bf16.mxu0 0
        %1138 = vmatpush1.bf16.msra.mxu0 0
        %1139 = vmatprep.subr.bf16.mxu0 0
        %1140 = vmatpush1.bf16.msra.mxu0 0
        %1141 = vmatprep.subr.bf16.mxu0 0
        %1142 = vmatpush1.bf16.msra.mxu0 0
        %1143 = vmatprep.subr.bf16.mxu0 0
        %1144 = vmatpush1.bf16.msra.mxu0 0
        %1145 = vmatprep.subr.bf16.mxu0 0
        %1146 = vmatpush1.bf16.msra.mxu0 0
        %1147 = vmatprep.subr.bf16.mxu0 0
        %1148 = vmatpush1.bf16.msra.mxu0 0
        %1149 = vmatprep.subr.bf16.mxu0 0
        %1150 = vmatpush1.bf16.msra.mxu0 0
        %1151 = vmatprep.mubr.bf16.mxu0 0
        %1152 = vmatmul.mubr.bf16.gmra.mrb[0].mxu0 %v1108
        %v1153 = vpop.f32.mrb[0].mxu0
        %v1154 = vadd.f32 %v1049, %v1153
        %v1155 = vpop.f32.mrb[0].mxu0
        %v1156 = vadd.f32 %v1049, %v1155
        %v1157 = vpop.f32.mrb[0].mxu0
        %v1158 = vadd.f32 %v1054, %v1157
        %v1159 = vpop.f32.mrb[0].mxu0
        %v1160 = vadd.f32 %v1054, %v1159
        %1161 = vmatprep.mubr.bf16.mxu0 0
        %1162 = vmatmul.mubr.bf16.gmra.mrb[0].mxu0 %v1111
        %v1163 = vpop.f32.mrb[0].mxu0
        %v1164 = vadd.f32 %v1059, %v1163
        %v1165 = vpop.f32.mrb[0].mxu0
        %v1166 = vadd.f32 %v1059, %v1165
        %v1167 = vpop.f32.mrb[0].mxu0
        %v1168 = vadd.f32 %v1064, %v1167
        %v1169 = vpop.f32.mrb[0].mxu0
        %v1170 = vadd.f32 %v1064, %v1169
        %1171 = vmatprep.mubr.bf16.mxu0 0
        %1172 = vmatmul.mubr.bf16.gmra.mrb[0].mxu0 %v1114
        %v1173 = vpop.f32.mrb[0].mxu0
        %v1174 = vadd.f32 %v1069, %v1173
        %v1175 = vpop.f32.mrb[0].mxu0
        %v1176 = vadd.f32 %v1069, %v1175
        %v1177 = vpop.f32.mrb[0].mxu0
        %v1178 = vadd.f32 %v1074, %v1177
        %v1179 = vpop.f32.mrb[0].mxu0
        %v1180 = vadd.f32 %v1074, %v1179
        %1181 = vmatprep.mubr.bf16.mxu0 0
        %1182 = vmatmul.mubr.bf16.gmra.mrb[0].mxu0 %v1117
        %v1183 = vpop.f32.mrb[0].mxu0
        %v1184 = vadd.f32 %v1079, %v1183
        %v1185 = vpop.f32.mrb[0].mxu0
        %v1186 = vadd.f32 %v1079, %v1185
        %v1187 = vpop.f32.mrb[0].mxu0
        %v1188 = vadd.f32 %v1084, %v1187
        %v1189 = vpop.f32.mrb[0].mxu0
        %v1190 = vadd.f32 %v1084, %v1189
        %1191 = vdwg.mxu0
        %1192 = vmatprep.subr.bf16.mxu0 %v1009
        %1193 = vmatpush1.bf16.msra.mxu0 %v1008
        %1194 = vmatprep.subr.bf16.mxu0 %v1017
        %1195 = vmatpush1.bf16.msra.mxu0 %v1016
        %1196 = vmatprep.subr.bf16.mxu0 %v1025
        %1197 = vmatpush1.bf16.msra.mxu0 %v1024
        %1198 = vmatprep.subr.bf16.mxu0 %v1033
        %1199 = vmatpush1.bf16.msra.mxu0 %v1032
        %1200 = vmatprep.subr.bf16.mxu0 0
        %1201 = vmatpush1.bf16.msra.mxu0 0
        %1202 = vmatprep.subr.bf16.mxu0 0
        %1203 = vmatpush1.bf16.msra.mxu0 0
        %1204 = vmatprep.subr.bf16.mxu0 0
        %1205 = vmatpush1.bf16.msra.mxu0 0
        %1206 = vmatprep.subr.bf16.mxu0 0
        %1207 = vmatpush1.bf16.msra.mxu0 0
        %1208 = vmatprep.subr.bf16.mxu0 0
        %1209 = vmatpush1.bf16.msra.mxu0 0
        %1210 = vmatprep.subr.bf16.mxu0 0
        %1211 = vmatpush1.bf16.msra.mxu0 0
        %1212 = vmatprep.subr.bf16.mxu0 0
        %1213 = vmatpush1.bf16.msra.mxu0 0
        %1214 = vmatprep.subr.bf16.mxu0 0
        %1215 = vmatpush1.bf16.msra.mxu0 0
        %1216 = vmatprep.subr.bf16.mxu0 0
        %1217 = vmatpush1.bf16.msra.mxu0 0
        %1218 = vmatprep.subr.bf16.mxu0 0
        %1219 = vmatpush1.bf16.msra.mxu0 0
        %1220 = vmatprep.subr.bf16.mxu0 0
        %1221 = vmatpush1.bf16.msra.mxu0 0
        %1222 = vmatprep.subr.bf16.mxu0 0
        %1223 = vmatpush1.bf16.msra.mxu0 0
        %1224 = vmatprep.mubr.bf16.mxu0 0
        %1225 = vmatmul.mubr.bf16.gmra.mrb[0].mxu0 %v1108
        %v1226 = vpop.f32.mrb[0].mxu0
        %v1227 = vadd.f32 %v1049, %v1226
        %v1228 = vpop.f32.mrb[0].mxu0
        %v1229 = vadd.f32 %v1049, %v1228
        %v1230 = vpop.f32.mrb[0].mxu0
        %v1231 = vadd.f32 %v1054, %v1230
        %v1232 = vpop.f32.mrb[0].mxu0
        %v1233 = vadd.f32 %v1054, %v1232
        %1234 = vmatprep.mubr.bf16.mxu0 0
        %1235 = vmatmul.mubr.bf16.gmra.mrb[0].mxu0 %v1111
        %v1236 = vpop.f32.mrb[0].mxu0
        %v1237 = vadd.f32 %v1059, %v1236
        %v1238 = vpop.f32.mrb[0].mxu0
        %v1239 = vadd.f32 %v1059, %v1238
        %v1240 = vpop.f32.mrb[0].mxu0
        %v1241 = vadd.f32 %v1064, %v1240
        %v1242 = vpop.f32.mrb[0].mxu0
        %v1243 = vadd.f32 %v1064, %v1242
        %1244 = vmatprep.mubr.bf16.mxu0 0
        %1245 = vmatmul.mubr.bf16.gmra.mrb[0].mxu0 %v1114
        %v1246 = vpop.f32.mrb[0].mxu0
        %v1247 = vadd.f32 %v1069, %v1246
        %v1248 = vpop.f32.mrb[0].mxu0
        %v1249 = vadd.f32 %v1069, %v1248
        %v1250 = vpop.f32.mrb[0].mxu0
        %v1251 = vadd.f32 %v1074, %v1250
        %v1252 = vpop.f32.mrb[0].mxu0
        %v1253 = vadd.f32 %v1074, %v1252
        %1254 = vmatprep.mubr.bf16.mxu0 0
        %1255 = vmatmul.mubr.bf16.gmra.mrb[0].mxu0 %v1117
        %v1256 = vpop.f32.mrb[0].mxu0
        %v1257 = vadd.f32 %v1079, %v1256
        %v1258 = vpop.f32.mrb[0].mxu0
        %v1259 = vadd.f32 %v1079, %v1258
        %v1260 = vpop.f32.mrb[0].mxu0
        %v1261 = vadd.f32 %v1084, %v1260
        %v1262 = vpop.f32.mrb[0].mxu0
        %v1263 = vadd.f32 %v1084, %v1262
        %1264 = vdwg.mxu0
        %1265 = vmatprep.subr.bf16.mxu0 %v1011
        %1266 = vmatpush1.bf16.msra.mxu0 %v1010
        %1267 = vmatprep.subr.bf16.mxu0 %v1019
        %1268 = vmatpush1.bf16.msra.mxu0 %v1018
        %1269 = vmatprep.subr.bf16.mxu0 %v1027
        %1270 = vmatpush1.bf16.msra.mxu0 %v1026
        %1271 = vmatprep.subr.bf16.mxu0 %v1035
        %1272 = vmatpush1.bf16.msra.mxu0 %v1034
        %1273 = vmatprep.subr.bf16.mxu0 0
        %1274 = vmatpush1.bf16.msra.mxu0 0
        %1275 = vmatprep.subr.bf16.mxu0 0
        %1276 = vmatpush1.bf16.msra.mxu0 0
        %1277 = vmatprep.subr.bf16.mxu0 0
        %1278 = vmatpush1.bf16.msra.mxu0 0
        %1279 = vmatprep.subr.bf16.mxu0 0
        %1280 = vmatpush1.bf16.msra.mxu0 0
        %1281 = vmatprep.subr.bf16.mxu0 0
        %1282 = vmatpush1.bf16.msra.mxu0 0
        %1283 = vmatprep.subr.bf16.mxu0 0
        %1284 = vmatpush1.bf16.msra.mxu0 0
        %1285 = vmatprep.subr.bf16.mxu0 0
        %1286 = vmatpush1.bf16.msra.mxu0 0
        %1287 = vmatprep.subr.bf16.mxu0 0
        %1288 = vmatpush1.bf16.msra.mxu0 0
        %1289 = vmatprep.subr.bf16.mxu0 0
        %1290 = vmatpush1.bf16.msra.mxu0 0
        %1291 = vmatprep.subr.bf16.mxu0 0
        %1292 = vmatpush1.bf16.msra.mxu0 0
        %1293 = vmatprep.subr.bf16.mxu0 0
        %1294 = vmatpush1.bf16.msra.mxu0 0
        %1295 = vmatprep.subr.bf16.mxu0 0
        %1296 = vmatpush1.bf16.msra.mxu0 0
        %1297 = vmatprep.mubr.bf16.mxu0 0
        %1298 = vmatmul.mubr.bf16.gmra.mrb[0].mxu0 %v1108
        %v1299 = vpop.f32.mrb[0].mxu0
        %v1300 = vadd.f32 %v1049, %v1299
        %v1301 = vpop.f32.mrb[0].mxu0
        %v1302 = vadd.f32 %v1049, %v1301
        %v1303 = vpop.f32.mrb[0].mxu0
        %v1304 = vadd.f32 %v1054, %v1303
        %v1305 = vpop.f32.mrb[0].mxu0
        %v1306 = vadd.f32 %v1054, %v1305
        %1307 = vmatprep.mubr.bf16.mxu0 0
        %1308 = vmatmul.mubr.bf16.gmra.mrb[0].mxu0 %v1111
        %v1309 = vpop.f32.mrb[0].mxu0
        %v1310 = vadd.f32 %v1059, %v1309
        %v1311 = vpop.f32.mrb[0].mxu0
        %v1312 = vadd.f32 %v1059, %v1311
        %v1313 = vpop.f32.mrb[0].mxu0
        %v1314 = vadd.f32 %v1064, %v1313
        %v1315 = vpop.f32.mrb[0].mxu0
        %v1316 = vadd.f32 %v1064, %v1315
        %1317 = vmatprep.mubr.bf16.mxu0 0
        %1318 = vmatmul.mubr.bf16.gmra.mrb[0].mxu0 %v1114
        %v1319 = vpop.f32.mrb[0].mxu0
        %v1320 = vadd.f32 %v1069, %v1319
        %v1321 = vpop.f32.mrb[0].mxu0
        %v1322 = vadd.f32 %v1069, %v1321
        %v1323 = vpop.f32.mrb[0].mxu0
        %v1324 = vadd.f32 %v1074, %v1323
        %v1325 = vpop.f32.mrb[0].mxu0
        %v1326 = vadd.f32 %v1074, %v1325
        %1327 = vmatprep.mubr.bf16.mxu0 0
        %1328 = vmatmul.mubr.bf16.gmra.mrb[0].mxu0 %v1117
        %v1329 = vpop.f32.mrb[0].mxu0
        %v1330 = vadd.f32 %v1079, %v1329
        %v1331 = vpop.f32.mrb[0].mxu0
        %v1332 = vadd.f32 %v1079, %v1331
        %v1333 = vpop.f32.mrb[0].mxu0
        %v1334 = vadd.f32 %v1084, %v1333
        %v1335 = vpop.f32.mrb[0].mxu0
        %v1336 = vadd.f32 %v1084, %v1335
        %1337 = vdwg.mxu0
        %1338 = vmatprep.subr.bf16.mxu0 %v1013
        %1339 = vmatpush1.bf16.msra.mxu0 %v1012
        %1340 = vmatprep.subr.bf16.mxu0 %v1021
        %1341 = vmatpush1.bf16.msra.mxu0 %v1020
        %1342 = vmatprep.subr.bf16.mxu0 %v1029
        %1343 = vmatpush1.bf16.msra.mxu0 %v1028
        %1344 = vmatprep.subr.bf16.mxu0 %v1037
        %1345 = vmatpush1.bf16.msra.mxu0 %v1036
        %1346 = vmatprep.subr.bf16.mxu0 0
        %1347 = vmatpush1.bf16.msra.mxu0 0
        %1348 = vmatprep.subr.bf16.mxu0 0
        %1349 = vmatpush1.bf16.msra.mxu0 0
        %1350 = vmatprep.subr.bf16.mxu0 0
        %1351 = vmatpush1.bf16.msra.mxu0 0
        %1352 = vmatprep.subr.bf16.mxu0 0
        %1353 = vmatpush1.bf16.msra.mxu0 0
        %1354 = vmatprep.subr.bf16.mxu0 0
        %1355 = vmatpush1.bf16.msra.mxu0 0
        %1356 = vmatprep.subr.bf16.mxu0 0
        %1357 = vmatpush1.bf16.msra.mxu0 0
        %1358 = vmatprep.subr.bf16.mxu0 0
        %1359 = vmatpush1.bf16.msra.mxu0 0
        %1360 = vmatprep.subr.bf16.mxu0 0
        %1361 = vmatpush1.bf16.msra.mxu0 0
        %1362 = vmatprep.subr.bf16.mxu0 0
        %1363 = vmatpush1.bf16.msra.mxu0 0
        %1364 = vmatprep.subr.bf16.mxu0 0
        %1365 = vmatpush1.bf16.msra.mxu0 0
        %1366 = vmatprep.subr.bf16.mxu0 0
        %1367 = vmatpush1.bf16.msra.mxu0 0
        %1368 = vmatprep.subr.bf16.mxu0 0
        %1369 = vmatpush1.bf16.msra.mxu0 0
        %1370 = vmatprep.mubr.bf16.mxu0 0
        %1371 = vmatmul.mubr.bf16.gmra.mrb[0].mxu0 %v1108
        %v1372 = vpop.f32.mrb[0].mxu0
        %v1373 = vadd.f32 %v1049, %v1372
        %v1374 = vpop.f32.mrb[0].mxu0
        %v1375 = vadd.f32 %v1049, %v1374
        %v1376 = vpop.f32.mrb[0].mxu0
        %v1377 = vadd.f32 %v1054, %v1376
        %v1378 = vpop.f32.mrb[0].mxu0
        %v1379 = vadd.f32 %v1054, %v1378
        %1380 = vmatprep.mubr.bf16.mxu0 0
        %1381 = vmatmul.mubr.bf16.gmra.mrb[0].mxu0 %v1111
        %v1382 = vpop.f32.mrb[0].mxu0
        %v1383 = vadd.f32 %v1059, %v1382
        %v1384 = vpop.f32.mrb[0].mxu0
        %v1385 = vadd.f32 %v1059, %v1384
        %v1386 = vpop.f32.mrb[0].mxu0
        %v1387 = vadd.f32 %v1064, %v1386
        %v1388 = vpop.f32.mrb[0].mxu0
        %v1389 = vadd.f32 %v1064, %v1388
        %1390 = vmatprep.mubr.bf16.mxu0 0
        %1391 = vmatmul.mubr.bf16.gmra.mrb[0].mxu0 %v1114
        %v1392 = vpop.f32.mrb[0].mxu0
        %v1393 = vadd.f32 %v1069, %v1392
        %v1394 = vpop.f32.mrb[0].mxu0
        %v1395 = vadd.f32 %v1069, %v1394
        %v1396 = vpop.f32.mrb[0].mxu0
        %v1397 = vadd.f32 %v1074, %v1396
        %v1398 = vpop.f32.mrb[0].mxu0
        %v1399 = vadd.f32 %v1074, %v1398
        %1400 = vmatprep.mubr.bf16.mxu0 0
        %1401 = vmatmul.mubr.bf16.gmra.mrb[0].mxu0 %v1117
        %v1402 = vpop.f32.mrb[0].mxu0
        %v1403 = vadd.f32 %v1079, %v1402
        %v1404 = vpop.f32.mrb[0].mxu0
        %v1405 = vadd.f32 %v1079, %v1404
        %v1406 = vpop.f32.mrb[0].mxu0
        %v1407 = vadd.f32 %v1084, %v1406
        %v1408 = vpop.f32.mrb[0].mxu0
        %v1409 = vadd.f32 %v1084, %v1408
        %1410 = vdwg.mxu0
        %v1411 = vmax.f32 %v1154, 0.0
        %v1412 = vmax.f32 %v1156, 0.0
        %v1413 = vmax.f32 %v1227, 0.0
        %v1414 = vmax.f32 %v1229, 0.0
        %v1415 = vmax.f32 %v1300, 0.0
        %v1416 = vmax.f32 %v1302, 0.0
        %v1417 = vmax.f32 %v1373, 0.0
        %v1418 = vmax.f32 %v1375, 0.0
        %v1419 = vmax.f32 %v1158, 0.0
        %v1420 = vmax.f32 %v1160, 0.0
        %v1421 = vmax.f32 %v1231, 0.0
        %v1422 = vmax.f32 %v1233, 0.0
        %v1423 = vmax.f32 %v1304, 0.0
        %v1424 = vmax.f32 %v1306, 0.0
        %v1425 = vmax.f32 %v1377, 0.0
        %v1426 = vmax.f32 %v1379, 0.0
        %v1427 = vmax.f32 %v1164, 0.0
        %v1428 = vmax.f32 %v1166, 0.0
        %v1429 = vmax.f32 %v1237, 0.0
        %v1430 = vmax.f32 %v1239, 0.0
        %v1431 = vmax.f32 %v1310, 0.0
        %v1432 = vmax.f32 %v1312, 0.0
        %v1433 = vmax.f32 %v1383, 0.0
        %v1434 = vmax.f32 %v1385, 0.0
        %v1435 = vmax.f32 %v1168, 0.0
        %v1436 = vmax.f32 %v1170, 0.0
        %v1437 = vmax.f32 %v1241, 0.0
        %v1438 = vmax.f32 %v1243, 0.0
        %v1439 = vmax.f32 %v1314, 0.0
        %v1440 = vmax.f32 %v1316, 0.0
        %v1441 = vmax.f32 %v1387, 0.0
        %v1442 = vmax.f32 %v1389, 0.0
        %v1443 = vmax.f32 %v1174, 0.0
        %v1444 = vmax.f32 %v1176, 0.0
        %v1445 = vmax.f32 %v1247, 0.0
        %v1446 = vmax.f32 %v1249, 0.0
        %v1447 = vmax.f32 %v1320, 0.0
        %v1448 = vmax.f32 %v1322, 0.0
        %v1449 = vmax.f32 %v1393, 0.0
        %v1450 = vmax.f32 %v1395, 0.0
        %v1451 = vmax.f32 %v1178, 0.0
        %v1452 = vmax.f32 %v1180, 0.0
        %v1453 = vmax.f32 %v1251, 0.0
        %v1454 = vmax.f32 %v1253, 0.0
        %v1455 = vmax.f32 %v1324, 0.0
        %v1456 = vmax.f32 %v1326, 0.0
        %v1457 = vmax.f32 %v1397, 0.0
        %v1458 = vmax.f32 %v1399, 0.0
        %v1459 = vmax.f32 %v1184, 0.0
        %v1460 = vmax.f32 %v1186, 0.0
        %v1461 = vmax.f32 %v1257, 0.0
        %v1462 = vmax.f32 %v1259, 0.0
        %v1463 = vmax.f32 %v1330, 0.0
        %v1464 = vmax.f32 %v1332, 0.0
        %v1465 = vmax.f32 %v1403, 0.0
        %v1466 = vmax.f32 %v1405, 0.0
        %v1467 = vmax.f32 %v1188, 0.0
        %v1468 = vmax.f32 %v1190, 0.0
        %v1469 = vmax.f32 %v1261, 0.0
        %v1470 = vmax.f32 %v1263, 0.0
        %v1471 = vmax.f32 %v1334, 0.0
        %v1472 = vmax.f32 %v1336, 0.0
        %v1473 = vmax.f32 %v1407, 0.0
        %v1474 = vmax.f32 %v1409, 0.0
        %v1475 = vld [vmem:[%s6] sm:$0xf]
        %v1476 = vld [vmem:[%s6 + $0x4] sm:$0x1]
        %v1477 = vpack.c.bf16 %v1419, %v1411
        %v1478 = vpack.c.bf16 %v1420, %v1412
        %v1479 = vpack.c.bf16 %v1421, %v1413
        %v1480 = vpack.c.bf16 %v1422, %v1414
        %v1481 = vpack.c.bf16 %v1423, %v1415
        %v1482 = vpack.c.bf16 %v1424, %v1416
        %v1483 = vpack.c.bf16 %v1425, %v1417
        %v1484 = vpack.c.bf16 %v1426, %v1418
        %v1485 = vpack.c.bf16 %v1435, %v1427
        %v1486 = vpack.c.bf16 %v1436, %v1428
        %v1487 = vpack.c.bf16 %v1437, %v1429
        %v1488 = vpack.c.bf16 %v1438, %v1430
        %v1489 = vpack.c.bf16 %v1439, %v1431
        %v1490 = vpack.c.bf16 %v1440, %v1432
        %v1491 = vpack.c.bf16 %v1441, %v1433
        %v1492 = vpack.c.bf16 %v1442, %v1434
        %v1493 = vpack.c.bf16 %v1451, %v1443
        %v1494 = vpack.c.bf16 %v1452, %v1444
        %v1495 = vpack.c.bf16 %v1453, %v1445
        %v1496 = vpack.c.bf16 %v1454, %v1446
        %v1497 = vpack.c.bf16 %v1455, %v1447
        %v1498 = vpack.c.bf16 %v1456, %v1448
        %v1499 = vpack.c.bf16 %v1457, %v1449
        %v1500 = vpack.c.bf16 %v1458, %v1450
        %v1501 = vpack.c.bf16 %v1467, %v1459
        %v1502 = vpack.c.bf16 %v1468, %v1460
        %v1503 = vpack.c.bf16 %v1469, %v1461
        %v1504 = vpack.c.bf16 %v1470, %v1462
        %v1505 = vpack.c.bf16 %v1471, %v1463
        %v1506 = vpack.c.bf16 %v1472, %v1464
        %v1507 = vpack.c.bf16 %v1473, %v1465
        %v1508 = vpack.c.bf16 %v1474, %v1466
        %v1509 = vld [vmem:[%s7] sm:$0xff]
        %v1510 = vld [vmem:[%s7 + $0x8] sm:$0x3]
        %1512 = vset.pattern.permute.xlu0 0
        %1513 = vperm.xlu0 %1512, %v1509
        %v1514 = vpop.permute.xlu0 %1513
        %1517 = vset.pattern.permute.xlu0 0
        %1518 = vperm.xlu0 %1517, %v1510
        %v1519 = vpop.permute.xlu0 %1518
        %v1523 = vunpack.c.l.b16 %v1475
        %v1524 = vunpack.c.l.b16 %v1476
        %v1525 = vpack.c.b16 %v1524, %v1523
        %v1527 = vsel %vm1106, %v1525, 0
        %1529 = vmatprep.subr.bf16.mxu0 %v1478
        %1530 = vmatpush1.bf16.msra.mxu0 %v1477
        %1531 = vmatprep.subr.bf16.mxu0 %v1486
        %1532 = vmatpush1.bf16.msra.mxu0 %v1485
        %1533 = vmatprep.subr.bf16.mxu0 %v1494
        %1534 = vmatpush1.bf16.msra.mxu0 %v1493
        %1535 = vmatprep.subr.bf16.mxu0 %v1502
        %1536 = vmatpush1.bf16.msra.mxu0 %v1501
        %1537 = vmatprep.subr.bf16.mxu0 0
        %1538 = vmatpush1.bf16.msra.mxu0 0
        %1539 = vmatprep.subr.bf16.mxu0 0
        %1540 = vmatpush1.bf16.msra.mxu0 0
        %1541 = vmatprep.subr.bf16.mxu0 0
        %1542 = vmatpush1.bf16.msra.mxu0 0
        %1543 = vmatprep.subr.bf16.mxu0 0
        %1544 = vmatpush1.bf16.msra.mxu0 0
        %1545 = vmatprep.subr.bf16.mxu0 0
        %1546 = vmatpush1.bf16.msra.mxu0 0
        %1547 = vmatprep.subr.bf16.mxu0 0
        %1548 = vmatpush1.bf16.msra.mxu0 0
        %1549 = vmatprep.subr.bf16.mxu0 0
        %1550 = vmatpush1.bf16.msra.mxu0 0
        %1551 = vmatprep.subr.bf16.mxu0 0
        %1552 = vmatpush1.bf16.msra.mxu0 0
        %1553 = vmatprep.subr.bf16.mxu0 0
        %1554 = vmatpush1.bf16.msra.mxu0 0
        %1555 = vmatprep.subr.bf16.mxu0 0
        %1556 = vmatpush1.bf16.msra.mxu0 0
        %1557 = vmatprep.subr.bf16.mxu0 0
        %1558 = vmatpush1.bf16.msra.mxu0 0
        %1559 = vmatprep.subr.bf16.mxu0 0
        %1560 = vmatpush1.bf16.msra.mxu0 0
        %1561 = vmatprep.mubr.bf16.mxu0 0
        %1562 = vmatmul.mubr.bf16.gmra.mrb[0].mxu0 %v1527
        %v1563 = vpop.f32.mrb[0].mxu0
        %v1564 = vadd.f32 %v1514, %v1563
        %v1565 = vpop.f32.mrb[0].mxu0
        %v1566 = vadd.f32 %v1514, %v1565
        %v1567 = vpop.f32.mrb[0].mxu0
        %v1568 = vadd.f32 %v1519, %v1567
        %v1569 = vpop.f32.mrb[0].mxu0
        %v1570 = vadd.f32 %v1519, %v1569
        %1571 = vdwg.mxu0
        %1572 = vmatprep.subr.bf16.mxu0 %v1480
        %1573 = vmatpush1.bf16.msra.mxu0 %v1479
        %1574 = vmatprep.subr.bf16.mxu0 %v1488
        %1575 = vmatpush1.bf16.msra.mxu0 %v1487
        %1576 = vmatprep.subr.bf16.mxu0 %v1496
        %1577 = vmatpush1.bf16.msra.mxu0 %v1495
        %1578 = vmatprep.subr.bf16.mxu0 %v1504
        %1579 = vmatpush1.bf16.msra.mxu0 %v1503
        %1580 = vmatprep.subr.bf16.mxu0 0
        %1581 = vmatpush1.bf16.msra.mxu0 0
        %1582 = vmatprep.subr.bf16.mxu0 0
        %1583 = vmatpush1.bf16.msra.mxu0 0
        %1584 = vmatprep.subr.bf16.mxu0 0
        %1585 = vmatpush1.bf16.msra.mxu0 0
        %1586 = vmatprep.subr.bf16.mxu0 0
        %1587 = vmatpush1.bf16.msra.mxu0 0
        %1588 = vmatprep.subr.bf16.mxu0 0
        %1589 = vmatpush1.bf16.msra.mxu0 0
        %1590 = vmatprep.subr.bf16.mxu0 0
        %1591 = vmatpush1.bf16.msra.mxu0 0
        %1592 = vmatprep.subr.bf16.mxu0 0
        %1593 = vmatpush1.bf16.msra.mxu0 0
        %1594 = vmatprep.subr.bf16.mxu0 0
        %1595 = vmatpush1.bf16.msra.mxu0 0
        %1596 = vmatprep.subr.bf16.mxu0 0
        %1597 = vmatpush1.bf16.msra.mxu0 0
        %1598 = vmatprep.subr.bf16.mxu0 0
        %1599 = vmatpush1.bf16.msra.mxu0 0
        %1600 = vmatprep.subr.bf16.mxu0 0
        %1601 = vmatpush1.bf16.msra.mxu0 0
        %1602 = vmatprep.subr.bf16.mxu0 0
        %1603 = vmatpush1.bf16.msra.mxu0 0
        %1604 = vmatprep.mubr.bf16.mxu0 0
        %1605 = vmatmul.mubr.bf16.gmra.mrb[0].mxu0 %v1527
        %v1606 = vpop.f32.mrb[0].mxu0
        %v1607 = vadd.f32 %v1514, %v1606
        %v1608 = vpop.f32.mrb[0].mxu0
        %v1609 = vadd.f32 %v1514, %v1608
        %v1610 = vpop.f32.mrb[0].mxu0
        %v1611 = vadd.f32 %v1519, %v1610
        %v1612 = vpop.f32.mrb[0].mxu0
        %v1613 = vadd.f32 %v1519, %v1612
        %1614 = vdwg.mxu0
        %1615 = vmatprep.subr.bf16.mxu0 %v1482
        %1616 = vmatpush1.bf16.msra.mxu0 %v1481
        %1617 = vmatprep.subr.bf16.mxu0 %v1490
        %1618 = vmatpush1.bf16.msra.mxu0 %v1489
        %1619 = vmatprep.subr.bf16.mxu0 %v1498
        %1620 = vmatpush1.bf16.msra.mxu0 %v1497
        %1621 = vmatprep.subr.bf16.mxu0 %v1506
        %1622 = vmatpush1.bf16.msra.mxu0 %v1505
        %1623 = vmatprep.subr.bf16.mxu0 0
        %1624 = vmatpush1.bf16.msra.mxu0 0
        %1625 = vmatprep.subr.bf16.mxu0 0
        %1626 = vmatpush1.bf16.msra.mxu0 0
        %1627 = vmatprep.subr.bf16.mxu0 0
        %1628 = vmatpush1.bf16.msra.mxu0 0
        %1629 = vmatprep.subr.bf16.mxu0 0
        %1630 = vmatpush1.bf16.msra.mxu0 0
        %1631 = vmatprep.subr.bf16.mxu0 0
        %1632 = vmatpush1.bf16.msra.mxu0 0
        %1633 = vmatprep.subr.bf16.mxu0 0
        %1634 = vmatpush1.bf16.msra.mxu0 0
        %1635 = vmatprep.subr.bf16.mxu0 0
        %1636 = vmatpush1.bf16.msra.mxu0 0
        %1637 = vmatprep.subr.bf16.mxu0 0
        %1638 = vmatpush1.bf16.msra.mxu0 0
        %1639 = vmatprep.subr.bf16.mxu0 0
        %1640 = vmatpush1.bf16.msra.mxu0 0
        %1641 = vmatprep.subr.bf16.mxu0 0
        %1642 = vmatpush1.bf16.msra.mxu0 0
        %1643 = vmatprep.subr.bf16.mxu0 0
        %1644 = vmatpush1.bf16.msra.mxu0 0
        %1645 = vmatprep.subr.bf16.mxu0 0
        %1646 = vmatpush1.bf16.msra.mxu0 0
        %1647 = vmatprep.mubr.bf16.mxu0 0
        %1648 = vmatmul.mubr.bf16.gmra.mrb[0].mxu0 %v1527
        %v1649 = vpop.f32.mrb[0].mxu0
        %v1650 = vadd.f32 %v1514, %v1649
        %v1651 = vpop.f32.mrb[0].mxu0
        %v1652 = vadd.f32 %v1514, %v1651
        %v1653 = vpop.f32.mrb[0].mxu0
        %v1654 = vadd.f32 %v1519, %v1653
        %v1655 = vpop.f32.mrb[0].mxu0
        %v1656 = vadd.f32 %v1519, %v1655
        %1657 = vdwg.mxu0
        %1658 = vmatprep.subr.bf16.mxu0 %v1484
        %1659 = vmatpush1.bf16.msra.mxu0 %v1483
        %1660 = vmatprep.subr.bf16.mxu0 %v1492
        %1661 = vmatpush1.bf16.msra.mxu0 %v1491
        %1662 = vmatprep.subr.bf16.mxu0 %v1500
        %1663 = vmatpush1.bf16.msra.mxu0 %v1499
        %1664 = vmatprep.subr.bf16.mxu0 %v1508
        %1665 = vmatpush1.bf16.msra.mxu0 %v1507
        %1666 = vmatprep.subr.bf16.mxu0 0
        %1667 = vmatpush1.bf16.msra.mxu0 0
        %1668 = vmatprep.subr.bf16.mxu0 0
        %1669 = vmatpush1.bf16.msra.mxu0 0
        %1670 = vmatprep.subr.bf16.mxu0 0
        %1671 = vmatpush1.bf16.msra.mxu0 0
        %1672 = vmatprep.subr.bf16.mxu0 0
        %1673 = vmatpush1.bf16.msra.mxu0 0
        %1674 = vmatprep.subr.bf16.mxu0 0
        %1675 = vmatpush1.bf16.msra.mxu0 0
        %1676 = vmatprep.subr.bf16.mxu0 0
        %1677 = vmatpush1.bf16.msra.mxu0 0
        %1678 = vmatprep.subr.bf16.mxu0 0
        %1679 = vmatpush1.bf16.msra.mxu0 0
        %1680 = vmatprep.subr.bf16.mxu0 0
        %1681 = vmatpush1.bf16.msra.mxu0 0
        %1682 = vmatprep.subr.bf16.mxu0 0
        %1683 = vmatpush1.bf16.msra.mxu0 0
        %1684 = vmatprep.subr.bf16.mxu0 0
        %1685 = vmatpush1.bf16.msra.mxu0 0
        %1686 = vmatprep.subr.bf16.mxu0 0
        %1687 = vmatpush1.bf16.msra.mxu0 0
        %1688 = vmatprep.subr.bf16.mxu0 0
        %1689 = vmatpush1.bf16.msra.mxu0 0
        %1690 = vmatprep.mubr.bf16.mxu0 0
        %1691 = vmatmul.mubr.bf16.gmra.mrb[0].mxu0 %v1527
        %v1692 = vpop.f32.mrb[0].mxu0
        %v1693 = vadd.f32 %v1514, %v1692
        %v1694 = vpop.f32.mrb[0].mxu0
        %v1695 = vadd.f32 %v1514, %v1694
        %v1696 = vpop.f32.mrb[0].mxu0
        %v1697 = vadd.f32 %v1519, %v1696
        %v1698 = vpop.f32.mrb[0].mxu0
        %v1699 = vadd.f32 %v1519, %v1698
        %1700 = vdwg.mxu0
        %v1701 = vadd.f32 %v501, %v1564
        %v1702 = vadd.f32 %v502, %v1566
        %v1703 = vadd.f32 %v503, %v1607
        %v1704 = vadd.f32 %v504, %v1609
        %v1705 = vadd.f32 %v505, %v1650
        %v1706 = vadd.f32 %v506, %v1652
        %v1707 = vadd.f32 %v507, %v1693
        %v1708 = vadd.f32 %v508, %v1695
        %v1709 = vadd.f32 %v509, %v1568
        %v1710 = vadd.f32 %v510, %v1570
        %v1711 = vadd.f32 %v511, %v1611
        %v1712 = vadd.f32 %v512, %v1613
        %v1713 = vadd.f32 %v513, %v1654
        %v1714 = vadd.f32 %v514, %v1656
        %v1715 = vadd.f32 %v515, %v1697
        %v1716 = vadd.f32 %v516, %v1699
        %v1717 = vld [vmem:[%s8] sm:$0xf]
        %v1718 = vld [vmem:[%s8 + $0x4] sm:$0xf]
        %v1719 = vld [vmem:[%s8 + $0x8] sm:$0xf]
        %v1720 = vld [vmem:[%s8 + $0xc] sm:$0xf]
        %v1721 = vld [vmem:[%s8 + $0x10] sm:$0xf]
        %v1722 = vld [vmem:[%s8 + $0x14] sm:$0xf]
        %v1723 = vld [vmem:[%s8 + $0x18] sm:$0xf]
        %v1724 = vld [vmem:[%s8 + $0x1c] sm:$0xf]
        %v1725 = vpack.c.bf16 %v1701, %v1701
        %v1726 = vpack.c.bf16 %v1702, %v1702
        %v1727 = vpack.c.bf16 %v1703, %v1703
        %v1728 = vpack.c.bf16 %v1704, %v1704
        %v1729 = vpack.c.bf16 %v1705, %v1705
        %v1730 = vpack.c.bf16 %v1706, %v1706
        %v1731 = vpack.c.bf16 %v1707, %v1707
        %v1732 = vpack.c.bf16 %v1708, %v1708
        %v1733 = vld [vmem:[%s9] sm:$0xff]
        %v1734 = vld [vmem:[%s9 + $0x8] sm:$0xff]
        %v1735 = vld [vmem:[%s9 + $0x10] sm:$0xff]
        %v1736 = vld [vmem:[%s9 + $0x18] sm:$0xff]
        %v1737 = vld [vmem:[%s9 + $0x20] sm:$0xff]
        %v1738 = vld [vmem:[%s9 + $0x28] sm:$0xff]
        %v1739 = vld [vmem:[%s9 + $0x30] sm:$0xff]
        %v1740 = vld [vmem:[%s9 + $0x38] sm:$0xff]
        %1742 = vset.pattern.permute.xlu0 0
        %1743 = vperm.xlu0 %1742, %v1733
        %v1744 = vpop.permute.xlu0 %1743
        %1747 = vset.pattern.permute.xlu0 0
        %1748 = vperm.xlu0 %1747, %v1734
        %v1749 = vpop.permute.xlu0 %1748
        %1752 = vset.pattern.permute.xlu0 0
        %1753 = vperm.xlu0 %1752, %v1735
        %v1754 = vpop.permute.xlu0 %1753
        %1757 = vset.pattern.permute.xlu0 0
        %1758 = vperm.xlu0 %1757, %v1736
        %v1759 = vpop.permute.xlu0 %1758
        %1762 = vset.pattern.permute.xlu0 0
        %1763 = vperm.xlu0 %1762, %v1737
        %v1764 = vpop.permute.xlu0 %1763
        %1767 = vset.pattern.permute.xlu0 0
        %1768 = vperm.xlu0 %1767, %v1738
        %v1769 = vpop.permute.xlu0 %1768
        %1772 = vset.pattern.permute.xlu0 0
        %1773 = vperm.xlu0 %1772, %v1739
        %v1774 = vpop.permute.xlu0 %1773
        %1777 = vset.pattern.permute.xlu0 0
        %1778 = vperm.xlu0 %1777, %v1740
        %v1779 = vpop.permute.xlu0 %1778
        %v1789 = vunpack.c.l.b16 %v1717
        %v1790 = vunpack.c.l.b16 %v1718
        %v1791 = vunpack.c.l.b16 %v1719
        %v1792 = vunpack.c.l.b16 %v1720
        %v1793 = vunpack.c.l.b16 %v1721
        %v1794 = vunpack.c.l.b16 %v1722
        %v1795 = vunpack.c.l.b16 %v1723
        %v1796 = vunpack.c.l.b16 %v1724
        %v1797 = vpack.c.b16 %v1790, %v1789
        %v1798 = vpack.c.b16 %v1792, %v1791
        %v1799 = vpack.c.b16 %v1794, %v1793
        %v1800 = vpack.c.b16 %v1796, %v1795
        %v1802 = vsel %vm601, %v1797, 0
        %v1805 = vsel %vm601, %v1798, 0
        %v1808 = vsel %vm601, %v1799, 0
        %v1811 = vsel %vm601, %v1800, 0
        %v1814 = vand.u32 %v1725, %v617
        %v1817 = vand.u32 %v1726, %v617
        %v1820 = vand.u32 %v1727, %v617
        %v1823 = vand.u32 %v1728, %v617
        %v1826 = vand.u32 %v1729, %v617
        %v1829 = vand.u32 %v1730, %v617
        %v1832 = vand.u32 %v1731, %v617
        %v1835 = vand.u32 %v1732, %v617
        %1837 = vmatprep.subr.bf16.mxu0 %v1817
        %1838 = vmatpush1.bf16.msra.mxu0 %v1814
        %1839 = vmatprep.subr.bf16.mxu0 0
        %1840 = vmatpush1.bf16.msra.mxu0 0
        %1841 = vmatprep.subr.bf16.mxu0 0
        %1842 = vmatpush1.bf16.msra.mxu0 0
        %1843 = vmatprep.subr.bf16.mxu0 0
        %1844 = vmatpush1.bf16.msra.mxu0 0
        %1845 = vmatprep.subr.bf16.mxu0 0
        %1846 = vmatpush1.bf16.msra.mxu0 0
        %1847 = vmatprep.subr.bf16.mxu0 0
        %1848 = vmatpush1.bf16.msra.mxu0 0
        %1849 = vmatprep.subr.bf16.mxu0 0
        %1850 = vmatpush1.bf16.msra.mxu0 0
        %1851 = vmatprep.subr.bf16.mxu0 0
        %1852 = vmatpush1.bf16.msra.mxu0 0
        %1853 = vmatprep.subr.bf16.mxu0 0
        %1854 = vmatpush1.bf16.msra.mxu0 0
        %1855 = vmatprep.subr.bf16.mxu0 0
        %1856 = vmatpush1.bf16.msra.mxu0 0
        %1857 = vmatprep.subr.bf16.mxu0 0
        %1858 = vmatpush1.bf16.msra.mxu0 0
        %1859 = vmatprep.subr.bf16.mxu0 0
        %1860 = vmatpush1.bf16.msra.mxu0 0
        %1861 = vmatprep.subr.bf16.mxu0 0
        %1862 = vmatpush1.bf16.msra.mxu0 0
        %1863 = vmatprep.subr.bf16.mxu0 0
        %1864 = vmatpush1.bf16.msra.mxu0 0
        %1865 = vmatprep.subr.bf16.mxu0 0
        %1866 = vmatpush1.bf16.msra.mxu0 0
        %1867 = vmatprep.subr.bf16.mxu0 0
        %1868 = vmatpush1.bf16.msra.mxu0 0
        %1869 = vmatprep.mubr.bf16.mxu0 0
        %1870 = vmatmul.mubr.bf16.gmra.mrb[0].mxu0 %v1802
        %v1871 = vpop.f32.mrb[0].mxu0
        %v1872 = vadd.f32 %v1744, %v1871
        %v1873 = vpop.f32.mrb[0].mxu0
        %v1874 = vadd.f32 %v1744, %v1873
        %v1875 = vpop.f32.mrb[0].mxu0
        %v1876 = vadd.f32 %v1749, %v1875
        %v1877 = vpop.f32.mrb[0].mxu0
        %v1878 = vadd.f32 %v1749, %v1877
        %1879 = vmatprep.mubr.bf16.mxu0 0
        %1880 = vmatmul.mubr.bf16.gmra.mrb[0].mxu0 %v1805
        %v1881 = vpop.f32.mrb[0].mxu0
        %v1882 = vadd.f32 %v1754, %v1881
        %v1883 = vpop.f32.mrb[0].mxu0
        %v1884 = vadd.f32 %v1754, %v1883
        %v1885 = vpop.f32.mrb[0].mxu0
        %v1886 = vadd.f32 %v1759, %v1885
        %v1887 = vpop.f32.mrb[0].mxu0
        %v1888 = vadd.f32 %v1759, %v1887
        %1889 = vmatprep.mubr.bf16.mxu0 0
        %1890 = vmatmul.mubr.bf16.gmra.mrb[0].mxu0 %v1808
        %v1891 = vpop.f32.mrb[0].mxu0
        %v1892 = vadd.f32 %v1764, %v1891
        %v1893 = vpop.f32.mrb[0].mxu0
        %v1894 = vadd.f32 %v1764, %v1893
        %v1895 = vpop.f32.mrb[0].mxu0
        %v1896 = vadd.f32 %v1769, %v1895
        %v1897 = vpop.f32.mrb[0].mxu0
        %v1898 = vadd.f32 %v1769, %v1897
        %1899 = vmatprep.mubr.bf16.mxu0 0
        %1900 = vmatmul.mubr.bf16.gmra.mrb[0].mxu0 %v1811
        %v1901 = vpop.f32.mrb[0].mxu0
        %v1902 = vadd.f32 %v1774, %v1901
        %v1903 = vpop.f32.mrb[0].mxu0
        %v1904 = vadd.f32 %v1774, %v1903
        %v1905 = vpop.f32.mrb[0].mxu0
        %v1906 = vadd.f32 %v1779, %v1905
        %v1907 = vpop.f32.mrb[0].mxu0
        %v1908 = vadd.f32 %v1779, %v1907
        %1909 = vdwg.mxu0
        %1910 = vmatprep.subr.bf16.mxu0 %v1823
        %1911 = vmatpush1.bf16.msra.mxu0 %v1820
        %1912 = vmatprep.subr.bf16.mxu0 0
        %1913 = vmatpush1.bf16.msra.mxu0 0
        %1914 = vmatprep.subr.bf16.mxu0 0
        %1915 = vmatpush1.bf16.msra.mxu0 0
        %1916 = vmatprep.subr.bf16.mxu0 0
        %1917 = vmatpush1.bf16.msra.mxu0 0
        %1918 = vmatprep.subr.bf16.mxu0 0
        %1919 = vmatpush1.bf16.msra.mxu0 0
        %1920 = vmatprep.subr.bf16.mxu0 0
        %1921 = vmatpush1.bf16.msra.mxu0 0
        %1922 = vmatprep.subr.bf16.mxu0 0
        %1923 = vmatpush1.bf16.msra.mxu0 0
        %1924 = vmatprep.subr.bf16.mxu0 0
        %1925 = vmatpush1.bf16.msra.mxu0 0
        %1926 = vmatprep.subr.bf16.mxu0 0
        %1927 = vmatpush1.bf16.msra.mxu0 0
        %1928 = vmatprep.subr.bf16.mxu0 0
        %1929 = vmatpush1.bf16.msra.mxu0 0
        %1930 = vmatprep.subr.bf16.mxu0 0
        %1931 = vmatpush1.bf16.msra.mxu0 0
        %1932 = vmatprep.subr.bf16.mxu0 0
        %1933 = vmatpush1.bf16.msra.mxu0 0
        %1934 = vmatprep.subr.bf16.mxu0 0
        %1935 = vmatpush1.bf16.msra.mxu0 0
        %1936 = vmatprep.subr.bf16.mxu0 0
        %1937 = vmatpush1.bf16.msra.mxu0 0
        %1938 = vmatprep.subr.bf16.mxu0 0
        %1939 = vmatpush1.bf16.msra.mxu0 0
        %1940 = vmatprep.subr.bf16.mxu0 0
        %1941 = vmatpush1.bf16.msra.mxu0 0
        %1942 = vmatprep.mubr.bf16.mxu0 0
        %1943 = vmatmul.mubr.bf16.gmra.mrb[0].mxu0 %v1802
        %v1944 = vpop.f32.mrb[0].mxu0
        %v1945 = vadd.f32 %v1744, %v1944
        %v1946 = vpop.f32.mrb[0].mxu0
        %v1947 = vadd.f32 %v1744, %v1946
        %v1948 = vpop.f32.mrb[0].mxu0
        %v1949 = vadd.f32 %v1749, %v1948
        %v1950 = vpop.f32.mrb[0].mxu0
        %v1951 = vadd.f32 %v1749, %v1950
        %1952 = vmatprep.mubr.bf16.mxu0 0
        %1953 = vmatmul.mubr.bf16.gmra.mrb[0].mxu0 %v1805
        %v1954 = vpop.f32.mrb[0].mxu0
        %v1955 = vadd.f32 %v1754, %v1954
        %v1956 = vpop.f32.mrb[0].mxu0
        %v1957 = vadd.f32 %v1754, %v1956
        %v1958 = vpop.f32.mrb[0].mxu0
        %v1959 = vadd.f32 %v1759, %v1958
        %v1960 = vpop.f32.mrb[0].mxu0
        %v1961 = vadd.f32 %v1759, %v1960
        %1962 = vmatprep.mubr.bf16.mxu0 0
        %1963 = vmatmul.mubr.bf16.gmra.mrb[0].mxu0 %v1808
        %v1964 = vpop.f32.mrb[0].mxu0
        %v1965 = vadd.f32 %v1764, %v1964
        %v1966 = vpop.f32.mrb[0].mxu0
        %v1967 = vadd.f32 %v1764, %v1966
        %v1968 = vpop.f32.mrb[0].mxu0
        %v1969 = vadd.f32 %v1769, %v1968
        %v1970 = vpop.f32.mrb[0].mxu0
        %v1971 = vadd.f32 %v1769, %v1970
        %1972 = vmatprep.mubr.bf16.mxu0 0
        %1973 = vmatmul.mubr.bf16.gmra.mrb[0].mxu0 %v1811
        %v1974 = vpop.f32.mrb[0].mxu0
        %v1975 = vadd.f32 %v1774, %v1974
        %v1976 = vpop.f32.mrb[0].mxu0
        %v1977 = vadd.f32 %v1774, %v1976
        %v1978 = vpop.f32.mrb[0].mxu0
        %v1979 = vadd.f32 %v1779, %v1978
        %v1980 = vpop.f32.mrb[0].mxu0
        %v1981 = vadd.f32 %v1779, %v1980
        %1982 = vdwg.mxu0
        %1983 = vmatprep.subr.bf16.mxu0 %v1829
        %1984 = vmatpush1.bf16.msra.mxu0 %v1826
        %1985 = vmatprep.subr.bf16.mxu0 0
        %1986 = vmatpush1.bf16.msra.mxu0 0
        %1987 = vmatprep.subr.bf16.mxu0 0
        %1988 = vmatpush1.bf16.msra.mxu0 0
        %1989 = vmatprep.subr.bf16.mxu0 0
        %1990 = vmatpush1.bf16.msra.mxu0 0
        %1991 = vmatprep.subr.bf16.mxu0 0
        %1992 = vmatpush1.bf16.msra.mxu0 0
        %1993 = vmatprep.subr.bf16.mxu0 0
        %1994 = vmatpush1.bf16.msra.mxu0 0
        %1995 = vmatprep.subr.bf16.mxu0 0
        %1996 = vmatpush1.bf16.msra.mxu0 0
        %1997 = vmatprep.subr.bf16.mxu0 0
        %1998 = vmatpush1.bf16.msra.mxu0 0
        %1999 = vmatprep.subr.bf16.mxu0 0
        %2000 = vmatpush1.bf16.msra.mxu0 0
        %2001 = vmatprep.subr.bf16.mxu0 0
        %2002 = vmatpush1.bf16.msra.mxu0 0
        %2003 = vmatprep.subr.bf16.mxu0 0
        %2004 = vmatpush1.bf16.msra.mxu0 0
        %2005 = vmatprep.subr.bf16.mxu0 0
        %2006 = vmatpush1.bf16.msra.mxu0 0
        %2007 = vmatprep.subr.bf16.mxu0 0
        %2008 = vmatpush1.bf16.msra.mxu0 0
        %2009 = vmatprep.subr.bf16.mxu0 0
        %2010 = vmatpush1.bf16.msra.mxu0 0
        %2011 = vmatprep.subr.bf16.mxu0 0
        %2012 = vmatpush1.bf16.msra.mxu0 0
        %2013 = vmatprep.subr.bf16.mxu0 0
        %2014 = vmatpush1.bf16.msra.mxu0 0
        %2015 = vmatprep.mubr.bf16.mxu0 0
        %2016 = vmatmul.mubr.bf16.gmra.mrb[0].mxu0 %v1802
        %v2017 = vpop.f32.mrb[0].mxu0
        %v2018 = vadd.f32 %v1744, %v2017
        %v2019 = vpop.f32.mrb[0].mxu0
        %v2020 = vadd.f32 %v1744, %v2019
        %v2021 = vpop.f32.mrb[0].mxu0
        %v2022 = vadd.f32 %v1749, %v2021
        %v2023 = vpop.f32.mrb[0].mxu0
        %v2024 = vadd.f32 %v1749, %v2023
        %2025 = vmatprep.mubr.bf16.mxu0 0
        %2026 = vmatmul.mubr.bf16.gmra.mrb[0].mxu0 %v1805
        %v2027 = vpop.f32.mrb[0].mxu0
        %v2028 = vadd.f32 %v1754, %v2027
        %v2029 = vpop.f32.mrb[0].mxu0
        %v2030 = vadd.f32 %v1754, %v2029
        %v2031 = vpop.f32.mrb[0].mxu0
        %v2032 = vadd.f32 %v1759, %v2031
        %v2033 = vpop.f32.mrb[0].mxu0
        %v2034 = vadd.f32 %v1759, %v2033
        %2035 = vmatprep.mubr.bf16.mxu0 0
        %2036 = vmatmul.mubr.bf16.gmra.mrb[0].mxu0 %v1808
        %v2037 = vpop.f32.mrb[0].mxu0
        %v2038 = vadd.f32 %v1764, %v2037
        %v2039 = vpop.f32.mrb[0].mxu0
        %v2040 = vadd.f32 %v1764, %v2039
        %v2041 = vpop.f32.mrb[0].mxu0
        %v2042 = vadd.f32 %v1769, %v2041
        %v2043 = vpop.f32.mrb[0].mxu0
        %v2044 = vadd.f32 %v1769, %v2043
        %2045 = vmatprep.mubr.bf16.mxu0 0
        %2046 = vmatmul.mubr.bf16.gmra.mrb[0].mxu0 %v1811
        %v2047 = vpop.f32.mrb[0].mxu0
        %v2048 = vadd.f32 %v1774, %v2047
        %v2049 = vpop.f32.mrb[0].mxu0
        %v2050 = vadd.f32 %v1774, %v2049
        %v2051 = vpop.f32.mrb[0].mxu0
        %v2052 = vadd.f32 %v1779, %v2051
        %v2053 = vpop.f32.mrb[0].mxu0
        %v2054 = vadd.f32 %v1779, %v2053
        %2055 = vdwg.mxu0
        %2056 = vmatprep.subr.bf16.mxu0 %v1835
        %2057 = vmatpush1.bf16.msra.mxu0 %v1832
        %2058 = vmatprep.subr.bf16.mxu0 0
        %2059 = vmatpush1.bf16.msra.mxu0 0
        %2060 = vmatprep.subr.bf16.mxu0 0
        %2061 = vmatpush1.bf16.msra.mxu0 0
        %2062 = vmatprep.subr.bf16.mxu0 0
        %2063 = vmatpush1.bf16.msra.mxu0 0
        %2064 = vmatprep.subr.bf16.mxu0 0
        %2065 = vmatpush1.bf16.msra.mxu0 0
        %2066 = vmatprep.subr.bf16.mxu0 0
        %2067 = vmatpush1.bf16.msra.mxu0 0
        %2068 = vmatprep.subr.bf16.mxu0 0
        %2069 = vmatpush1.bf16.msra.mxu0 0
        %2070 = vmatprep.subr.bf16.mxu0 0
        %2071 = vmatpush1.bf16.msra.mxu0 0
        %2072 = vmatprep.subr.bf16.mxu0 0
        %2073 = vmatpush1.bf16.msra.mxu0 0
        %2074 = vmatprep.subr.bf16.mxu0 0
        %2075 = vmatpush1.bf16.msra.mxu0 0
        %2076 = vmatprep.subr.bf16.mxu0 0
        %2077 = vmatpush1.bf16.msra.mxu0 0
        %2078 = vmatprep.subr.bf16.mxu0 0
        %2079 = vmatpush1.bf16.msra.mxu0 0
        %2080 = vmatprep.subr.bf16.mxu0 0
        %2081 = vmatpush1.bf16.msra.mxu0 0
        %2082 = vmatprep.subr.bf16.mxu0 0
        %2083 = vmatpush1.bf16.msra.mxu0 0
        %2084 = vmatprep.subr.bf16.mxu0 0
        %2085 = vmatpush1.bf16.msra.mxu0 0
        %2086 = vmatprep.subr.bf16.mxu0 0
        %2087 = vmatpush1.bf16.msra.mxu0 0
        %2088 = vmatprep.mubr.bf16.mxu0 0
        %2089 = vmatmul.mubr.bf16.gmra.mrb[0].mxu0 %v1802
        %v2090 = vpop.f32.mrb[0].mxu0
        %v2091 = vadd.f32 %v1744, %v2090
        %v2092 = vpop.f32.mrb[0].mxu0
        %v2093 = vadd.f32 %v1744, %v2092
        %v2094 = vpop.f32.mrb[0].mxu0
        %v2095 = vadd.f32 %v1749, %v2094
        %v2096 = vpop.f32.mrb[0].mxu0
        %v2097 = vadd.f32 %v1749, %v2096
        %2098 = vmatprep.mubr.bf16.mxu0 0
        %2099 = vmatmul.mubr.bf16.gmra.mrb[0].mxu0 %v1805
        %v2100 = vpop.f32.mrb[0].mxu0
        %v2101 = vadd.f32 %v1754, %v2100
        %v2102 = vpop.f32.mrb[0].mxu0
        %v2103 = vadd.f32 %v1754, %v2102
        %v2104 = vpop.f32.mrb[0].mxu0
        %v2105 = vadd.f32 %v1759, %v2104
        %v2106 = vpop.f32.mrb[0].mxu0
        %v2107 = vadd.f32 %v1759, %v2106
        %2108 = vmatprep.mubr.bf16.mxu0 0
        %2109 = vmatmul.mubr.bf16.gmra.mrb[0].mxu0 %v1808
        %v2110 = vpop.f32.mrb[0].mxu0
        %v2111 = vadd.f32 %v1764, %v2110
        %v2112 = vpop.f32.mrb[0].mxu0
        %v2113 = vadd.f32 %v1764, %v2112
        %v2114 = vpop.f32.mrb[0].mxu0
        %v2115 = vadd.f32 %v1769, %v2114
        %v2116 = vpop.f32.mrb[0].mxu0
        %v2117 = vadd.f32 %v1769, %v2116
        %2118 = vmatprep.mubr.bf16.mxu0 0
        %2119 = vmatmul.mubr.bf16.gmra.mrb[0].mxu0 %v1811
        %v2120 = vpop.f32.mrb[0].mxu0
        %v2121 = vadd.f32 %v1774, %v2120
        %v2122 = vpop.f32.mrb[0].mxu0
        %v2123 = vadd.f32 %v1774, %v2122
        %v2124 = vpop.f32.mrb[0].mxu0
        %v2125 = vadd.f32 %v1779, %v2124
        %v2126 = vpop.f32.mrb[0].mxu0
        %v2127 = vadd.f32 %v1779, %v2126
        %2128 = vdwg.mxu0
        %v2129 = vmax.f32 %v1872, 0.0
        %v2130 = vmax.f32 %v1874, 0.0
        %v2131 = vmax.f32 %v1945, 0.0
        %v2132 = vmax.f32 %v1947, 0.0
        %v2133 = vmax.f32 %v2018, 0.0
        %v2134 = vmax.f32 %v2020, 0.0
        %v2135 = vmax.f32 %v2091, 0.0
        %v2136 = vmax.f32 %v2093, 0.0
        %v2137 = vmax.f32 %v1876, 0.0
        %v2138 = vmax.f32 %v1878, 0.0
        %v2139 = vmax.f32 %v1949, 0.0
        %v2140 = vmax.f32 %v1951, 0.0
        %v2141 = vmax.f32 %v2022, 0.0
        %v2142 = vmax.f32 %v2024, 0.0
        %v2143 = vmax.f32 %v2095, 0.0
        %v2144 = vmax.f32 %v2097, 0.0
        %v2145 = vmax.f32 %v1882, 0.0
        %v2146 = vmax.f32 %v1884, 0.0
        %v2147 = vmax.f32 %v1955, 0.0
        %v2148 = vmax.f32 %v1957, 0.0
        %v2149 = vmax.f32 %v2028, 0.0
        %v2150 = vmax.f32 %v2030, 0.0
        %v2151 = vmax.f32 %v2101, 0.0
        %v2152 = vmax.f32 %v2103, 0.0
        %v2153 = vmax.f32 %v1886, 0.0
        %v2154 = vmax.f32 %v1888, 0.0
        %v2155 = vmax.f32 %v1959, 0.0
        %v2156 = vmax.f32 %v1961, 0.0
        %v2157 = vmax.f32 %v2032, 0.0
        %v2158 = vmax.f32 %v2034, 0.0
        %v2159 = vmax.f32 %v2105, 0.0
        %v2160 = vmax.f32 %v2107, 0.0
        %v2161 = vmax.f32 %v1892, 0.0
        %v2162 = vmax.f32 %v1894, 0.0
        %v2163 = vmax.f32 %v1965, 0.0
        %v2164 = vmax.f32 %v1967, 0.0
        %v2165 = vmax.f32 %v2038, 0.0
        %v2166 = vmax.f32 %v2040, 0.0
        %v2167 = vmax.f32 %v2111, 0.0
        %v2168 = vmax.f32 %v2113, 0.0
        %v2169 = vmax.f32 %v1896, 0.0
        %v2170 = vmax.f32 %v1898, 0.0
        %v2171 = vmax.f32 %v1969, 0.0
        %v2172 = vmax.f32 %v1971, 0.0
        %v2173 = vmax.f32 %v2042, 0.0
        %v2174 = vmax.f32 %v2044, 0.0
        %v2175 = vmax.f32 %v2115, 0.0
        %v2176 = vmax.f32 %v2117, 0.0
        %v2177 = vmax.f32 %v1902, 0.0
        %v2178 = vmax.f32 %v1904, 0.0
        %v2179 = vmax.f32 %v1975, 0.0
        %v2180 = vmax.f32 %v1977, 0.0
        %v2181 = vmax.f32 %v2048, 0.0
        %v2182 = vmax.f32 %v2050, 0.0
        %v2183 = vmax.f32 %v2121, 0.0
        %v2184 = vmax.f32 %v2123, 0.0
        %v2185 = vmax.f32 %v1906, 0.0
        %v2186 = vmax.f32 %v1908, 0.0
        %v2187 = vmax.f32 %v1979, 0.0
        %v2188 = vmax.f32 %v1981, 0.0
        %v2189 = vmax.f32 %v2052, 0.0
        %v2190 = vmax.f32 %v2054, 0.0
        %v2191 = vmax.f32 %v2125, 0.0
        %v2192 = vmax.f32 %v2127, 0.0
        %v2193 = vld [vmem:[%s10] sm:$0xf]
        %v2194 = vld [vmem:[%s10 + $0x4] sm:$0xf]
        %v2195 = vpack.c.bf16 %v2137, %v2129
        %v2196 = vpack.c.bf16 %v2138, %v2130
        %v2197 = vpack.c.bf16 %v2139, %v2131
        %v2198 = vpack.c.bf16 %v2140, %v2132
        %v2199 = vpack.c.bf16 %v2141, %v2133
        %v2200 = vpack.c.bf16 %v2142, %v2134
        %v2201 = vpack.c.bf16 %v2143, %v2135
        %v2202 = vpack.c.bf16 %v2144, %v2136
        %v2203 = vpack.c.bf16 %v2153, %v2145
        %v2204 = vpack.c.bf16 %v2154, %v2146
        %v2205 = vpack.c.bf16 %v2155, %v2147
        %v2206 = vpack.c.bf16 %v2156, %v2148
        %v2207 = vpack.c.bf16 %v2157, %v2149
        %v2208 = vpack.c.bf16 %v2158, %v2150
        %v2209 = vpack.c.bf16 %v2159, %v2151
        %v2210 = vpack.c.bf16 %v2160, %v2152
        %v2211 = vpack.c.bf16 %v2169, %v2161
        %v2212 = vpack.c.bf16 %v2170, %v2162
        %v2213 = vpack.c.bf16 %v2171, %v2163
        %v2214 = vpack.c.bf16 %v2172, %v2164
        %v2215 = vpack.c.bf16 %v2173, %v2165
        %v2216 = vpack.c.bf16 %v2174, %v2166
        %v2217 = vpack.c.bf16 %v2175, %v2167
        %v2218 = vpack.c.bf16 %v2176, %v2168
        %v2219 = vpack.c.bf16 %v2185, %v2177
        %v2220 = vpack.c.bf16 %v2186, %v2178
        %v2221 = vpack.c.bf16 %v2187, %v2179
        %v2222 = vpack.c.bf16 %v2188, %v2180
        %v2223 = vpack.c.bf16 %v2189, %v2181
        %v2224 = vpack.c.bf16 %v2190, %v2182
        %v2225 = vpack.c.bf16 %v2191, %v2183
        %v2226 = vpack.c.bf16 %v2192, %v2184
        %v2227 = vld [vmem:[%s11] sm:$0xff]
        %v2228 = vld [vmem:[%s11 + $0x8] sm:$0xff]
        %2230 = vset.pattern.permute.xlu0 0
        %2231 = vperm.xlu0 %2230, %v2227
        %v2232 = vpop.permute.xlu0 %2231
        %2235 = vset.pattern.permute.xlu0 0
        %2236 = vperm.xlu0 %2235, %v2228
        %v2237 = vpop.permute.xlu0 %2236
        %v2241 = vunpack.c.l.b16 %v2193
        %v2242 = vunpack.c.l.b16 %v2194
        %v2243 = vpack.c.b16 %v2242, %v2241
        %v2245 = vsel %vm1106, %v2243, 0
        %2247 = vmatprep.subr.bf16.mxu0 %v2196
        %2248 = vmatpush1.bf16.msra.mxu0 %v2195
        %2249 = vmatprep.subr.bf16.mxu0 %v2204
        %2250 = vmatpush1.bf16.msra.mxu0 %v2203
        %2251 = vmatprep.subr.bf16.mxu0 %v2212
        %2252 = vmatpush1.bf16.msra.mxu0 %v2211
        %2253 = vmatprep.subr.bf16.mxu0 %v2220
        %2254 = vmatpush1.bf16.msra.mxu0 %v2219
        %2255 = vmatprep.subr.bf16.mxu0 0
        %2256 = vmatpush1.bf16.msra.mxu0 0
        %2257 = vmatprep.subr.bf16.mxu0 0
        %2258 = vmatpush1.bf16.msra.mxu0 0
        %2259 = vmatprep.subr.bf16.mxu0 0
        %2260 = vmatpush1.bf16.msra.mxu0 0
        %2261 = vmatprep.subr.bf16.mxu0 0
        %2262 = vmatpush1.bf16.msra.mxu0 0
        %2263 = vmatprep.subr.bf16.mxu0 0
        %2264 = vmatpush1.bf16.msra.mxu0 0
        %2265 = vmatprep.subr.bf16.mxu0 0
        %2266 = vmatpush1.bf16.msra.mxu0 0
        %2267 = vmatprep.subr.bf16.mxu0 0
        %2268 = vmatpush1.bf16.msra.mxu0 0
        %2269 = vmatprep.subr.bf16.mxu0 0
        %2270 = vmatpush1.bf16.msra.mxu0 0
        %2271 = vmatprep.subr.bf16.mxu0 0
        %2272 = vmatpush1.bf16.msra.mxu0 0
        %2273 = vmatprep.subr.bf16.mxu0 0
        %2274 = vmatpush1.bf16.msra.mxu0 0
        %2275 = vmatprep.subr.bf16.mxu0 0
        %2276 = vmatpush1.bf16.msra.mxu0 0
        %2277 = vmatprep.subr.bf16.mxu0 0
        %2278 = vmatpush1.bf16.msra.mxu0 0
        %2279 = vmatprep.mubr.bf16.mxu0 0
        %2280 = vmatmul.mubr.bf16.gmra.mrb[0].mxu0 %v2245
        %v2281 = vpop.f32.mrb[0].mxu0
        %v2282 = vadd.f32 %v2232, %v2281
        %v2283 = vpop.f32.mrb[0].mxu0
        %v2284 = vadd.f32 %v2232, %v2283
        %v2285 = vpop.f32.mrb[0].mxu0
        %v2286 = vadd.f32 %v2237, %v2285
        %v2287 = vpop.f32.mrb[0].mxu0
        %v2288 = vadd.f32 %v2237, %v2287
        %2289 = vdwg.mxu0
        %2290 = vmatprep.subr.bf16.mxu0 %v2198
        %2291 = vmatpush1.bf16.msra.mxu0 %v2197
        %2292 = vmatprep.subr.bf16.mxu0 %v2206
        %2293 = vmatpush1.bf16.msra.mxu0 %v2205
        %2294 = vmatprep.subr.bf16.mxu0 %v2214
        %2295 = vmatpush1.bf16.msra.mxu0 %v2213
        %2296 = vmatprep.subr.bf16.mxu0 %v2222
        %2297 = vmatpush1.bf16.msra.mxu0 %v2221
        %2298 = vmatprep.subr.bf16.mxu0 0
        %2299 = vmatpush1.bf16.msra.mxu0 0
        %2300 = vmatprep.subr.bf16.mxu0 0
        %2301 = vmatpush1.bf16.msra.mxu0 0
        %2302 = vmatprep.subr.bf16.mxu0 0
        %2303 = vmatpush1.bf16.msra.mxu0 0
        %2304 = vmatprep.subr.bf16.mxu0 0
        %2305 = vmatpush1.bf16.msra.mxu0 0
        %2306 = vmatprep.subr.bf16.mxu0 0
        %2307 = vmatpush1.bf16.msra.mxu0 0
        %2308 = vmatprep.subr.bf16.mxu0 0
        %2309 = vmatpush1.bf16.msra.mxu0 0
        %2310 = vmatprep.subr.bf16.mxu0 0
        %2311 = vmatpush1.bf16.msra.mxu0 0
        %2312 = vmatprep.subr.bf16.mxu0 0
        %2313 = vmatpush1.bf16.msra.mxu0 0
        %2314 = vmatprep.subr.bf16.mxu0 0
        %2315 = vmatpush1.bf16.msra.mxu0 0
        %2316 = vmatprep.subr.bf16.mxu0 0
        %2317 = vmatpush1.bf16.msra.mxu0 0
        %2318 = vmatprep.subr.bf16.mxu0 0
        %2319 = vmatpush1.bf16.msra.mxu0 0
        %2320 = vmatprep.subr.bf16.mxu0 0
        %2321 = vmatpush1.bf16.msra.mxu0 0
        %2322 = vmatprep.mubr.bf16.mxu0 0
        %2323 = vmatmul.mubr.bf16.gmra.mrb[0].mxu0 %v2245
        %v2324 = vpop.f32.mrb[0].mxu0
        %v2325 = vadd.f32 %v2232, %v2324
        %v2326 = vpop.f32.mrb[0].mxu0
        %v2327 = vadd.f32 %v2232, %v2326
        %v2328 = vpop.f32.mrb[0].mxu0
        %v2329 = vadd.f32 %v2237, %v2328
        %v2330 = vpop.f32.mrb[0].mxu0
        %v2331 = vadd.f32 %v2237, %v2330
        %2332 = vdwg.mxu0
        %2333 = vmatprep.subr.bf16.mxu0 %v2200
        %2334 = vmatpush1.bf16.msra.mxu0 %v2199
        %2335 = vmatprep.subr.bf16.mxu0 %v2208
        %2336 = vmatpush1.bf16.msra.mxu0 %v2207
        %2337 = vmatprep.subr.bf16.mxu0 %v2216
        %2338 = vmatpush1.bf16.msra.mxu0 %v2215
        %2339 = vmatprep.subr.bf16.mxu0 %v2224
        %2340 = vmatpush1.bf16.msra.mxu0 %v2223
        %2341 = vmatprep.subr.bf16.mxu0 0
        %2342 = vmatpush1.bf16.msra.mxu0 0
        %2343 = vmatprep.subr.bf16.mxu0 0
        %2344 = vmatpush1.bf16.msra.mxu0 0
        %2345 = vmatprep.subr.bf16.mxu0 0
        %2346 = vmatpush1.bf16.msra.mxu0 0
        %2347 = vmatprep.subr.bf16.mxu0 0
        %2348 = vmatpush1.bf16.msra.mxu0 0
        %2349 = vmatprep.subr.bf16.mxu0 0
        %2350 = vmatpush1.bf16.msra.mxu0 0
        %2351 = vmatprep.subr.bf16.mxu0 0
        %2352 = vmatpush1.bf16.msra.mxu0 0
        %2353 = vmatprep.subr.bf16.mxu0 0
        %2354 = vmatpush1.bf16.msra.mxu0 0
        %2355 = vmatprep.subr.bf16.mxu0 0
        %2356 = vmatpush1.bf16.msra.mxu0 0
        %2357 = vmatprep.subr.bf16.mxu0 0
        %2358 = vmatpush1.bf16.msra.mxu0 0
        %2359 = vmatprep.subr.bf16.mxu0 0
        %2360 = vmatpush1.bf16.msra.mxu0 0
        %2361 = vmatprep.subr.bf16.mxu0 0
        %2362 = vmatpush1.bf16.msra.mxu0 0
        %2363 = vmatprep.subr.bf16.mxu0 0
        %2364 = vmatpush1.bf16.msra.mxu0 0
        %2365 = vmatprep.mubr.bf16.mxu0 0
        %2366 = vmatmul.mubr.bf16.gmra.mrb[0].mxu0 %v2245
        %v2367 = vpop.f32.mrb[0].mxu0
        %v2368 = vadd.f32 %v2232, %v2367
        %v2369 = vpop.f32.mrb[0].mxu0
        %v2370 = vadd.f32 %v2232, %v2369
        %v2371 = vpop.f32.mrb[0].mxu0
        %v2372 = vadd.f32 %v2237, %v2371
        %v2373 = vpop.f32.mrb[0].mxu0
        %v2374 = vadd.f32 %v2237, %v2373
        %2375 = vdwg.mxu0
        %2376 = vmatprep.subr.bf16.mxu0 %v2202
        %2377 = vmatpush1.bf16.msra.mxu0 %v2201
        %2378 = vmatprep.subr.bf16.mxu0 %v2210
        %2379 = vmatpush1.bf16.msra.mxu0 %v2209
        %2380 = vmatprep.subr.bf16.mxu0 %v2218
        %2381 = vmatpush1.bf16.msra.mxu0 %v2217
        %2382 = vmatprep.subr.bf16.mxu0 %v2226
        %2383 = vmatpush1.bf16.msra.mxu0 %v2225
        %2384 = vmatprep.subr.bf16.mxu0 0
        %2385 = vmatpush1.bf16.msra.mxu0 0
        %2386 = vmatprep.subr.bf16.mxu0 0
        %2387 = vmatpush1.bf16.msra.mxu0 0
        %2388 = vmatprep.subr.bf16.mxu0 0
        %2389 = vmatpush1.bf16.msra.mxu0 0
        %2390 = vmatprep.subr.bf16.mxu0 0
        %2391 = vmatpush1.bf16.msra.mxu0 0
        %2392 = vmatprep.subr.bf16.mxu0 0
        %2393 = vmatpush1.bf16.msra.mxu0 0
        %2394 = vmatprep.subr.bf16.mxu0 0
        %2395 = vmatpush1.bf16.msra.mxu0 0
        %2396 = vmatprep.subr.bf16.mxu0 0
        %2397 = vmatpush1.bf16.msra.mxu0 0
        %2398 = vmatprep.subr.bf16.mxu0 0
        %2399 = vmatpush1.bf16.msra.mxu0 0
        %2400 = vmatprep.subr.bf16.mxu0 0
        %2401 = vmatpush1.bf16.msra.mxu0 0
        %2402 = vmatprep.subr.bf16.mxu0 0
        %2403 = vmatpush1.bf16.msra.mxu0 0
        %2404 = vmatprep.subr.bf16.mxu0 0
        %2405 = vmatpush1.bf16.msra.mxu0 0
        %2406 = vmatprep.subr.bf16.mxu0 0
        %2407 = vmatpush1.bf16.msra.mxu0 0
        %2408 = vmatprep.mubr.bf16.mxu0 0
        %2409 = vmatmul.mubr.bf16.gmra.mrb[0].mxu0 %v2245
        %v2410 = vpop.f32.mrb[0].mxu0
        %v2411 = vadd.f32 %v2232, %v2410
        %v2412 = vpop.f32.mrb[0].mxu0
        %v2413 = vadd.f32 %v2232, %v2412
        %v2414 = vpop.f32.mrb[0].mxu0
        %v2415 = vadd.f32 %v2237, %v2414
        %v2416 = vpop.f32.mrb[0].mxu0
        %v2417 = vadd.f32 %v2237, %v2416
        %2418 = vdwg.mxu0
        %v2419 = vmax.f32 %v2282, %v2286
        %v2420 = vrot.slane %v2419, 4
        %v2421 = vmax.f32 %v2419, %v2420
        %v2422 = vrot.slane %v2421, 2
        %v2423 = vmax.f32 %v2421, %v2422
        %v2424 = vrot.slane %v2423, 1
        %v2425 = vmax.f32 %v2423, %v2424
        %v2426 = vmax.f32 %v2284, %v2288
        %v2427 = vrot.slane %v2426, 4
        %v2428 = vmax.f32 %v2426, %v2427
        %v2429 = vrot.slane %v2428, 2
        %v2430 = vmax.f32 %v2428, %v2429
        %v2431 = vrot.slane %v2430, 1
        %v2432 = vmax.f32 %v2430, %v2431
        %v2433 = vmax.f32 %v2325, %v2329
        %v2434 = vrot.slane %v2433, 4
        %v2435 = vmax.f32 %v2433, %v2434
        %v2436 = vrot.slane %v2435, 2
        %v2437 = vmax.f32 %v2435, %v2436
        %v2438 = vrot.slane %v2437, 1
        %v2439 = vmax.f32 %v2437, %v2438
        %v2440 = vmax.f32 %v2327, %v2331
        %v2441 = vrot.slane %v2440, 4
        %v2442 = vmax.f32 %v2440, %v2441
        %v2443 = vrot.slane %v2442, 2
        %v2444 = vmax.f32 %v2442, %v2443
        %v2445 = vrot.slane %v2444, 1
        %v2446 = vmax.f32 %v2444, %v2445
        %v2447 = vmax.f32 %v2368, %v2372
        %v2448 = vrot.slane %v2447, 4
        %v2449 = vmax.f32 %v2447, %v2448
        %v2450 = vrot.slane %v2449, 2
        %v2451 = vmax.f32 %v2449, %v2450
        %v2452 = vrot.slane %v2451, 1
        %v2453 = vmax.f32 %v2451, %v2452
        %v2454 = vmax.f32 %v2370, %v2374
        %v2455 = vrot.slane %v2454, 4
        %v2456 = vmax.f32 %v2454, %v2455
        %v2457 = vrot.slane %v2456, 2
        %v2458 = vmax.f32 %v2456, %v2457
        %v2459 = vrot.slane %v2458, 1
        %v2460 = vmax.f32 %v2458, %v2459
        %v2461 = vmax.f32 %v2411, %v2415
        %v2462 = vrot.slane %v2461, 4
        %v2463 = vmax.f32 %v2461, %v2462
        %v2464 = vrot.slane %v2463, 2
        %v2465 = vmax.f32 %v2463, %v2464
        %v2466 = vrot.slane %v2465, 1
        %v2467 = vmax.f32 %v2465, %v2466
        %v2468 = vmax.f32 %v2413, %v2417
        %v2469 = vrot.slane %v2468, 4
        %v2470 = vmax.f32 %v2468, %v2469
        %v2471 = vrot.slane %v2470, 2
        %v2472 = vmax.f32 %v2470, %v2471
        %v2473 = vrot.slane %v2472, 1
        %v2474 = vmax.f32 %v2472, %v2473
        %v2475 = vsub.f32 %v2282, %v2425
        %v2476 = vsub.f32 %v2284, %v2432
        %v2477 = vsub.f32 %v2325, %v2439
        %v2478 = vsub.f32 %v2327, %v2446
        %v2479 = vsub.f32 %v2368, %v2453
        %v2480 = vsub.f32 %v2370, %v2460
        %v2481 = vsub.f32 %v2411, %v2467
        %v2482 = vsub.f32 %v2413, %v2474
        %v2483 = vsub.f32 %v2286, %v2425
        %v2484 = vsub.f32 %v2288, %v2432
        %v2485 = vsub.f32 %v2329, %v2439
        %v2486 = vsub.f32 %v2331, %v2446
        %v2487 = vsub.f32 %v2372, %v2453
        %v2488 = vsub.f32 %v2374, %v2460
        %v2489 = vsub.f32 %v2415, %v2467
        %v2490 = vsub.f32 %v2417, %v2474
        %v2491 = vmul.f32 %v2475, 1.442695
        %v2492 = vpow.pop %v2491
        %v2493 = vmul.f32 %v2476, 1.442695
        %v2494 = vpow.pop %v2493
        %v2495 = vmul.f32 %v2477, 1.442695
        %v2496 = vpow.pop %v2495
        %v2497 = vmul.f32 %v2478, 1.442695
        %v2498 = vpow.pop %v2497
        %v2499 = vmul.f32 %v2479, 1.442695
        %v2500 = vpow.pop %v2499
        %v2501 = vmul.f32 %v2480, 1.442695
        %v2502 = vpow.pop %v2501
        %v2503 = vmul.f32 %v2481, 1.442695
        %v2504 = vpow.pop %v2503
        %v2505 = vmul.f32 %v2482, 1.442695
        %v2506 = vpow.pop %v2505
        %v2507 = vmul.f32 %v2483, 1.442695
        %v2508 = vpow.pop %v2507
        %v2509 = vmul.f32 %v2484, 1.442695
        %v2510 = vpow.pop %v2509
        %v2511 = vmul.f32 %v2485, 1.442695
        %v2512 = vpow.pop %v2511
        %v2513 = vmul.f32 %v2486, 1.442695
        %v2514 = vpow.pop %v2513
        %v2515 = vmul.f32 %v2487, 1.442695
        %v2516 = vpow.pop %v2515
        %v2517 = vmul.f32 %v2488, 1.442695
        %v2518 = vpow.pop %v2517
        %v2519 = vmul.f32 %v2489, 1.442695
        %v2520 = vpow.pop %v2519
        %v2521 = vmul.f32 %v2490, 1.442695
        %v2522 = vpow.pop %v2521
        %v2523 = vadd.f32 %v2492, %v2508
        %v2524 = vrot.slane %v2523, 4
        %v2525 = vadd.f32 %v2523, %v2524
        %v2526 = vrot.slane %v2525, 2
        %v2527 = vadd.f32 %v2525, %v2526
        %v2528 = vrot.slane %v2527, 1
        %v2529 = vadd.f32 %v2527, %v2528
        %v2530 = vadd.f32 %v2494, %v2510
        %v2531 = vrot.slane %v2530, 4
        %v2532 = vadd.f32 %v2530, %v2531
        %v2533 = vrot.slane %v2532, 2
        %v2534 = vadd.f32 %v2532, %v2533
        %v2535 = vrot.slane %v2534, 1
        %v2536 = vadd.f32 %v2534, %v2535
        %v2537 = vadd.f32 %v2496, %v2512
        %v2538 = vrot.slane %v2537, 4
        %v2539 = vadd.f32 %v2537, %v2538
        %v2540 = vrot.slane %v2539, 2
        %v2541 = vadd.f32 %v2539, %v2540
        %v2542 = vrot.slane %v2541, 1
        %v2543 = vadd.f32 %v2541, %v2542
        %v2544 = vadd.f32 %v2498, %v2514
        %v2545 = vrot.slane %v2544, 4
        %v2546 = vadd.f32 %v2544, %v2545
        %v2547 = vrot.slane %v2546, 2
        %v2548 = vadd.f32 %v2546, %v2547
        %v2549 = vrot.slane %v2548, 1
        %v2550 = vadd.f32 %v2548, %v2549
        %v2551 = vadd.f32 %v2500, %v2516
        %v2552 = vrot.slane %v2551, 4
        %v2553 = vadd.f32 %v2551, %v2552
        %v2554 = vrot.slane %v2553, 2
        %v2555 = vadd.f32 %v2553, %v2554
        %v2556 = vrot.slane %v2555, 1
        %v2557 = vadd.f32 %v2555, %v2556
        %v2558 = vadd.f32 %v2502, %v2518
        %v2559 = vrot.slane %v2558, 4
        %v2560 = vadd.f32 %v2558, %v2559
        %v2561 = vrot.slane %v2560, 2
        %v2562 = vadd.f32 %v2560, %v2561
        %v2563 = vrot.slane %v2562, 1
        %v2564 = vadd.f32 %v2562, %v2563
        %v2565 = vadd.f32 %v2504, %v2520
        %v2566 = vrot.slane %v2565, 4
        %v2567 = vadd.f32 %v2565, %v2566
        %v2568 = vrot.slane %v2567, 2
        %v2569 = vadd.f32 %v2567, %v2568
        %v2570 = vrot.slane %v2569, 1
        %v2571 = vadd.f32 %v2569, %v2570
        %v2572 = vadd.f32 %v2506, %v2522
        %v2573 = vrot.slane %v2572, 4
        %v2574 = vadd.f32 %v2572, %v2573
        %v2575 = vrot.slane %v2574, 2
        %v2576 = vadd.f32 %v2574, %v2575
        %v2577 = vrot.slane %v2576, 1
        %v2578 = vadd.f32 %v2576, %v2577
        %v2579 = vrcp.pop %v2529
        %v2580 = vrcp.pop %v2536
        %v2581 = vrcp.pop %v2543
        %v2582 = vrcp.pop %v2550
        %v2583 = vrcp.pop %v2557
        %v2584 = vrcp.pop %v2564
        %v2585 = vrcp.pop %v2571
        %v2586 = vrcp.pop %v2578
        %v2587 = vmul.f32 %v2492, %v2579
        %v2588 = vmul.f32 %v2494, %v2580
        %v2589 = vmul.f32 %v2496, %v2581
        %v2590 = vmul.f32 %v2498, %v2582
        %v2591 = vmul.f32 %v2500, %v2583
        %v2592 = vmul.f32 %v2502, %v2584
        %v2593 = vmul.f32 %v2504, %v2585
        %v2594 = vmul.f32 %v2506, %v2586
        %v2595 = vmul.f32 %v2508, %v2579
        %v2596 = vmul.f32 %v2510, %v2580
        %v2597 = vmul.f32 %v2512, %v2581
        %v2598 = vmul.f32 %v2514, %v2582
        %v2599 = vmul.f32 %v2516, %v2583
        %v2600 = vmul.f32 %v2518, %v2584
        %v2601 = vmul.f32 %v2520, %v2585
        %v2602 = vmul.f32 %v2522, %v2586
        %v2603 = vld [vmem:[%s12] sm:$0xf]
        %v2604 = vld [vmem:[%s12 + $0x4] sm:$0x3]
        %v2605 = vpack.c.bf16 %v2595, %v2587
        %v2606 = vpack.c.bf16 %v2596, %v2588
        %v2607 = vpack.c.bf16 %v2597, %v2589
        %v2608 = vpack.c.bf16 %v2598, %v2590
        %v2609 = vpack.c.bf16 %v2599, %v2591
        %v2610 = vpack.c.bf16 %v2600, %v2592
        %v2611 = vpack.c.bf16 %v2601, %v2593
        %v2612 = vpack.c.bf16 %v2602, %v2594
        %v2615 = vunpack.c.l.b16 %v2603
        %v2616 = vunpack.c.l.b16 %v2604
        %v2617 = vpack.c.b16 %v2616, %v2615
        %vm2618 = vcmask 130048
        %v2620 = vsel %vm2618, %v2617, 0
        %2622 = vmatprep.subr.bf16.mxu0 %v2606
        %2623 = vmatpush1.bf16.msra.mxu0 %v2605
        %2624 = vmatprep.subr.bf16.mxu0 0
        %2625 = vmatpush1.bf16.msra.mxu0 0
        %2626 = vmatprep.subr.bf16.mxu0 0
        %2627 = vmatpush1.bf16.msra.mxu0 0
        %2628 = vmatprep.subr.bf16.mxu0 0
        %2629 = vmatpush1.bf16.msra.mxu0 0
        %2630 = vmatprep.subr.bf16.mxu0 0
        %2631 = vmatpush1.bf16.msra.mxu0 0
        %2632 = vmatprep.subr.bf16.mxu0 0
        %2633 = vmatpush1.bf16.msra.mxu0 0
        %2634 = vmatprep.subr.bf16.mxu0 0
        %2635 = vmatpush1.bf16.msra.mxu0 0
        %2636 = vmatprep.subr.bf16.mxu0 0
        %2637 = vmatpush1.bf16.msra.mxu0 0
        %2638 = vmatprep.subr.bf16.mxu0 0
        %2639 = vmatpush1.bf16.msra.mxu0 0
        %2640 = vmatprep.subr.bf16.mxu0 0
        %2641 = vmatpush1.bf16.msra.mxu0 0
        %2642 = vmatprep.subr.bf16.mxu0 0
        %2643 = vmatpush1.bf16.msra.mxu0 0
        %2644 = vmatprep.subr.bf16.mxu0 0
        %2645 = vmatpush1.bf16.msra.mxu0 0
        %2646 = vmatprep.subr.bf16.mxu0 0
        %2647 = vmatpush1.bf16.msra.mxu0 0
        %2648 = vmatprep.subr.bf16.mxu0 0
        %2649 = vmatpush1.bf16.msra.mxu0 0
        %2650 = vmatprep.subr.bf16.mxu0 0
        %2651 = vmatpush1.bf16.msra.mxu0 0
        %2652 = vmatprep.subr.bf16.mxu0 0
        %2653 = vmatpush1.bf16.msra.mxu0 0
        %2654 = vmatprep.mubr.bf16.mxu0 0
        %2655 = vmatmul.mubr.bf16.gmra.mrb[0].mxu0 %v2620
        %v2656 = vpop.f32.mrb[0].mxu0
        %v2657 = vadd.f32 0.0, %v2656
        %v2658 = vpop.f32.mrb[0].mxu0
        %v2659 = vadd.f32 0.0, %v2658
        %v2660 = vpop.f32.mrb[0].mxu0
        %v2661 = vadd.f32 0.0, %v2660
        %v2662 = vpop.f32.mrb[0].mxu0
        %v2663 = vadd.f32 0.0, %v2662
        %2664 = vdwg.mxu0
        %2665 = vmatprep.subr.bf16.mxu0 %v2608
        %2666 = vmatpush1.bf16.msra.mxu0 %v2607
        %2667 = vmatprep.subr.bf16.mxu0 0
        %2668 = vmatpush1.bf16.msra.mxu0 0
        %2669 = vmatprep.subr.bf16.mxu0 0
        %2670 = vmatpush1.bf16.msra.mxu0 0
        %2671 = vmatprep.subr.bf16.mxu0 0
        %2672 = vmatpush1.bf16.msra.mxu0 0
        %2673 = vmatprep.subr.bf16.mxu0 0
        %2674 = vmatpush1.bf16.msra.mxu0 0
        %2675 = vmatprep.subr.bf16.mxu0 0
        %2676 = vmatpush1.bf16.msra.mxu0 0
        %2677 = vmatprep.subr.bf16.mxu0 0
        %2678 = vmatpush1.bf16.msra.mxu0 0
        %2679 = vmatprep.subr.bf16.mxu0 0
        %2680 = vmatpush1.bf16.msra.mxu0 0
        %2681 = vmatprep.subr.bf16.mxu0 0
        %2682 = vmatpush1.bf16.msra.mxu0 0
        %2683 = vmatprep.subr.bf16.mxu0 0
        %2684 = vmatpush1.bf16.msra.mxu0 0
        %2685 = vmatprep.subr.bf16.mxu0 0
        %2686 = vmatpush1.bf16.msra.mxu0 0
        %2687 = vmatprep.subr.bf16.mxu0 0
        %2688 = vmatpush1.bf16.msra.mxu0 0
        %2689 = vmatprep.subr.bf16.mxu0 0
        %2690 = vmatpush1.bf16.msra.mxu0 0
        %2691 = vmatprep.subr.bf16.mxu0 0
        %2692 = vmatpush1.bf16.msra.mxu0 0
        %2693 = vmatprep.subr.bf16.mxu0 0
        %2694 = vmatpush1.bf16.msra.mxu0 0
        %2695 = vmatprep.subr.bf16.mxu0 0
        %2696 = vmatpush1.bf16.msra.mxu0 0
        %2697 = vmatprep.mubr.bf16.mxu0 0
        %2698 = vmatmul.mubr.bf16.gmra.mrb[0].mxu0 %v2620
        %v2699 = vpop.f32.mrb[0].mxu0
        %v2700 = vadd.f32 0.0, %v2699
        %v2701 = vpop.f32.mrb[0].mxu0
        %v2702 = vadd.f32 0.0, %v2701
        %v2703 = vpop.f32.mrb[0].mxu0
        %v2704 = vadd.f32 0.0, %v2703
        %v2705 = vpop.f32.mrb[0].mxu0
        %v2706 = vadd.f32 0.0, %v2705
        %2707 = vdwg.mxu0
        %2708 = vmatprep.subr.bf16.mxu0 %v2610
        %2709 = vmatpush1.bf16.msra.mxu0 %v2609
        %2710 = vmatprep.subr.bf16.mxu0 0
        %2711 = vmatpush1.bf16.msra.mxu0 0
        %2712 = vmatprep.subr.bf16.mxu0 0
        %2713 = vmatpush1.bf16.msra.mxu0 0
        %2714 = vmatprep.subr.bf16.mxu0 0
        %2715 = vmatpush1.bf16.msra.mxu0 0
        %2716 = vmatprep.subr.bf16.mxu0 0
        %2717 = vmatpush1.bf16.msra.mxu0 0
        %2718 = vmatprep.subr.bf16.mxu0 0
        %2719 = vmatpush1.bf16.msra.mxu0 0
        %2720 = vmatprep.subr.bf16.mxu0 0
        %2721 = vmatpush1.bf16.msra.mxu0 0
        %2722 = vmatprep.subr.bf16.mxu0 0
        %2723 = vmatpush1.bf16.msra.mxu0 0
        %2724 = vmatprep.subr.bf16.mxu0 0
        %2725 = vmatpush1.bf16.msra.mxu0 0
        %2726 = vmatprep.subr.bf16.mxu0 0
        %2727 = vmatpush1.bf16.msra.mxu0 0
        %2728 = vmatprep.subr.bf16.mxu0 0
        %2729 = vmatpush1.bf16.msra.mxu0 0
        %2730 = vmatprep.subr.bf16.mxu0 0
        %2731 = vmatpush1.bf16.msra.mxu0 0
        %2732 = vmatprep.subr.bf16.mxu0 0
        %2733 = vmatpush1.bf16.msra.mxu0 0
        %2734 = vmatprep.subr.bf16.mxu0 0
        %2735 = vmatpush1.bf16.msra.mxu0 0
        %2736 = vmatprep.subr.bf16.mxu0 0
        %2737 = vmatpush1.bf16.msra.mxu0 0
        %2738 = vmatprep.subr.bf16.mxu0 0
        %2739 = vmatpush1.bf16.msra.mxu0 0
        %2740 = vmatprep.mubr.bf16.mxu0 0
        %2741 = vmatmul.mubr.bf16.gmra.mrb[0].mxu0 %v2620
        %v2742 = vpop.f32.mrb[0].mxu0
        %v2743 = vadd.f32 0.0, %v2742
        %v2744 = vpop.f32.mrb[0].mxu0
        %v2745 = vadd.f32 0.0, %v2744
        %v2746 = vpop.f32.mrb[0].mxu0
        %v2747 = vadd.f32 0.0, %v2746
        %v2748 = vpop.f32.mrb[0].mxu0
        %v2749 = vadd.f32 0.0, %v2748
        %2750 = vdwg.mxu0
        %2751 = vmatprep.subr.bf16.mxu0 %v2612
        %2752 = vmatpush1.bf16.msra.mxu0 %v2611
        %2753 = vmatprep.subr.bf16.mxu0 0
        %2754 = vmatpush1.bf16.msra.mxu0 0
        %2755 = vmatprep.subr.bf16.mxu0 0
        %2756 = vmatpush1.bf16.msra.mxu0 0
        %2757 = vmatprep.subr.bf16.mxu0 0
        %2758 = vmatpush1.bf16.msra.mxu0 0
        %2759 = vmatprep.subr.bf16.mxu0 0
        %2760 = vmatpush1.bf16.msra.mxu0 0
        %2761 = vmatprep.subr.bf16.mxu0 0
        %2762 = vmatpush1.bf16.msra.mxu0 0
        %2763 = vmatprep.subr.bf16.mxu0 0
        %2764 = vmatpush1.bf16.msra.mxu0 0
        %2765 = vmatprep.subr.bf16.mxu0 0
        %2766 = vmatpush1.bf16.msra.mxu0 0
        %2767 = vmatprep.subr.bf16.mxu0 0
        %2768 = vmatpush1.bf16.msra.mxu0 0
        %2769 = vmatprep.subr.bf16.mxu0 0
        %2770 = vmatpush1.bf16.msra.mxu0 0
        %2771 = vmatprep.subr.bf16.mxu0 0
        %2772 = vmatpush1.bf16.msra.mxu0 0
        %2773 = vmatprep.subr.bf16.mxu0 0
        %2774 = vmatpush1.bf16.msra.mxu0 0
        %2775 = vmatprep.subr.bf16.mxu0 0
        %2776 = vmatpush1.bf16.msra.mxu0 0
        %2777 = vmatprep.subr.bf16.mxu0 0
        %2778 = vmatpush1.bf16.msra.mxu0 0
        %2779 = vmatprep.subr.bf16.mxu0 0
        %2780 = vmatpush1.bf16.msra.mxu0 0
        %2781 = vmatprep.subr.bf16.mxu0 0
        %2782 = vmatpush1.bf16.msra.mxu0 0
        %2783 = vmatprep.mubr.bf16.mxu0 0
        %2784 = vmatmul.mubr.bf16.gmra.mrb[0].mxu0 %v2620
        %v2785 = vpop.f32.mrb[0].mxu0
        %v2786 = vadd.f32 0.0, %v2785
        %v2787 = vpop.f32.mrb[0].mxu0
        %v2788 = vadd.f32 0.0, %v2787
        %v2789 = vpop.f32.mrb[0].mxu0
        %v2790 = vadd.f32 0.0, %v2789
        %v2791 = vpop.f32.mrb[0].mxu0
        %v2792 = vadd.f32 0.0, %v2791
        %2793 = vdwg.mxu0
        %v2794 = vlaneseq
        %v2795 = vshrl.u32 %v2794, 7
        %v2796 = vsub.s32 0, %v2795
        %v2797 = vrot.slane %v1701, %v2796
        %v2798 = vlaneseq
        %v2799 = vshrl.u32 %v2798, 7
        %v2800 = vsub.s32 0, %v2799
        %v2801 = vrot.slane %v1702, %v2800
        %v2802 = vlaneseq
        %v2803 = vshrl.u32 %v2802, 7
        %v2804 = vsub.s32 0, %v2803
        %v2805 = vrot.slane %v1703, %v2804
        %v2806 = vlaneseq
        %v2807 = vshrl.u32 %v2806, 7
        %v2808 = vsub.s32 0, %v2807
        %v2809 = vrot.slane %v1704, %v2808
        %v2810 = vlaneseq
        %v2811 = vshrl.u32 %v2810, 7
        %v2812 = vsub.s32 0, %v2811
        %v2813 = vrot.slane %v1705, %v2812
        %v2814 = vlaneseq
        %v2815 = vshrl.u32 %v2814, 7
        %v2816 = vsub.s32 0, %v2815
        %v2817 = vrot.slane %v1706, %v2816
        %v2818 = vlaneseq
        %v2819 = vshrl.u32 %v2818, 7
        %v2820 = vsub.s32 0, %v2819
        %v2821 = vrot.slane %v1707, %v2820
        %v2822 = vlaneseq
        %v2823 = vshrl.u32 %v2822, 7
        %v2824 = vsub.s32 0, %v2823
        %v2825 = vrot.slane %v1708, %v2824
        %v2826 = vmul.f32 %v2657, %v2797
        %v2827 = vmul.f32 %v2659, %v2801
        %v2828 = vmul.f32 %v2700, %v2805
        %v2829 = vmul.f32 %v2702, %v2809
        %v2830 = vmul.f32 %v2743, %v2813
        %v2831 = vmul.f32 %v2745, %v2817
        %v2832 = vmul.f32 %v2786, %v2821
        %v2833 = vmul.f32 %v2788, %v2825
        %v2834 = vlaneseq
        %v2835 = vshrl.u32 %v2834, 7
        %v2836 = vsub.s32 1, %v2835
        %v2837 = vrot.slane %v1701, %v2836
        %v2838 = vlaneseq
        %v2839 = vshrl.u32 %v2838, 7
        %v2840 = vsub.s32 1, %v2839
        %v2841 = vrot.slane %v1702, %v2840
        %v2842 = vlaneseq
        %v2843 = vshrl.u32 %v2842, 7
        %v2844 = vsub.s32 1, %v2843
        %v2845 = vrot.slane %v1703, %v2844
        %v2846 = vlaneseq
        %v2847 = vshrl.u32 %v2846, 7
        %v2848 = vsub.s32 1, %v2847
        %v2849 = vrot.slane %v1704, %v2848
        %v2850 = vlaneseq
        %v2851 = vshrl.u32 %v2850, 7
        %v2852 = vsub.s32 1, %v2851
        %v2853 = vrot.slane %v1705, %v2852
        %v2854 = vlaneseq
        %v2855 = vshrl.u32 %v2854, 7
        %v2856 = vsub.s32 1, %v2855
        %v2857 = vrot.slane %v1706, %v2856
        %v2858 = vlaneseq
        %v2859 = vshrl.u32 %v2858, 7
        %v2860 = vsub.s32 1, %v2859
        %v2861 = vrot.slane %v1707, %v2860
        %v2862 = vlaneseq
        %v2863 = vshrl.u32 %v2862, 7
        %v2864 = vsub.s32 1, %v2863
        %v2865 = vrot.slane %v1708, %v2864
        %v2866 = vmul.f32 %v2657, %v2837
        %v2867 = vmul.f32 %v2659, %v2841
        %v2868 = vmul.f32 %v2700, %v2845
        %v2869 = vmul.f32 %v2702, %v2849
        %v2870 = vmul.f32 %v2743, %v2853
        %v2871 = vmul.f32 %v2745, %v2857
        %v2872 = vmul.f32 %v2786, %v2861
        %v2873 = vmul.f32 %v2788, %v2865
        %v2882 = vrot.slane %v2866, 3
        %v2883 = vrot.slane %v2867, 3
        %v2884 = vrot.slane %v2868, 3
        %v2885 = vrot.slane %v2869, 3
        %v2886 = vrot.slane %v2870, 3
        %v2887 = vrot.slane %v2871, 3
        %v2888 = vrot.slane %v2872, 3
        %v2889 = vrot.slane %v2873, 3
        %v2898 = vadd.f32 %v2826, %v2882
        %v2899 = vadd.f32 %v2827, %v2883
        %v2900 = vadd.f32 %v2828, %v2884
        %v2901 = vadd.f32 %v2829, %v2885
        %v2902 = vadd.f32 %v2830, %v2886
        %v2903 = vadd.f32 %v2831, %v2887
        %v2904 = vadd.f32 %v2832, %v2888
        %v2905 = vadd.f32 %v2833, %v2889
        %v2906 = vlaneseq
        %v2907 = vshrl.u32 %v2906, 7
        %v2908 = vsub.s32 2, %v2907
        %v2909 = vrot.slane %v1701, %v2908
        %v2910 = vlaneseq
        %v2911 = vshrl.u32 %v2910, 7
        %v2912 = vsub.s32 2, %v2911
        %v2913 = vrot.slane %v1702, %v2912
        %v2914 = vlaneseq
        %v2915 = vshrl.u32 %v2914, 7
        %v2916 = vsub.s32 2, %v2915
        %v2917 = vrot.slane %v1703, %v2916
        %v2918 = vlaneseq
        %v2919 = vshrl.u32 %v2918, 7
        %v2920 = vsub.s32 2, %v2919
        %v2921 = vrot.slane %v1704, %v2920
        %v2922 = vlaneseq
        %v2923 = vshrl.u32 %v2922, 7
        %v2924 = vsub.s32 2, %v2923
        %v2925 = vrot.slane %v1705, %v2924
        %v2926 = vlaneseq
        %v2927 = vshrl.u32 %v2926, 7
        %v2928 = vsub.s32 2, %v2927
        %v2929 = vrot.slane %v1706, %v2928
        %v2930 = vlaneseq
        %v2931 = vshrl.u32 %v2930, 7
        %v2932 = vsub.s32 2, %v2931
        %v2933 = vrot.slane %v1707, %v2932
        %v2934 = vlaneseq
        %v2935 = vshrl.u32 %v2934, 7
        %v2936 = vsub.s32 2, %v2935
        %v2937 = vrot.slane %v1708, %v2936
        %v2938 = vmul.f32 %v2657, %v2909
        %v2939 = vmul.f32 %v2659, %v2913
        %v2940 = vmul.f32 %v2700, %v2917
        %v2941 = vmul.f32 %v2702, %v2921
        %v2942 = vmul.f32 %v2743, %v2925
        %v2943 = vmul.f32 %v2745, %v2929
        %v2944 = vmul.f32 %v2786, %v2933
        %v2945 = vmul.f32 %v2788, %v2937
        %v2946 = vmul.f32 %v2661, %v2909
        %v2947 = vmul.f32 %v2663, %v2913
        %v2948 = vmul.f32 %v2704, %v2917
        %v2949 = vmul.f32 %v2706, %v2921
        %v2950 = vmul.f32 %v2747, %v2925
        %v2951 = vmul.f32 %v2749, %v2929
        %v2952 = vmul.f32 %v2790, %v2933
        %v2953 = vmul.f32 %v2792, %v2937
        %v2970 = vrot.slane %v2938, 6
        %v2971 = vrot.slane %v2946, 6
        %v2972 = vsel %vm615, %v2970, %v2971
        %v2973 = vrot.slane %v2939, 6
        %v2974 = vrot.slane %v2947, 6
        %v2975 = vsel %vm615, %v2973, %v2974
        %v2976 = vrot.slane %v2940, 6
        %v2977 = vrot.slane %v2948, 6
        %v2978 = vsel %vm615, %v2976, %v2977
        %v2979 = vrot.slane %v2941, 6
        %v2980 = vrot.slane %v2949, 6
        %v2981 = vsel %vm615, %v2979, %v2980
        %v2982 = vrot.slane %v2942, 6
        %v2983 = vrot.slane %v2950, 6
        %v2984 = vsel %vm615, %v2982, %v2983
        %v2985 = vrot.slane %v2943, 6
        %v2986 = vrot.slane %v2951, 6
        %v2987 = vsel %vm615, %v2985, %v2986
        %v2988 = vrot.slane %v2944, 6
        %v2989 = vrot.slane %v2952, 6
        %v2990 = vsel %vm615, %v2988, %v2989
        %v2991 = vrot.slane %v2945, 6
        %v2992 = vrot.slane %v2953, 6
        %v2993 = vsel %vm615, %v2991, %v2992
        %v3002 = vadd.f32 %v2898, %v2972
        %v3003 = vadd.f32 %v2899, %v2975
        %v3004 = vadd.f32 %v2900, %v2978
        %v3005 = vadd.f32 %v2901, %v2981
        %v3006 = vadd.f32 %v2902, %v2984
        %v3007 = vadd.f32 %v2903, %v2987
        %v3008 = vadd.f32 %v2904, %v2990
        %v3009 = vadd.f32 %v2905, %v2993
        %v3018 = vrot.slane %v2661, 1
        %v3019 = vrot.slane %v2663, 1
        %v3020 = vrot.slane %v2704, 1
        %v3021 = vrot.slane %v2706, 1
        %v3022 = vrot.slane %v2747, 1
        %v3023 = vrot.slane %v2749, 1
        %v3024 = vrot.slane %v2790, 1
        %v3025 = vrot.slane %v2792, 1
        %v3034 = vadd.f32 %v3002, %v3018
        %v3035 = vadd.f32 %v3003, %v3019
        %v3036 = vadd.f32 %v3004, %v3020
        %v3037 = vadd.f32 %v3005, %v3021
        %v3038 = vadd.f32 %v3006, %v3022
        %v3039 = vadd.f32 %v3007, %v3023
        %v3040 = vadd.f32 %v3008, %v3024
        %v3041 = vadd.f32 %v3009, %v3025
        %3042 = vst [vmem:[%s487] sm:$0xff] %v1701
        %3043 = vst [vmem:[%s487 + $0x8] sm:$0xff] %v1702
        %3044 = vst [vmem:[%s487 + $0x10] sm:$0xff] %v1703
        %3045 = vst [vmem:[%s487 + $0x18] sm:$0xff] %v1704
        %3046 = vst [vmem:[%s487 + $0x20] sm:$0xff] %v1705
        %3047 = vst [vmem:[%s487 + $0x28] sm:$0xff] %v1706
        %3048 = vst [vmem:[%s487 + $0x30] sm:$0xff] %v1707
        %3049 = vst [vmem:[%s487 + $0x38] sm:$0xff] %v1708
        %3050 = vst [vmem:[%s487 + $0x40] sm:$0x3] %v1709
        %3051 = vst [vmem:[%s487 + $0x48] sm:$0x3] %v1710
        %3052 = vst [vmem:[%s487 + $0x50] sm:$0x3] %v1711
        %3053 = vst [vmem:[%s487 + $0x58] sm:$0x3] %v1712
        %3054 = vst [vmem:[%s487 + $0x60] sm:$0x3] %v1713
        %3055 = vst [vmem:[%s487 + $0x68] sm:$0x3] %v1714
        %3056 = vst [vmem:[%s487 + $0x70] sm:$0x3] %v1715
        %3057 = vst [vmem:[%s487 + $0x78] sm:$0x3] %v1716
        %3058 = vst [vmem:[%s487] sm:$0x7] %v3034
        %3059 = vst [vmem:[%s487 + $0x8] sm:$0x7] %v3035
        %3060 = vst [vmem:[%s487 + $0x10] sm:$0x7] %v3036
        %3061 = vst [vmem:[%s487 + $0x18] sm:$0x7] %v3037
        %3062 = vst [vmem:[%s487 + $0x20] sm:$0x7] %v3038
        %3063 = vst [vmem:[%s487 + $0x28] sm:$0x7] %v3039
        %3064 = vst [vmem:[%s487 + $0x30] sm:$0x7] %v3040
        %3065 = vst [vmem:[%s487 + $0x38] sm:$0x7] %v3041
        %3066 = vst [vmem:[%s487 + $0x40] sm:$0xfc] 0.0
        %3067 = vst [vmem:[%s487 + $0x48] sm:$0xfc] 0.0
        %3068 = vst [vmem:[%s487 + $0x50] sm:$0xfc] 0.0
        %3069 = vst [vmem:[%s487 + $0x58] sm:$0xfc] 0.0
        %3070 = vst [vmem:[%s487 + $0x60] sm:$0xfc] 0.0
        %3071 = vst [vmem:[%s487 + $0x68] sm:$0xfc] 0.0
        %3072 = vst [vmem:[%s487 + $0x70] sm:$0xfc] 0.0
        %3073 = vst [vmem:[%s487 + $0x78] sm:$0xfc] 0.0
        %v3074 = vmul.f32 %v1564, %v1564
        %v3075 = vmul.f32 %v1566, %v1566
        %v3076 = vmul.f32 %v1607, %v1607
        %v3077 = vmul.f32 %v1609, %v1609
        %v3078 = vmul.f32 %v1650, %v1650
        %v3079 = vmul.f32 %v1652, %v1652
        %v3080 = vmul.f32 %v1693, %v1693
        %v3081 = vmul.f32 %v1695, %v1695
        %v3082 = vmul.f32 %v1568, %v1568
        %v3083 = vmul.f32 %v1570, %v1570
        %v3084 = vmul.f32 %v1611, %v1611
        %v3085 = vmul.f32 %v1613, %v1613
        %v3086 = vmul.f32 %v1654, %v1654
        %v3087 = vmul.f32 %v1656, %v1656
        %v3088 = vmul.f32 %v1697, %v1697
        %v3089 = vmul.f32 %v1699, %v1699
        %s3090 = sadd.s32 %s27, 1
        %s3091 = smul.u32 %s3090, 1024
        %s3092 = sld [smem:[#allocation3]]
        %p3093 = scmp.gt.s32.totalorder %s3091, %s3092
        %p3094 = scmp.le.s32.totalorder %s3091, %s3092
        // Predicated region
        $region92: #{deformer_forward.1} parent=86 // pred_check
          %p3095 = pneg %p3094
        $region93: #{deformer_forward.1} parent=86 // pred_check_branch
          %3097 = sbr.rel (%p3095) target = $region95
        $region94: #{deformer_forward.1} parent=86 // pred_region
          %vm3098 = vcmask 1042432
          %v3099 = vsel %vm3098, %v3074, 0.0
          %v3100 = vsel %vm3098, %v3075, 0.0
          %v3101 = vadd.f32 %v3099, %v3100
          %v3102 = vsel %vm3098, %v3076, 0.0
          %v3103 = vadd.f32 %v3101, %v3102
          %v3104 = vsel %vm3098, %v3077, 0.0
          %v3105 = vadd.f32 %v3103, %v3104
          %v3106 = vsel %vm3098, %v3078, 0.0
          %v3107 = vadd.f32 %v3105, %v3106
          %v3108 = vsel %vm3098, %v3079, 0.0
          %v3109 = vadd.f32 %v3107, %v3108
          %v3110 = vsel %vm3098, %v3080, 0.0
          %v3111 = vadd.f32 %v3109, %v3110
          %v3112 = vsel %vm3098, %v3081, 0.0
          %v3113 = vadd.f32 %v3111, %v3112
          %3114 = vadd.xlane.f32.xlu0 %v3113
          %v3115 = vpop.xlane.xlu0 %3114
          %v3116 = vrot.slane %v3115, 4
          %v3117 = vadd.f32 %v3115, %v3116
          %v3118 = vrot.slane %v3117, 2
          %v3119 = vadd.f32 %v3117, %v3118
          %v3120 = vrot.slane %v3119, 1
          %v3121 = vadd.f32 %v3119, %v3120
          %s3122 = vtos %v3121
          %v3131 = vrot.slane %v3074, 3
          %v3132 = vrot.slane %v3075, 3
          %v3133 = vrot.slane %v3076, 3
          %v3134 = vrot.slane %v3077, 3
          %v3135 = vrot.slane %v3078, 3
          %v3136 = vrot.slane %v3079, 3
          %v3137 = vrot.slane %v3080, 3
          %v3138 = vrot.slane %v3081, 3
          %vm3147 = vcmask 1043456
          %v3148 = vsel %vm3147, %v3131, 0.0
          %v3149 = vsel %vm3147, %v3132, 0.0
          %v3150 = vadd.f32 %v3148, %v3149
          %v3151 = vsel %vm3147, %v3133, 0.0
          %v3152 = vadd.f32 %v3150, %v3151
          %v3153 = vsel %vm3147, %v3134, 0.0
          %v3154 = vadd.f32 %v3152, %v3153
          %v3155 = vsel %vm3147, %v3135, 0.0
          %v3156 = vadd.f32 %v3154, %v3155
          %v3157 = vsel %vm3147, %v3136, 0.0
          %v3158 = vadd.f32 %v3156, %v3157
          %v3159 = vsel %vm3147, %v3137, 0.0
          %v3160 = vadd.f32 %v3158, %v3159
          %v3161 = vsel %vm3147, %v3138, 0.0
          %v3162 = vadd.f32 %v3160, %v3161
          %3163 = vadd.xlane.f32.xlu0 %v3162
          %v3164 = vpop.xlane.xlu0 %3163
          %v3165 = vrot.slane %v3164, 4
          %v3166 = vadd.f32 %v3164, %v3165
          %v3167 = vrot.slane %v3166, 2
          %v3168 = vadd.f32 %v3166, %v3167
          %v3169 = vrot.slane %v3168, 1
          %v3170 = vadd.f32 %v3168, %v3169
          %s3171 = vtos %v3170
          %v3180 = vrot.slane %v3074, 7
          %v3181 = vrot.slane %v3082, 7
          %v3182 = vsel %vm614, %v3180, %v3181
          %v3183 = vrot.slane %v3075, 7
          %v3184 = vrot.slane %v3083, 7
          %v3185 = vsel %vm614, %v3183, %v3184
          %v3186 = vrot.slane %v3076, 7
          %v3187 = vrot.slane %v3084, 7
          %v3188 = vsel %vm614, %v3186, %v3187
          %v3189 = vrot.slane %v3077, 7
          %v3190 = vrot.slane %v3085, 7
          %v3191 = vsel %vm614, %v3189, %v3190
          %v3192 = vrot.slane %v3078, 7
          %v3193 = vrot.slane %v3086, 7
          %v3194 = vsel %vm614, %v3192, %v3193
          %v3195 = vrot.slane %v3079, 7
          %v3196 = vrot.slane %v3087, 7
          %v3197 = vsel %vm614, %v3195, %v3196
          %v3198 = vrot.slane %v3080, 7
          %v3199 = vrot.slane %v3088, 7
          %v3200 = vsel %vm614, %v3198, %v3199
          %v3201 = vrot.slane %v3081, 7
          %v3202 = vrot.slane %v3089, 7
          %v3203 = vsel %vm614, %v3201, %v3202
          %v3212 = vsel %vm3098, %v3182, 0.0
          %v3213 = vsel %vm3098, %v3185, 0.0
          %v3214 = vadd.f32 %v3212, %v3213
          %v3215 = vsel %vm3098, %v3188, 0.0
          %v3216 = vadd.f32 %v3214, %v3215
          %v3217 = vsel %vm3098, %v3191, 0.0
          %v3218 = vadd.f32 %v3216, %v3217
          %v3219 = vsel %vm3098, %v3194, 0.0
          %v3220 = vadd.f32 %v3218, %v3219
          %v3221 = vsel %vm3098, %v3197, 0.0
          %v3222 = vadd.f32 %v3220, %v3221
          %v3223 = vsel %vm3098, %v3200, 0.0
          %v3224 = vadd.f32 %v3222, %v3223
          %v3225 = vsel %vm3098, %v3203, 0.0
          %v3226 = vadd.f32 %v3224, %v3225
          %3227 = vadd.xlane.f32.xlu0 %v3226
          %v3228 = vpop.xlane.xlu0 %3227
          %v3229 = vrot.slane %v3228, 4
          %v3230 = vadd.f32 %v3228, %v3229
          %v3231 = vrot.slane %v3230, 2
          %v3232 = vadd.f32 %v3230, %v3231
          %v3233 = vrot.slane %v3232, 1
          %v3234 = vadd.f32 %v3232, %v3233
          %s3235 = vtos %v3234
          %v3236 = vlaneseq
          %v3237 = vshrl.u32 %v3236, 7
          %vm3238 = vcmp.eq.s32.totalorder %v3237, 0
          %vm3239 = vcmp.eq.s32.totalorder %v3237, 1
          %vm3240 = vcmp.eq.s32.totalorder %v3237, 2
          %v3241 = vstv %s3235
          %v3242 = vsel %vm3240, %v3241, 0.0
          %v3243 = vstv %s3171
          %v3244 = vsel %vm3239, %v3243, %v3242
          %v3245 = vstv %s3122
          %v3246 = vsel %vm3238, %v3245, %v3244
          %3247 = vst [vmem:[%s499] sm:$0xff] %v3246
        $region95: #{deformer_forward.1} parent=86 // pred_fallthru
          _
        // Predicated region
        $region96: #{deformer_forward.1} parent=86 // pred_check
          %p3248 = pneg %p3093
        $region97: #{deformer_forward.1} parent=86 // pred_check_branch
          %3250 = sbr.rel (%p3248) target = $region99
        $region98: #{deformer_forward.1} parent=86 // pred_region
          %v3251 = vlaneseq
          %v3252 = vand.u32 %v3251, 127
          %v3253 = vadd.s32 %v3252, 128
          %v3254 = vadd.s32 %v3252, 256
          %v3255 = vadd.s32 %v3252, 384
          %v3256 = vadd.s32 %v3252, 512
          %v3257 = vadd.s32 %v3252, 640
          %v3258 = vadd.s32 %v3252, 768
          %v3259 = vadd.s32 %v3252, 896
          %s3260 = smul.u32 %s27, 1024
          %v3261 = vstv %s3260
          %v3262 = vadd.s32 %v3252, %v3261
          %v3263 = vadd.s32 %v3253, %v3261
          %v3264 = vadd.s32 %v3254, %v3261
          %v3265 = vadd.s32 %v3255, %v3261
          %v3266 = vadd.s32 %v3256, %v3261
          %v3267 = vadd.s32 %v3257, %v3261
          %v3268 = vadd.s32 %v3258, %v3261
          %v3269 = vadd.s32 %v3259, %v3261
          %s3270 = sld [smem:[#allocation3]]
          %v3271 = vstv %s3270
          %vm3272 = vcmp.lt.s32.totalorder %v3262, %v3271
          %vm3273 = vcmp.lt.s32.totalorder %v3263, %v3271
          %vm3274 = vcmp.lt.s32.totalorder %v3264, %v3271
          %vm3275 = vcmp.lt.s32.totalorder %v3265, %v3271
          %vm3276 = vcmp.lt.s32.totalorder %v3266, %v3271
          %vm3277 = vcmp.lt.s32.totalorder %v3267, %v3271
          %vm3278 = vcmp.lt.s32.totalorder %v3268, %v3271
          %vm3279 = vcmp.lt.s32.totalorder %v3269, %v3271
          %v3280 = vsel %vm3272, 1, 0
          %v3281 = vsel %vm3273, 1, 0
          %v3282 = vsel %vm3274, 1, 0
          %v3283 = vsel %vm3275, 1, 0
          %v3284 = vsel %vm3276, 1, 0
          %v3285 = vsel %vm3277, 1, 0
          %v3286 = vsel %vm3278, 1, 0
          %v3287 = vsel %vm3279, 1, 0
          %v3288 = vcvt.s32.f32 %v3280
          %v3289 = vcvt.s32.f32 %v3281
          %v3290 = vcvt.s32.f32 %v3282
          %v3291 = vcvt.s32.f32 %v3283
          %v3292 = vcvt.s32.f32 %v3284
          %v3293 = vcvt.s32.f32 %v3285
          %v3294 = vcvt.s32.f32 %v3286
          %v3295 = vcvt.s32.f32 %v3287
          %v3296 = vmul.f32 %v3074, %v3288
          %v3297 = vmul.f32 %v3075, %v3289
          %v3298 = vmul.f32 %v3076, %v3290
          %v3299 = vmul.f32 %v3077, %v3291
          %v3300 = vmul.f32 %v3078, %v3292
          %v3301 = vmul.f32 %v3079, %v3293
          %v3302 = vmul.f32 %v3080, %v3294
          %v3303 = vmul.f32 %v3081, %v3295
          %v3304 = vmul.f32 %v3082, %v3288
          %v3305 = vmul.f32 %v3083, %v3289
          %v3306 = vmul.f32 %v3084, %v3290
          %v3307 = vmul.f32 %v3085, %v3291
          %v3308 = vmul.f32 %v3086, %v3292
          %v3309 = vmul.f32 %v3087, %v3293
          %v3310 = vmul.f32 %v3088, %v3294
          %v3311 = vmul.f32 %v3089, %v3295
          %vm3312 = vcmask 1042432
          %v3313 = vsel %vm3312, %v3296, 0.0
          %v3314 = vsel %vm3312, %v3297, 0.0
          %v3315 = vadd.f32 %v3313, %v3314
          %v3316 = vsel %vm3312, %v3298, 0.0
          %v3317 = vadd.f32 %v3315, %v3316
          %v3318 = vsel %vm3312, %v3299, 0.0
          %v3319 = vadd.f32 %v3317, %v3318
          %v3320 = vsel %vm3312, %v3300, 0.0
          %v3321 = vadd.f32 %v3319, %v3320
          %v3322 = vsel %vm3312, %v3301, 0.0
          %v3323 = vadd.f32 %v3321, %v3322
          %v3324 = vsel %vm3312, %v3302, 0.0
          %v3325 = vadd.f32 %v3323, %v3324
          %v3326 = vsel %vm3312, %v3303, 0.0
          %v3327 = vadd.f32 %v3325, %v3326
          %3328 = vadd.xlane.f32.xlu0 %v3327
          %v3329 = vpop.xlane.xlu0 %3328
          %v3330 = vrot.slane %v3329, 4
          %v3331 = vadd.f32 %v3329, %v3330
          %v3332 = vrot.slane %v3331, 2
          %v3333 = vadd.f32 %v3331, %v3332
          %v3334 = vrot.slane %v3333, 1
          %v3335 = vadd.f32 %v3333, %v3334
          %s3336 = vtos %v3335
          %v3345 = vrot.slane %v3296, 3
          %v3346 = vrot.slane %v3297, 3
          %v3347 = vrot.slane %v3298, 3
          %v3348 = vrot.slane %v3299, 3
          %v3349 = vrot.slane %v3300, 3
          %v3350 = vrot.slane %v3301, 3
          %v3351 = vrot.slane %v3302, 3
          %v3352 = vrot.slane %v3303, 3
          %vm3361 = vcmask 1043456
          %v3362 = vsel %vm3361, %v3345, 0.0
          %v3363 = vsel %vm3361, %v3346, 0.0
          %v3364 = vadd.f32 %v3362, %v3363
          %v3365 = vsel %vm3361, %v3347, 0.0
          %v3366 = vadd.f32 %v3364, %v3365
          %v3367 = vsel %vm3361, %v3348, 0.0
          %v3368 = vadd.f32 %v3366, %v3367
          %v3369 = vsel %vm3361, %v3349, 0.0
          %v3370 = vadd.f32 %v3368, %v3369
          %v3371 = vsel %vm3361, %v3350, 0.0
          %v3372 = vadd.f32 %v3370, %v3371
          %v3373 = vsel %vm3361, %v3351, 0.0
          %v3374 = vadd.f32 %v3372, %v3373
          %v3375 = vsel %vm3361, %v3352, 0.0
          %v3376 = vadd.f32 %v3374, %v3375
          %3377 = vadd.xlane.f32.xlu0 %v3376
          %v3378 = vpop.xlane.xlu0 %3377
          %v3379 = vrot.slane %v3378, 4
          %v3380 = vadd.f32 %v3378, %v3379
          %v3381 = vrot.slane %v3380, 2
          %v3382 = vadd.f32 %v3380, %v3381
          %v3383 = vrot.slane %v3382, 1
          %v3384 = vadd.f32 %v3382, %v3383
          %s3385 = vtos %v3384
          %v3394 = vrot.slane %v3296, 7
          %v3395 = vrot.slane %v3304, 7
          %v3396 = vsel %vm614, %v3394, %v3395
          %v3397 = vrot.slane %v3297, 7
          %v3398 = vrot.slane %v3305, 7
          %v3399 = vsel %vm614, %v3397, %v3398
          %v3400 = vrot.slane %v3298, 7
          %v3401 = vrot.slane %v3306, 7
          %v3402 = vsel %vm614, %v3400, %v3401
          %v3403 = vrot.slane %v3299, 7
          %v3404 = vrot.slane %v3307, 7
          %v3405 = vsel %vm614, %v3403, %v3404
          %v3406 = vrot.slane %v3300, 7
          %v3407 = vrot.slane %v3308, 7
          %v3408 = vsel %vm614, %v3406, %v3407
          %v3409 = vrot.slane %v3301, 7
          %v3410 = vrot.slane %v3309, 7
          %v3411 = vsel %vm614, %v3409, %v3410
          %v3412 = vrot.slane %v3302, 7
          %v3413 = vrot.slane %v3310, 7
          %v3414 = vsel %vm614, %v3412, %v3413
          %v3415 = vrot.slane %v3303, 7
          %v3416 = vrot.slane %v3311, 7
          %v3417 = vsel %vm614, %v3415, %v3416
          %v3426 = vsel %vm3312, %v3396, 0.0
          %v3427 = vsel %vm3312, %v3399, 0.0
          %v3428 = vadd.f32 %v3426, %v3427
          %v3429 = vsel %vm3312, %v3402, 0.0
          %v3430 = vadd.f32 %v3428, %v3429
          %v3431 = vsel %vm3312, %v3405, 0.0
          %v3432 = vadd.f32 %v3430, %v3431
          %v3433 = vsel %vm3312, %v3408, 0.0
          %v3434 = vadd.f32 %v3432, %v3433
          %v3435 = vsel %vm3312, %v3411, 0.0
          %v3436 = vadd.f32 %v3434, %v3435
          %v3437 = vsel %vm3312, %v3414, 0.0
          %v3438 = vadd.f32 %v3436, %v3437
          %v3439 = vsel %vm3312, %v3417, 0.0
          %v3440 = vadd.f32 %v3438, %v3439
          %3441 = vadd.xlane.f32.xlu0 %v3440
          %v3442 = vpop.xlane.xlu0 %3441
          %v3443 = vrot.slane %v3442, 4
          %v3444 = vadd.f32 %v3442, %v3443
          %v3445 = vrot.slane %v3444, 2
          %v3446 = vadd.f32 %v3444, %v3445
          %v3447 = vrot.slane %v3446, 1
          %v3448 = vadd.f32 %v3446, %v3447
          %s3449 = vtos %v3448
          %v3450 = vlaneseq
          %v3451 = vshrl.u32 %v3450, 7
          %vm3452 = vcmp.eq.s32.totalorder %v3451, 0
          %vm3453 = vcmp.eq.s32.totalorder %v3451, 1
          %vm3454 = vcmp.eq.s32.totalorder %v3451, 2
          %v3455 = vstv %s3449
          %v3456 = vsel %vm3454, %v3455, 0.0
          %v3457 = vstv %s3385
          %v3458 = vsel %vm3453, %v3457, %v3456
          %v3459 = vstv %s3336
          %v3460 = vsel %vm3452, %v3459, %v3458
          %3461 = vst [vmem:[%s499] sm:$0xff] %v3460
        $region99: #{deformer_forward.1} parent=86 // pred_fallthru
          _
        %s3462 = sand.u32 %s292, 1
        %s3463 = sand.u32 %s292, 1
        %s3464 = smul.addr %s3463, 128
        %s3465 = scalar_lea.vmem [#allocation5], %s3464
        %p3466 = scmp.lt.s32.totalorder %s27, 1
        %s3467 = scalar_select %p3466, %s27, 1
        %s3468 = smul.addr %s3467, 8
        %s3469 = scalar_lea.vmem %s14, %s3468
        // Predicated region
        $region100: #{deformer_forward.1} parent=86 // pred_check
          %p3470 = pneg %p302
        $region101: #{deformer_forward.1} parent=86 // pred_check_branch
          %3472 = sbr.rel (%p3470) target = $region103
        $region102: #{deformer_forward.1} parent=86 // pred_region
          %s3473 = smul.u32 8, %s27
          %s3474 = smul.addr %s3473, 8
          %s3475 = scalar_lea.vmem %s13, %s3474
          // Predicated region
          $region104: #{deformer_forward.1} parent=102 // pred_check
            _
          $region105: #{deformer_forward.1} parent=102 // pred_check_branch
            %3477 = sbr.rel (0) target = $region107
          $region106: #{deformer_forward.1} parent=102 // pred_region
            // Predicated region
            $region108: #{deformer_forward.1} parent=106 // pred_check
              _
            $region109: #{deformer_forward.1} parent=106 // pred_check_branch
              %3479 = sbr.rel (0) target = $region111
            $region110: #{deformer_forward.1} parent=106 // pred_region
              loop: start=0, step=1, limit=1
              $region112: #{deformer_forward.1} parent=110 // loop_pre_header
                _
              $region113: #{deformer_forward.1} parent=110 // loop_header
                %s3481 = sphi 0, %s3485
                %p3482 = scmp.ge.s32.totalorder %s3481, 1
                %s3486 = sphi %s3465, %s3465
                %s3487 = sphi %s3475, %s3475
              $region114: #{deformer_forward.1} parent=110 // loop_header_branch
                %3484 = sbr.rel (%p3482) target = $region118
              $region115: #{deformer_forward.1} parent=110 // loop_body
                %v3488 = vld [vmem:[%s3486] sm:$0xff]
                %3489 = vst [vmem:[%s3487] sm:$0xff] %v3488
                %v3490 = vld [vmem:[%s3486 + $0x8] sm:$0xff]
                %3491 = vst [vmem:[%s3487 + $0x8] sm:$0xff] %v3490
                %v3492 = vld [vmem:[%s3486 + $0x10] sm:$0xff]
                %3493 = vst [vmem:[%s3487 + $0x10] sm:$0xff] %v3492
                %v3494 = vld [vmem:[%s3486 + $0x18] sm:$0xff]
                %3495 = vst [vmem:[%s3487 + $0x18] sm:$0xff] %v3494
                %v3496 = vld [vmem:[%s3486 + $0x20] sm:$0xff]
                %3497 = vst [vmem:[%s3487 + $0x20] sm:$0xff] %v3496
                %v3498 = vld [vmem:[%s3486 + $0x28] sm:$0xff]
                %3499 = vst [vmem:[%s3487 + $0x28] sm:$0xff] %v3498
                %v3500 = vld [vmem:[%s3486 + $0x30] sm:$0xff]
                %3501 = vst [vmem:[%s3487 + $0x30] sm:$0xff] %v3500
                %v3502 = vld [vmem:[%s3486 + $0x38] sm:$0xff]
                %3503 = vst [vmem:[%s3487 + $0x38] sm:$0xff] %v3502
                %v3504 = vld [vmem:[%s3486 + $0x40] sm:$0xff]
                %3505 = vst [vmem:[%s3487 + $0x80] sm:$0xff] %v3504
                %v3506 = vld [vmem:[%s3486 + $0x48] sm:$0xff]
                %3507 = vst [vmem:[%s3487 + $0x88] sm:$0xff] %v3506
                %v3508 = vld [vmem:[%s3486 + $0x50] sm:$0xff]
                %3509 = vst [vmem:[%s3487 + $0x90] sm:$0xff] %v3508
                %v3510 = vld [vmem:[%s3486 + $0x58] sm:$0xff]
                %3511 = vst [vmem:[%s3487 + $0x98] sm:$0xff] %v3510
                %v3512 = vld [vmem:[%s3486 + $0x60] sm:$0xff]
                %3513 = vst [vmem:[%s3487 + $0xa0] sm:$0xff] %v3512
                %v3514 = vld [vmem:[%s3486 + $0x68] sm:$0xff]
                %3515 = vst [vmem:[%s3487 + $0xa8] sm:$0xff] %v3514
                %v3516 = vld [vmem:[%s3486 + $0x70] sm:$0xff]
                %3517 = vst [vmem:[%s3487 + $0xb0] sm:$0xff] %v3516
                %v3518 = vld [vmem:[%s3486 + $0x78] sm:$0xff]
                %3519 = vst [vmem:[%s3487 + $0xb8] sm:$0xff] %v3518
              $region116: #{deformer_forward.1} parent=110 // loop_footer
                %s3485 = sadd.s32 1, %s3481
              $region117: #{deformer_forward.1} parent=110 // loop_footer_branch
                %3480 = sbr.rel target = $region113
              $region118: #{deformer_forward.1} parent=110 // loop_exit
                _
            $region111: #{deformer_forward.1} parent=106 // pred_fallthru
              _
            // Predicated region
            $region119: #{deformer_forward.1} parent=106 // pred_check
              _
            $region120: #{deformer_forward.1} parent=106 // pred_check_branch
              %3521 = sbr.rel target = $region122
            $region121: #{deformer_forward.1} parent=106 // pred_region
              _
            $region122: #{deformer_forward.1} parent=106 // pred_fallthru
              _
          $region107: #{deformer_forward.1} parent=102 // pred_fallthru
            _
          %3522 = vnop
        $region103: #{deformer_forward.1} parent=86 // pred_fallthru
          _
        // Predicated region
        $region123: #{deformer_forward.1} parent=86 // pred_check
          %p3523 = pneg %p328
        $region124: #{deformer_forward.1} parent=86 // pred_check_branch
          %3525 = sbr.rel (%p3523) target = $region126
        $region125: #{deformer_forward.1} parent=86 // pred_region
          _
        $region126: #{deformer_forward.1} parent=86 // pred_fallthru
          _
      $region87: #{deformer_forward.1} parent=5 // pred_fallthru
        _
      %p3526 = scmp.le.s32.totalorder 2, %s22
      // Predicated region
      $region127: #{deformer_forward.1} parent=5 // pred_check
        %p3527 = pneg %p3526
      $region128: #{deformer_forward.1} parent=5 // pred_check_branch
        %3529 = sbr.rel (%p3527) target = $region130
      $region129: #{deformer_forward.1} parent=5 // pred_region
        %s3530 = ssub.s32 %s22, 2
        // Predicated region
        $region131: #{deformer_forward.1} parent=129 // pred_check
          %p3531 = pneg %p308
        $region132: #{deformer_forward.1} parent=129 // pred_check_branch
          %3533 = sbr.rel (%p3531) target = $region134
        $region133: #{deformer_forward.1} parent=129 // pred_region
          %s3534 = sand.u32 %s293, 1
          %s3535 = sand.u32 %s293, 1
          %s3536 = smul.addr %s3535, 128
          %s3537 = scalar_lea.vmem [#allocation5], %s3536
        $region134: #{deformer_forward.1} parent=129 // pred_fallthru
          _
        // Predicated region
        $region135: #{deformer_forward.1} parent=129 // pred_check
          %p3538 = pneg %p334
        $region136: #{deformer_forward.1} parent=129 // pred_check_branch
          %3540 = sbr.rel (%p3538) target = $region138
        $region137: #{deformer_forward.1} parent=129 // pred_region
          %p3541 = scmp.lt.s32.totalorder %s28, 1
          %s3542 = scalar_select %p3541, %s28, 1
          %s3543 = smul.addr %s3542, 8
          %s3544 = scalar_lea.vmem %s14, %s3543
        $region138: #{deformer_forward.1} parent=129 // pred_fallthru
          _
      $region130: #{deformer_forward.1} parent=5 // pred_fallthru
        _
    $region6: #{deformer_forward.1} parent=1 // loop_footer
      %s26 = sadd.s32 1, %s22
    $region7: #{deformer_forward.1} parent=1 // loop_footer_branch
      %21 = sbr.rel target = $region3
    $region8: #{deformer_forward.1} parent=1 // loop_exit
      _

</llo_original>
